<compile_context>
chip_gen: v5e
topology: v5e:2x2
jax: 0.10.0
libtpu: 0.0.40
codegen_flags: <defaults>
</compile_context>

<pallas_src>
import functools

import numpy as np

import jax
import jax.numpy as jnp
from jax.experimental import pallas as pl
from jax.experimental.pallas import tpu as pltpu


# ---------------------------------------------------------------------------
# Host-side constant builders (numpy, built once)
# ---------------------------------------------------------------------------
def _tap_masks(h, w, bt):
    """(9, bt*h*w) 0/1 masks: mask[t, p]=1 iff tap t of output pixel p reads an
    in-image pixel ('same' zero padding).  Also zeroes the roll wrap-around
    between the bt images sharing the lane axis."""
    hh, ww = np.meshgrid(np.arange(h), np.arange(w), indexing="ij")
    m = np.zeros((9, h * w), np.float32)
    for t in range(9):
        dh, dw = t // 3 - 1, t % 3 - 1
        ok = (hh + dh >= 0) & (hh + dh < h) & (ww + dw >= 0) & (ww + dw < w)
        m[t] = ok.reshape(-1).astype(np.float32)
    return np.tile(m[:, None, :], (1, bt, 1)).reshape(9, bt * h * w)


def _tap_mats(h, w, bt):
    """(9, bt*h*w, bt*h*w) 0/1 matrices (block-diagonal over images):
    T[t, p, q] = 1 iff input pixel p feeds tap t of output pixel q."""
    hw = h * w
    T = np.zeros((9, bt * hw, bt * hw), np.float32)
    for t in range(9):
        dh, dw = t // 3 - 1, t % 3 - 1
        for hi in range(h):
            hh = hi + dh
            if not 0 <= hh < h:
                continue
            for wi in range(w):
                wwp = wi + dw
                if not 0 <= wwp < w:
                    continue
                for b in range(bt):
                    T[t, b * hw + hh * w + wwp, b * hw + hi * w + wi] = 1.0
    return T


def _pool_select(h, w, bt):
    """(bt*h*w, bt*h*w/4) 0/1 gather: column q picks the top-left pixel of
    pooled output q (block-diagonal over images)."""
    ho, wo = h // 2, w // 2
    hw, hwo = h * w, ho * wo
    p = np.zeros((bt * hw, bt * hwo), np.float32)
    for b in range(bt):
        for i in range(ho):
            for j in range(wo):
                p[b * hw + 2 * i * w + 2 * j, b * hwo + i * wo + j] = 1.0
    return p


def _upsample(hs, ws, bt):
    """(bt*hs*ws, bt*4*hs*ws) 0/1 nearest-neighbour replication matrix."""
    hws, hwo = hs * ws, 4 * hs * ws
    u = np.zeros((bt * hws, bt * hwo), np.float32)
    for b in range(bt):
        for i in range(2 * hs):
            for j in range(2 * ws):
                u[b * hws + (i // 2) * ws + j // 2,
                  b * hwo + i * (2 * ws) + j] = 1.0
    return u


# ---------------------------------------------------------------------------
# Fused Pallas kernel: one grid step == one batch tile, everything in VMEM
# ---------------------------------------------------------------------------
def _frednet_kernel(x_ref, s0_ref, s1_ref, s2_ref, p0_ref, p1_ref,
                    u1_ref, u0_ref,
                    w1_ref, b1_ref, w2_ref, b2_ref, w3_ref, b3_ref,
                    w4_ref, b4_ref, w5_ref, b5_ref, wo_ref, bo_ref,
                    o_ref, im2col_ref, *, h_img, w_img, bt):
    f32, bf16 = jnp.float32, jnp.bfloat16
    hw = h_img * w_img
    n0, n1, n2 = bt * hw, bt * hw // 4, bt * hw // 16

    def conv3x3_relu(parts, wl, n, s_ref, w_ref, b_ref):
        """3x3 'same' conv + bias + ReLU.  `parts` are f32 (Ci, n) channel
        blocks whose concatenation is the conv input; each block is written
        straight into its im2col rows (skip concats never materialize)."""
        c_in = sum(int(p.shape[0]) for p in parts)
        roll_taps = len(s_ref.shape) == 2        # (9,n) masks vs (9,n,n) taps
        parts_b = None if roll_taps else [p.astype(bf16) for p in parts]
        for t in range(9):
            dh, dw = t // 3 - 1, t % 3 - 1
            row = t * c_in
            if roll_taps:
                # out[p] = in[p + dh*wl + dw]  ->  lane rotate by -(dh*wl+dw)
                shift = (-(dh * wl + dw)) % n
                msk = s_ref[t:t + 1, :]          # (1, n) 0/1 boundary mask
                for p in parts:
                    tap = p if shift == 0 else pltpu.roll(p, shift=shift, axis=1)
                    if dh or dw:
                        tap = tap * msk
                    im2col_ref[row:row + p.shape[0], 0:n] = tap
                    row += p.shape[0]
            else:                                # tiny level: 0/1 tap matmul
                for pb in parts_b:
                    tap = jnp.dot(pb, s_ref[t], preferred_element_type=f32)
                    im2col_ref[row:row + pb.shape[0], 0:n] = tap
                    row += pb.shape[0]
        im2col = im2col_ref[0:9 * c_in, 0:n].astype(bf16)
        acc = jnp.dot(w_ref[...], im2col, preferred_element_type=f32)
        return jnp.maximum(acc + b_ref[...], 0.0)          # f32 epilogue

    def maxpool2x2(x, wl, n_in, s_ref, sel_ref):
        """2x2 / stride-2 max pool.  Only (even, even) positions are gathered
        and their 3 neighbours are always in-image, so no masks are needed."""
        if len(s_ref.shape) == 2:                # roll path
            s01 = pltpu.roll(x, shift=n_in - 1, axis=1)        # x[p + 1]
            s10 = pltpu.roll(x, shift=n_in - wl, axis=1)       # x[p + W]
            s11 = pltpu.roll(x, shift=n_in - wl - 1, axis=1)   # x[p + W + 1]
        else:                                    # tiny level: 0/1 tap matmuls
            xb = x.astype(bf16)
            s01 = jnp.dot(xb, s_ref[5], preferred_element_type=f32)
            s10 = jnp.dot(xb, s_ref[7], preferred_element_type=f32)
            s11 = jnp.dot(xb, s_ref[8], preferred_element_type=f32)
        m = jnp.maximum(jnp.maximum(x, s01), jnp.maximum(s10, s11))
        return jnp.dot(m.astype(bf16), sel_ref[...], preferred_element_type=f32)

    def upsample2x(x, up_ref):                   # nearest 2x: 0/1 replication
        return jnp.dot(x.astype(bf16), up_ref[...], preferred_element_type=f32)

    x = x_ref[0]                                                     # (Cin,n0)

    # ----- encoder -----
    r1 = conv3x3_relu([x], w_img, n0, s0_ref, w1_ref, b1_ref)        # (8,  n0)
    d1 = maxpool2x2(r1, w_img, n0, s0_ref, p0_ref)                   # (8,  n1)
    r2 = conv3x3_relu([d1], w_img // 2, n1, s1_ref, w2_ref, b2_ref)  # (16, n1)
    d2 = maxpool2x2(r2, w_img // 2, n1, s1_ref, p1_ref)              # (16, n2)
    xm = conv3x3_relu([d2], w_img // 4, n2, s2_ref, w3_ref, b3_ref)  # (32, n2)

    # ----- decoder with residual (skip) connections, all in VMEM -----
    u1 = upsample2x(xm, u1_ref)                                      # (32, n1)
    y1 = conv3x3_relu([u1, r2], w_img // 2, n1, s1_ref, w4_ref, b4_ref)
    u0 = upsample2x(y1, u0_ref)                                      # (16, n0)
    y2 = conv3x3_relu([u0, r1], w_img, n0, s0_ref, w5_ref, b5_ref)   # (8,  n0)

    # ----- final 1x1 projection, lane-dense per-image stores -----
    out = jnp.dot(wo_ref[...], y2.astype(bf16),
                  preferred_element_type=f32) + bo_ref[...]          # (Co, n0)
    for i in range(bt):
        o_ref[i] = out[:, i * hw:(i + 1) * hw].astype(o_ref.dtype)


# ---------------------------------------------------------------------------
# Parameters (PyTorch-style OIHW conv weights, synthetic & deterministic)
# ---------------------------------------------------------------------------
def init_params(key, in_channels=4, out_channels=3):
    def conv(k, cout, cin, ksize):
        k1, k2 = jax.random.split(k)
        w = jax.random.normal(k1, (cout, cin, ksize, ksize), jnp.float32) * 0.1
        b = jax.random.normal(k2, (cout,), jnp.float32) * 0.01
        return w, b

    ks = jax.random.split(key, 6)
    return {
        "enc1": conv(ks[0], 8, in_channels, 3),
        "enc2": conv(ks[1], 16, 8, 3),
        "enc3": conv(ks[2], 32, 16, 3),
        "dec1": conv(ks[3], 16, 32 + 16, 3),     # [upsampled ; r2]
        "dec2": conv(ks[4], 8, 16 + 8, 3),       # [upsampled ; r1]
        "out":  conv(ks[5], out_channels, 8, 1),
    }


def _conv_mat(w, cin_pad=None):
    """(Cout, Cin, 3, 3) OIHW -> bf16 (Cout, 9*Cin) matching (tap, ci) rows."""
    cout, cin, kh, kw = w.shape
    if cin_pad is not None and cin_pad > cin:
        w = jnp.pad(w, ((0, 0), (0, cin_pad - cin), (0, 0), (0, 0)))
        cin = cin_pad
    return (jnp.transpose(w, (0, 2, 3, 1))
            .reshape(cout, kh * kw * cin).astype(jnp.bfloat16))


def _const_spec(arr):
    if arr.ndim == 2:
        return pl.BlockSpec(arr.shape, lambda g: (0, 0))
    return pl.BlockSpec(arr.shape, lambda g: (0, 0, 0))


# ---------------------------------------------------------------------------
# NNet forward (frednet, use_residuals=True, out_layer=None)
# ---------------------------------------------------------------------------
def nnet_forward(params, x_nchw, batch_tile=None):
    B, C, H, W = x_nchw.shape
    assert H % 4 == 0 and W % 4 == 0, "two 2x pools require H, W % 4 == 0"
    HW = H * W

    # Batch-into-lanes: pack `bt` images onto the lane axis so the top-level
    # conv dots have N >= ~512 lanes.  bt must divide B.
    if batch_tile is None:
        batch_tile = max(1, min(B, -(-512 // HW)))
        while B % batch_tile:
            batch_tile -= 1
    bt = batch_tile
    assert B % bt == 0
    G = B // bt

    # Pad input channels up to a multiple of 8 (tile-aligned sublane blocks);
    # the padded weight columns are zero.
    cin_pad = -(-C // 8) * 8
    x = x_nchw.reshape(B, C, HW).astype(jnp.float32)
    x = jnp.pad(x, ((0, 0), (0, cin_pad - C), (0, 0)))
    # (G, bt, C, HW) -> (G, C, bt*HW): channels on sublanes, images share lanes
    x = (x.reshape(G, bt, cin_pad, HW)
          .transpose(0, 2, 1, 3)
          .reshape(G, cin_pad, bt * HW))

    bf16 = jnp.bfloat16

    def struct(hl, wl):
        n = bt * hl * wl
        if n % 128 == 0:   # roll-based taps: ship (9, n) f32 boundary masks
            return jnp.asarray(_tap_masks(hl, wl, bt), jnp.float32)
        return jnp.asarray(_tap_mats(hl, wl, bt), bf16)   # tiny 0/1 tap mats

    S0 = struct(H, W)
    S1 = struct(H // 2, W // 2)
    S2 = struct(H // 4, W // 4)
    P0 = jnp.asarray(_pool_select(H, W, bt), bf16)
    P1 = jnp.asarray(_pool_select(H // 2, W // 2, bt), bf16)
    U1 = jnp.asarray(_upsample(H // 4, W // 4, bt), bf16)
    U0 = jnp.asarray(_upsample(H // 2, W // 2, bt), bf16)

    # bf16 conv weights in the (Cout, 9*Cin) im2col layout; f32 biases.
    w1 = _conv_mat(params["enc1"][0], cin_pad=cin_pad)
    b1 = params["enc1"][1].reshape(-1, 1)
    w2 = _conv_mat(params["enc2"][0]); b2 = params["enc2"][1].reshape(-1, 1)
    w3 = _conv_mat(params["enc3"][0]); b3 = params["enc3"][1].reshape(-1, 1)
    w4 = _conv_mat(params["dec1"][0]); b4 = params["dec1"][1].reshape(-1, 1)
    w5 = _conv_mat(params["dec2"][0]); b5 = params["dec2"][1].reshape(-1, 1)
    wo = params["out"][0].reshape(params["out"][0].shape[0], -1).astype(bf16)
    bo = params["out"][1].reshape(-1, 1)
    cout = wo.shape[0]

    consts = (S0, S1, S2, P0, P1, U1, U0,
              w1, b1, w2, b2, w3, b3, w4, b4, w5, b5, wo, bo)

    max_cin = max(cin_pad, 8, 16, 32 + 16, 16 + 8)   # widest conv input (dec1)

    kernel = functools.partial(_frednet_kernel, h_img=H, w_img=W, bt=bt)
    out = pl.pallas_call(
        kernel,
        out_shape=jax.ShapeDtypeStruct((B, cout, HW), jnp.float32),
        grid=(G,),
        in_specs=[pl.BlockSpec((1, cin_pad, bt * HW), lambda g: (g, 0, 0))]
                 + [_const_spec(c) for c in consts],
        out_specs=pl.BlockSpec((bt, cout, HW), lambda g: (g, 0, 0)),
        scratch_shapes=[pltpu.VMEM((9 * max_cin, bt * HW), jnp.float32)],
        compiler_params=pltpu.CompilerParams(
            dimension_semantics=("parallel",),
            vmem_limit_bytes=32 * 1024 * 1024),
    )(x, *consts)

    return out.reshape(B, cout, H, W)


# ---------------------------------------------------------------------------
# Pure-JAX reference (sanity check of the fused kernel)
# ---------------------------------------------------------------------------
def nnet_reference(params, x_nchw):
    x = x_nchw.astype(jnp.float32)

    def conv(a, w, b, relu=True):
        y = jax.lax.conv_general_dilated(
            a, w, window_strides=(1, 1), padding="SAME",
            dimension_numbers=("NCHW", "OIHW", "NCHW"),
            precision=jax.lax.Precision.HIGHEST)
        y = y + b.reshape(1, -1, 1, 1)
        return jnp.maximum(y, 0.0) if relu else y

    def pool(a):
        return jax.lax.reduce_window(a, -jnp.inf, jax.lax.max,
                                     (1, 1, 2, 2), (1, 1, 2, 2), "VALID")

    def up(a):
        return jnp.repeat(jnp.repeat(a, 2, axis=2), 2, axis=3)

    r1 = conv(x, *params["enc1"])
    d1 = pool(r1)
    r2 = conv(d1, *params["enc2"])
    d2 = pool(r2)
    xm = conv(d2, *params["enc3"])
    y1 = conv(jnp.concatenate([up(xm), r2], axis=1), *params["dec1"])
    y2 = conv(jnp.concatenate([up(y1), r1], axis=1), *params["dec2"])
    return conv(y2, *params["out"], relu=False)


if __name__ == "__main__":
    key = jax.random.PRNGKey(0)
    k_param, k_input = jax.random.split(key)

    B, C, H, W = 2, 4, 16, 16
    x = jax.random.normal(k_input, (B, C, H, W), jnp.float32)
    params = init_params(k_param, in_channels=C, out_channels=3)

    out = nnet_forward(params, x)
    out = jax.block_until_ready(out)

    assert out.shape == (B, 3, H, W), out.shape
    assert out.dtype == jnp.float32

    # Sanity check against a pure-JAX f32 reference (kernel uses bf16 weights
    # and bf16 activations on the MXU with f32 accumulation).
    ref = nnet_reference(params, x)
    rel_err = float(jnp.sqrt(jnp.sum((out - ref) ** 2) / jnp.sum(ref ** 2)))
    assert rel_err < 8e-2, f"relative error too large: {rel_err}"

    print("KERNEL_OK")
</pallas_src>

<mosaic_0001>
module attributes {stable_mosaic.version = 11 : i64} {
  func.func @_frednet_kernel(%arg0: i32, %arg1: memref<1x8x512xf32, #tpu.memory_space<vmem>>, %arg2: memref<9x512xf32, #tpu.memory_space<vmem>>, %arg3: memref<9x128xf32, #tpu.memory_space<vmem>>, %arg4: memref<9x32x32xbf16, #tpu.memory_space<vmem>>, %arg5: memref<512x128xbf16, #tpu.memory_space<vmem>>, %arg6: memref<128x32xbf16, #tpu.memory_space<vmem>>, %arg7: memref<32x128xbf16, #tpu.memory_space<vmem>>, %arg8: memref<128x512xbf16, #tpu.memory_space<vmem>>, %arg9: memref<8x72xbf16, #tpu.memory_space<vmem>>, %arg10: memref<8x1xf32, #tpu.memory_space<vmem>>, %arg11: memref<16x72xbf16, #tpu.memory_space<vmem>>, %arg12: memref<16x1xf32, #tpu.memory_space<vmem>>, %arg13: memref<32x144xbf16, #tpu.memory_space<vmem>>, %arg14: memref<32x1xf32, #tpu.memory_space<vmem>>, %arg15: memref<16x432xbf16, #tpu.memory_space<vmem>>, %arg16: memref<16x1xf32, #tpu.memory_space<vmem>>, %arg17: memref<8x216xbf16, #tpu.memory_space<vmem>>, %arg18: memref<8x1xf32, #tpu.memory_space<vmem>>, %arg19: memref<3x8xbf16, #tpu.memory_space<vmem>>, %arg20: memref<3x1xf32, #tpu.memory_space<vmem>>, %arg21: memref<2x3x256xf32, #tpu.memory_space<vmem>>, %arg22: memref<432x512xf32, #tpu.memory_space<vmem>>) attributes {dimension_semantics = [#tpu.dimension_semantics<parallel>], iteration_bounds = array<i64: 1>, scalar_prefetch = 0 : i64, scratch_operands = 1 : i64, tpu.core_type = #tpu.core_type<tc>, window_params = [{transform_indices = @transform_0, window_bounds = array<i64: 1, 8, 512>}, {pipeline_mode = #tpu.pipeline_mode<synchronous>, transform_indices = @transform_1, window_bounds = array<i64: 9, 512>}, {pipeline_mode = #tpu.pipeline_mode<synchronous>, transform_indices = @transform_2, window_bounds = array<i64: 9, 128>}, {pipeline_mode = #tpu.pipeline_mode<synchronous>, transform_indices = @transform_3, window_bounds = array<i64: 9, 32, 32>}, {pipeline_mode = #tpu.pipeline_mode<synchronous>, transform_indices = @transform_4, window_bounds = array<i64: 512, 128>}, {pipeline_mode = #tpu.pipeline_mode<synchronous>, transform_indices = @transform_5, window_bounds = array<i64: 128, 32>}, {pipeline_mode = #tpu.pipeline_mode<synchronous>, transform_indices = @transform_6, window_bounds = array<i64: 32, 128>}, {pipeline_mode = #tpu.pipeline_mode<synchronous>, transform_indices = @transform_7, window_bounds = array<i64: 128, 512>}, {pipeline_mode = #tpu.pipeline_mode<synchronous>, transform_indices = @transform_8, window_bounds = array<i64: 8, 72>}, {pipeline_mode = #tpu.pipeline_mode<synchronous>, transform_indices = @transform_9, window_bounds = array<i64: 8, 1>}, {pipeline_mode = #tpu.pipeline_mode<synchronous>, transform_indices = @transform_10, window_bounds = array<i64: 16, 72>}, {pipeline_mode = #tpu.pipeline_mode<synchronous>, transform_indices = @transform_11, window_bounds = array<i64: 16, 1>}, {pipeline_mode = #tpu.pipeline_mode<synchronous>, transform_indices = @transform_12, window_bounds = array<i64: 32, 144>}, {pipeline_mode = #tpu.pipeline_mode<synchronous>, transform_indices = @transform_13, window_bounds = array<i64: 32, 1>}, {pipeline_mode = #tpu.pipeline_mode<synchronous>, transform_indices = @transform_14, window_bounds = array<i64: 16, 432>}, {pipeline_mode = #tpu.pipeline_mode<synchronous>, transform_indices = @transform_15, window_bounds = array<i64: 16, 1>}, {pipeline_mode = #tpu.pipeline_mode<synchronous>, transform_indices = @transform_16, window_bounds = array<i64: 8, 216>}, {pipeline_mode = #tpu.pipeline_mode<synchronous>, transform_indices = @transform_17, window_bounds = array<i64: 8, 1>}, {pipeline_mode = #tpu.pipeline_mode<synchronous>, transform_indices = @transform_18, window_bounds = array<i64: 3, 8>}, {pipeline_mode = #tpu.pipeline_mode<synchronous>, transform_indices = @transform_19, window_bounds = array<i64: 3, 1>}, {transform_indices = @transform_20, window_bounds = array<i64: 2, 3, 256>}]} {
    %c0 = arith.constant 0 : index
    %c0_0 = arith.constant 0 : index
    %c0_1 = arith.constant 0 : index
    %0 = vector.load %arg1[%c0, %c0_0, %c0_1] : memref<1x8x512xf32, #tpu.memory_space<vmem>>, vector<1x8x512xf32>
    %1 = vector.shape_cast %0 : vector<1x8x512xf32> to vector<8x512xf32>
    %c0_2 = arith.constant 0 : index
    %c0_3 = arith.constant 0 : index
    %2 = vector.load %arg2[%c0_2, %c0_3] : memref<9x512xf32, #tpu.memory_space<vmem>>, vector<1x512xf32>
    %c17_i32 = arith.constant 17 : i32
    %3 = tpu.dynamic_rotate %1 by %c17_i32 dim 1 : vector<8x512xf32>, i32 -> vector<8x512xf32>
    %4 = vector.broadcast %2 : vector<1x512xf32> to vector<8x512xf32>
    %5 = arith.mulf %3, %4 : vector<8x512xf32>
    %c0_4 = arith.constant 0 : index
    %c0_5 = arith.constant 0 : index
    %6 = vector.load %arg22[%c0_4, %c0_5] : memref<432x512xf32, #tpu.memory_space<vmem>>, vector<8x512xf32>
    tpu.vector_store %arg22[%c0_4, %c0_5], %5 {strides = array<i32>} : memref<432x512xf32, #tpu.memory_space<vmem>>, vector<8x512xf32>,
    %c1 = arith.constant 1 : index
    %c0_6 = arith.constant 0 : index
    %7 = vector.load %arg2[%c1, %c0_6] : memref<9x512xf32, #tpu.memory_space<vmem>>, vector<1x512xf32>
    %c16_i32 = arith.constant 16 : i32
    %8 = tpu.dynamic_rotate %1 by %c16_i32 dim 1 : vector<8x512xf32>, i32 -> vector<8x512xf32>
    %9 = vector.broadcast %7 : vector<1x512xf32> to vector<8x512xf32>
    %10 = arith.mulf %8, %9 : vector<8x512xf32>
    %c8 = arith.constant 8 : index
    %c0_7 = arith.constant 0 : index
    %11 = vector.load %arg22[%c8, %c0_7] : memref<432x512xf32, #tpu.memory_space<vmem>>, vector<8x512xf32>
    tpu.vector_store %arg22[%c8, %c0_7], %10 {strides = array<i32>} : memref<432x512xf32, #tpu.memory_space<vmem>>, vector<8x512xf32>,
    %c2 = arith.constant 2 : index
    %c0_8 = arith.constant 0 : index
    %12 = vector.load %arg2[%c2, %c0_8] : memref<9x512xf32, #tpu.memory_space<vmem>>, vector<1x512xf32>
    %c15_i32 = arith.constant 15 : i32
    %13 = tpu.dynamic_rotate %1 by %c15_i32 dim 1 : vector<8x512xf32>, i32 -> vector<8x512xf32>
    %14 = vector.broadcast %12 : vector<1x512xf32> to vector<8x512xf32>
    %15 = arith.mulf %13, %14 : vector<8x512xf32>
    %c16 = arith.constant 16 : index
    %c0_9 = arith.constant 0 : index
    %16 = vector.load %arg22[%c16, %c0_9] : memref<432x512xf32, #tpu.memory_space<vmem>>, vector<8x512xf32>
    tpu.vector_store %arg22[%c16, %c0_9], %15 {strides = array<i32>} : memref<432x512xf32, #tpu.memory_space<vmem>>, vector<8x512xf32>,
    %c3 = arith.constant 3 : index
    %c0_10 = arith.constant 0 : index
    %17 = vector.load %arg2[%c3, %c0_10] : memref<9x512xf32, #tpu.memory_space<vmem>>, vector<1x512xf32>
    %c1_i32 = arith.constant 1 : i32
    %18 = tpu.dynamic_rotate %1 by %c1_i32 dim 1 : vector<8x512xf32>, i32 -> vector<8x512xf32>
    %19 = vector.broadcast %17 : vector<1x512xf32> to vector<8x512xf32>
    %20 = arith.mulf %18, %19 : vector<8x512xf32>
    %c24 = arith.constant 24 : index
    %c0_11 = arith.constant 0 : index
    %21 = vector.load %arg22[%c24, %c0_11] : memref<432x512xf32, #tpu.memory_space<vmem>>, vector<8x512xf32>
    tpu.vector_store %arg22[%c24, %c0_11], %20 {strides = array<i32>} : memref<432x512xf32, #tpu.memory_space<vmem>>, vector<8x512xf32>,
    %c32 = arith.constant 32 : index
    %c0_12 = arith.constant 0 : index
    %22 = vector.load %arg22[%c32, %c0_12] : memref<432x512xf32, #tpu.memory_space<vmem>>, vector<8x512xf32>
    tpu.vector_store %arg22[%c32, %c0_12], %1 {strides = array<i32>} : memref<432x512xf32, #tpu.memory_space<vmem>>, vector<8x512xf32>,
    %c5 = arith.constant 5 : index
    %c0_13 = arith.constant 0 : index
    %23 = vector.load %arg2[%c5, %c0_13] : memref<9x512xf32, #tpu.memory_space<vmem>>, vector<1x512xf32>
    %c511_i32 = arith.constant 511 : i32
    %24 = tpu.dynamic_rotate %1 by %c511_i32 dim 1 : vector<8x512xf32>, i32 -> vector<8x512xf32>
    %25 = vector.broadcast %23 : vector<1x512xf32> to vector<8x512xf32>
    %26 = arith.mulf %24, %25 : vector<8x512xf32>
    %c40 = arith.constant 40 : index
    %c0_14 = arith.constant 0 : index
    %27 = vector.load %arg22[%c40, %c0_14] : memref<432x512xf32, #tpu.memory_space<vmem>>, vector<8x512xf32>
    tpu.vector_store %arg22[%c40, %c0_14], %26 {strides = array<i32>} : memref<432x512xf32, #tpu.memory_space<vmem>>, vector<8x512xf32>,
    %c6 = arith.constant 6 : index
    %c0_15 = arith.constant 0 : index
    %28 = vector.load %arg2[%c6, %c0_15] : memref<9x512xf32, #tpu.memory_space<vmem>>, vector<1x512xf32>
    %c497_i32 = arith.constant 497 : i32
    %29 = tpu.dynamic_rotate %1 by %c497_i32 dim 1 : vector<8x512xf32>, i32 -> vector<8x512xf32>
    %30 = vector.broadcast %28 : vector<1x512xf32> to vector<8x512xf32>
    %31 = arith.mulf %29, %30 : vector<8x512xf32>
    %c48 = arith.constant 48 : index
    %c0_16 = arith.constant 0 : index
    %32 = vector.load %arg22[%c48, %c0_16] : memref<432x512xf32, #tpu.memory_space<vmem>>, vector<8x512xf32>
    tpu.vector_store %arg22[%c48, %c0_16], %31 {strides = array<i32>} : memref<432x512xf32, #tpu.memory_space<vmem>>, vector<8x512xf32>,
    %c7 = arith.constant 7 : index
    %c0_17 = arith.constant 0 : index
    %33 = vector.load %arg2[%c7, %c0_17] : memref<9x512xf32, #tpu.memory_space<vmem>>, vector<1x512xf32>
    %c496_i32 = arith.constant 496 : i32
    %34 = tpu.dynamic_rotate %1 by %c496_i32 dim 1 : vector<8x512xf32>, i32 -> vector<8x512xf32>
    %35 = vector.broadcast %33 : vector<1x512xf32> to vector<8x512xf32>
    %36 = arith.mulf %34, %35 : vector<8x512xf32>
    %c56 = arith.constant 56 : index
    %c0_18 = arith.constant 0 : index
    %37 = vector.load %arg22[%c56, %c0_18] : memref<432x512xf32, #tpu.memory_space<vmem>>, vector<8x512xf32>
    tpu.vector_store %arg22[%c56, %c0_18], %36 {strides = array<i32>} : memref<432x512xf32, #tpu.memory_space<vmem>>, vector<8x512xf32>,
    %c8_19 = arith.constant 8 : index
    %c0_20 = arith.constant 0 : index
    %38 = vector.load %arg2[%c8_19, %c0_20] : memref<9x512xf32, #tpu.memory_space<vmem>>, vector<1x512xf32>
    %c495_i32 = arith.constant 495 : i32
    %39 = tpu.dynamic_rotate %1 by %c495_i32 dim 1 : vector<8x512xf32>, i32 -> vector<8x512xf32>
    %40 = vector.broadcast %38 : vector<1x512xf32> to vector<8x512xf32>
    %41 = arith.mulf %39, %40 : vector<8x512xf32>
    %c64 = arith.constant 64 : index
    %c0_21 = arith.constant 0 : index
    %42 = vector.load %arg22[%c64, %c0_21] : memref<432x512xf32, #tpu.memory_space<vmem>>, vector<8x512xf32>
    tpu.vector_store %arg22[%c64, %c0_21], %41 {strides = array<i32>} : memref<432x512xf32, #tpu.memory_space<vmem>>, vector<8x512xf32>,
    %c0_22 = arith.constant 0 : index
    %c0_23 = arith.constant 0 : index
    %43 = vector.load %arg22[%c0_22, %c0_23] : memref<432x512xf32, #tpu.memory_space<vmem>>, vector<72x512xf32>
    %44 = arith.truncf %43 : vector<72x512xf32> to vector<72x512xbf16>
    %c0_24 = arith.constant 0 : index
    %c0_25 = arith.constant 0 : index
    %45 = vector.load %arg9[%c0_24, %c0_25] : memref<8x72xbf16, #tpu.memory_space<vmem>>, vector<8x72xbf16>
    %cst = arith.constant dense<0.000000e+00> : vector<8x512xf32>
    %46 = tpu.matmul %45, %44, %cst {dimension_numbers = #tpu.dot_dimension_numbers<[1], [0], [0], [1], [0, 0, 1, 1], [], []>} : vector<8x72xbf16>, vector<72x512xbf16>, vector<8x512xf32> -> vector<8x512xf32>
    %c0_26 = arith.constant 0 : index
    %c0_27 = arith.constant 0 : index
    %47 = vector.load %arg10[%c0_26, %c0_27] : memref<8x1xf32, #tpu.memory_space<vmem>>, vector<8x1xf32>
    %48 = vector.broadcast %47 : vector<8x1xf32> to vector<8x512xf32>
    %49 = arith.addf %46, %48 : vector<8x512xf32>
    %cst_28 = arith.constant 0.000000e+00 : f32
    %50 = vector.broadcast %cst_28 : f32 to vector<8x512xf32>
    %51 = arith.maximumf %49, %50 : vector<8x512xf32>
    %c511_i32_29 = arith.constant 511 : i32
    %52 = tpu.dynamic_rotate %51 by %c511_i32_29 dim 1 : vector<8x512xf32>, i32 -> vector<8x512xf32>
    %c496_i32_30 = arith.constant 496 : i32
    %53 = tpu.dynamic_rotate %51 by %c496_i32_30 dim 1 : vector<8x512xf32>, i32 -> vector<8x512xf32>
    %c495_i32_31 = arith.constant 495 : i32
    %54 = tpu.dynamic_rotate %51 by %c495_i32_31 dim 1 : vector<8x512xf32>, i32 -> vector<8x512xf32>
    %55 = arith.maximumf %51, %52 : vector<8x512xf32>
    %56 = arith.maximumf %53, %54 : vector<8x512xf32>
    %57 = arith.maximumf %55, %56 : vector<8x512xf32>
    %58 = arith.truncf %57 : vector<8x512xf32> to vector<8x512xbf16>
    %c0_32 = arith.constant 0 : index
    %c0_33 = arith.constant 0 : index
    %59 = vector.load %arg5[%c0_32, %c0_33] : memref<512x128xbf16, #tpu.memory_space<vmem>>, vector<512x128xbf16>
    %cst_34 = arith.constant dense<0.000000e+00> : vector<8x128xf32>
    %60 = tpu.matmul %58, %59, %cst_34 {dimension_numbers = #tpu.dot_dimension_numbers<[1], [0], [0], [1], [0, 0, 1, 1], [], []>} : vector<8x512xbf16>, vector<512x128xbf16>, vector<8x128xf32> -> vector<8x128xf32>
    %c0_35 = arith.constant 0 : index
    %c0_36 = arith.constant 0 : index
    %61 = vector.load %arg3[%c0_35, %c0_36] : memref<9x128xf32, #tpu.memory_space<vmem>>, vector<1x128xf32>
    %c9_i32 = arith.constant 9 : i32
    %62 = tpu.dynamic_rotate %60 by %c9_i32 dim 1 : vector<8x128xf32>, i32 -> vector<8x128xf32>
    %63 = vector.broadcast %61 : vector<1x128xf32> to vector<8x128xf32>
    %64 = arith.mulf %62, %63 : vector<8x128xf32>
    %c0_37 = arith.constant 0 : index
    %c0_38 = arith.constant 0 : index
    %65 = vector.load %arg22[%c0_37, %c0_38] : memref<432x512xf32, #tpu.memory_space<vmem>>, vector<8x128xf32>
    tpu.vector_store %arg22[%c0_37, %c0_38], %64 {strides = array<i32>} : memref<432x512xf32, #tpu.memory_space<vmem>>, vector<8x128xf32>,
    %c1_39 = arith.constant 1 : index
    %c0_40 = arith.constant 0 : index
    %66 = vector.load %arg3[%c1_39, %c0_40] : memref<9x128xf32, #tpu.memory_space<vmem>>, vector<1x128xf32>
    %c8_i32 = arith.constant 8 : i32
    %67 = tpu.dynamic_rotate %60 by %c8_i32 dim 1 : vector<8x128xf32>, i32 -> vector<8x128xf32>
    %68 = vector.broadcast %66 : vector<1x128xf32> to vector<8x128xf32>
    %69 = arith.mulf %67, %68 : vector<8x128xf32>
    %c8_41 = arith.constant 8 : index
    %c0_42 = arith.constant 0 : index
    %70 = vector.load %arg22[%c8_41, %c0_42] : memref<432x512xf32, #tpu.memory_space<vmem>>, vector<8x128xf32>
    tpu.vector_store %arg22[%c8_41, %c0_42], %69 {strides = array<i32>} : memref<432x512xf32, #tpu.memory_space<vmem>>, vector<8x128xf32>,
    %c2_43 = arith.constant 2 : index
    %c0_44 = arith.constant 0 : index
    %71 = vector.load %arg3[%c2_43, %c0_44] : memref<9x128xf32, #tpu.memory_space<vmem>>, vector<1x128xf32>
    %c7_i32 = arith.constant 7 : i32
    %72 = tpu.dynamic_rotate %60 by %c7_i32 dim 1 : vector<8x128xf32>, i32 -> vector<8x128xf32>
    %73 = vector.broadcast %71 : vector<1x128xf32> to vector<8x128xf32>
    %74 = arith.mulf %72, %73 : vector<8x128xf32>
    %c16_45 = arith.constant 16 : index
    %c0_46 = arith.constant 0 : index
    %75 = vector.load %arg22[%c16_45, %c0_46] : memref<432x512xf32, #tpu.memory_space<vmem>>, vector<8x128xf32>
    tpu.vector_store %arg22[%c16_45, %c0_46], %74 {strides = array<i32>} : memref<432x512xf32, #tpu.memory_space<vmem>>, vector<8x128xf32>,
    %c3_47 = arith.constant 3 : index
    %c0_48 = arith.constant 0 : index
    %76 = vector.load %arg3[%c3_47, %c0_48] : memref<9x128xf32, #tpu.memory_space<vmem>>, vector<1x128xf32>
    %c1_i32_49 = arith.constant 1 : i32
    %77 = tpu.dynamic_rotate %60 by %c1_i32_49 dim 1 : vector<8x128xf32>, i32 -> vector<8x128xf32>
    %78 = vector.broadcast %76 : vector<1x128xf32> to vector<8x128xf32>
    %79 = arith.mulf %77, %78 : vector<8x128xf32>
    %c24_50 = arith.constant 24 : index
    %c0_51 = arith.constant 0 : index
    %80 = vector.load %arg22[%c24_50, %c0_51] : memref<432x512xf32, #tpu.memory_space<vmem>>, vector<8x128xf32>
    tpu.vector_store %arg22[%c24_50, %c0_51], %79 {strides = array<i32>} : memref<432x512xf32, #tpu.memory_space<vmem>>, vector<8x128xf32>,
    %c32_52 = arith.constant 32 : index
    %c0_53 = arith.constant 0 : index
    %81 = vector.load %arg22[%c32_52, %c0_53] : memref<432x512xf32, #tpu.memory_space<vmem>>, vector<8x128xf32>
    tpu.vector_store %arg22[%c32_52, %c0_53], %60 {strides = array<i32>} : memref<432x512xf32, #tpu.memory_space<vmem>>, vector<8x128xf32>,
    %c5_54 = arith.constant 5 : index
    %c0_55 = arith.constant 0 : index
    %82 = vector.load %arg3[%c5_54, %c0_55] : memref<9x128xf32, #tpu.memory_space<vmem>>, vector<1x128xf32>
    %c127_i32 = arith.constant 127 : i32
    %83 = tpu.dynamic_rotate %60 by %c127_i32 dim 1 : vector<8x128xf32>, i32 -> vector<8x128xf32>
    %84 = vector.broadcast %82 : vector<1x128xf32> to vector<8x128xf32>
    %85 = arith.mulf %83, %84 : vector<8x128xf32>
    %c40_56 = arith.constant 40 : index
    %c0_57 = arith.constant 0 : index
    %86 = vector.load %arg22[%c40_56, %c0_57] : memref<432x512xf32, #tpu.memory_space<vmem>>, vector<8x128xf32>
    tpu.vector_store %arg22[%c40_56, %c0_57], %85 {strides = array<i32>} : memref<432x512xf32, #tpu.memory_space<vmem>>, vector<8x128xf32>,
    %c6_58 = arith.constant 6 : index
    %c0_59 = arith.constant 0 : index
    %87 = vector.load %arg3[%c6_58, %c0_59] : memref<9x128xf32, #tpu.memory_space<vmem>>, vector<1x128xf32>
    %c121_i32 = arith.constant 121 : i32
    %88 = tpu.dynamic_rotate %60 by %c121_i32 dim 1 : vector<8x128xf32>, i32 -> vector<8x128xf32>
    %89 = vector.broadcast %87 : vector<1x128xf32> to vector<8x128xf32>
    %90 = arith.mulf %88, %89 : vector<8x128xf32>
    %c48_60 = arith.constant 48 : index
    %c0_61 = arith.constant 0 : index
    %91 = vector.load %arg22[%c48_60, %c0_61] : memref<432x512xf32, #tpu.memory_space<vmem>>, vector<8x128xf32>
    tpu.vector_store %arg22[%c48_60, %c0_61], %90 {strides = array<i32>} : memref<432x512xf32, #tpu.memory_space<vmem>>, vector<8x128xf32>,
    %c7_62 = arith.constant 7 : index
    %c0_63 = arith.constant 0 : index
    %92 = vector.load %arg3[%c7_62, %c0_63] : memref<9x128xf32, #tpu.memory_space<vmem>>, vector<1x128xf32>
    %c120_i32 = arith.constant 120 : i32
    %93 = tpu.dynamic_rotate %60 by %c120_i32 dim 1 : vector<8x128xf32>, i32 -> vector<8x128xf32>
    %94 = vector.broadcast %92 : vector<1x128xf32> to vector<8x128xf32>
    %95 = arith.mulf %93, %94 : vector<8x128xf32>
    %c56_64 = arith.constant 56 : index
    %c0_65 = arith.constant 0 : index
    %96 = vector.load %arg22[%c56_64, %c0_65] : memref<432x512xf32, #tpu.memory_space<vmem>>, vector<8x128xf32>
    tpu.vector_store %arg22[%c56_64, %c0_65], %95 {strides = array<i32>} : memref<432x512xf32, #tpu.memory_space<vmem>>, vector<8x128xf32>,
    %c8_66 = arith.constant 8 : index
    %c0_67 = arith.constant 0 : index
    %97 = vector.load %arg3[%c8_66, %c0_67] : memref<9x128xf32, #tpu.memory_space<vmem>>, vector<1x128xf32>
    %c119_i32 = arith.constant 119 : i32
    %98 = tpu.dynamic_rotate %60 by %c119_i32 dim 1 : vector<8x128xf32>, i32 -> vector<8x128xf32>
    %99 = vector.broadcast %97 : vector<1x128xf32> to vector<8x128xf32>
    %100 = arith.mulf %98, %99 : vector<8x128xf32>
    %c64_68 = arith.constant 64 : index
    %c0_69 = arith.constant 0 : index
    %101 = vector.load %arg22[%c64_68, %c0_69] : memref<432x512xf32, #tpu.memory_space<vmem>>, vector<8x128xf32>
    tpu.vector_store %arg22[%c64_68, %c0_69], %100 {strides = array<i32>} : memref<432x512xf32, #tpu.memory_space<vmem>>, vector<8x128xf32>,
    %c0_70 = arith.constant 0 : index
    %c0_71 = arith.constant 0 : index
    %102 = vector.load %arg22[%c0_70, %c0_71] : memref<432x512xf32, #tpu.memory_space<vmem>>, vector<72x128xf32>
    %103 = arith.truncf %102 : vector<72x128xf32> to vector<72x128xbf16>
    %c0_72 = arith.constant 0 : index
    %c0_73 = arith.constant 0 : index
    %104 = vector.load %arg11[%c0_72, %c0_73] : memref<16x72xbf16, #tpu.memory_space<vmem>>, vector<16x72xbf16>
    %cst_74 = arith.constant dense<0.000000e+00> : vector<16x128xf32>
    %105 = tpu.matmul %104, %103, %cst_74 {dimension_numbers = #tpu.dot_dimension_numbers<[1], [0], [0], [1], [0, 0, 1, 1], [], []>} : vector<16x72xbf16>, vector<72x128xbf16>, vector<16x128xf32> -> vector<16x128xf32>
    %c0_75 = arith.constant 0 : index
    %c0_76 = arith.constant 0 : index
    %106 = vector.load %arg12[%c0_75, %c0_76] : memref<16x1xf32, #tpu.memory_space<vmem>>, vector<16x1xf32>
    %107 = vector.broadcast %106 : vector<16x1xf32> to vector<16x128xf32>
    %108 = arith.addf %105, %107 : vector<16x128xf32>
    %cst_77 = arith.constant 0.000000e+00 : f32
    %109 = vector.broadcast %cst_77 : f32 to vector<16x128xf32>
    %110 = arith.maximumf %108, %109 : vector<16x128xf32>
    %c127_i32_78 = arith.constant 127 : i32
    %111 = tpu.dynamic_rotate %110 by %c127_i32_78 dim 1 : vector<16x128xf32>, i32 -> vector<16x128xf32>
    %c120_i32_79 = arith.constant 120 : i32
    %112 = tpu.dynamic_rotate %110 by %c120_i32_79 dim 1 : vector<16x128xf32>, i32 -> vector<16x128xf32>
    %c119_i32_80 = arith.constant 119 : i32
    %113 = tpu.dynamic_rotate %110 by %c119_i32_80 dim 1 : vector<16x128xf32>, i32 -> vector<16x128xf32>
    %114 = arith.maximumf %110, %111 : vector<16x128xf32>
    %115 = arith.maximumf %112, %113 : vector<16x128xf32>
    %116 = arith.maximumf %114, %115 : vector<16x128xf32>
    %117 = arith.truncf %116 : vector<16x128xf32> to vector<16x128xbf16>
    %c0_81 = arith.constant 0 : index
    %c0_82 = arith.constant 0 : index
    %118 = vector.load %arg6[%c0_81, %c0_82] : memref<128x32xbf16, #tpu.memory_space<vmem>>, vector<128x32xbf16>
    %cst_83 = arith.constant dense<0.000000e+00> : vector<16x32xf32>
    %119 = tpu.matmul %117, %118, %cst_83 {dimension_numbers = #tpu.dot_dimension_numbers<[1], [0], [0], [1], [0, 0, 1, 1], [], []>} : vector<16x128xbf16>, vector<128x32xbf16>, vector<16x32xf32> -> vector<16x32xf32>
    %120 = arith.truncf %119 : vector<16x32xf32> to vector<16x32xbf16>
    %c0_84 = arith.constant 0 : index
    %c0_85 = arith.constant 0 : index
    %c0_86 = arith.constant 0 : index
    %121 = vector.load %arg4[%c0_84, %c0_85, %c0_86] : memref<9x32x32xbf16, #tpu.memory_space<vmem>>, vector<1x32x32xbf16>
    %122 = vector.shape_cast %121 : vector<1x32x32xbf16> to vector<32x32xbf16>
    %cst_87 = arith.constant dense<0.000000e+00> : vector<16x32xf32>
    %123 = tpu.matmul %120, %122, %cst_87 {dimension_numbers = #tpu.dot_dimension_numbers<[1], [0], [0], [1], [0, 0, 1, 1], [], []>} : vector<16x32xbf16>, vector<32x32xbf16>, vector<16x32xf32> -> vector<16x32xf32>
    %c0_88 = arith.constant 0 : index
    %c0_89 = arith.constant 0 : index
    %124 = vector.load %arg22[%c0_88, %c0_89] : memref<432x512xf32, #tpu.memory_space<vmem>>, vector<16x32xf32>
    tpu.vector_store %arg22[%c0_88, %c0_89], %123 {strides = array<i32>} : memref<432x512xf32, #tpu.memory_space<vmem>>, vector<16x32xf32>,
    %c1_90 = arith.constant 1 : index
    %c0_91 = arith.constant 0 : index
    %c0_92 = arith.constant 0 : index
    %125 = vector.load %arg4[%c1_90, %c0_91, %c0_92] : memref<9x32x32xbf16, #tpu.memory_space<vmem>>, vector<1x32x32xbf16>
    %126 = vector.shape_cast %125 : vector<1x32x32xbf16> to vector<32x32xbf16>
    %cst_93 = arith.constant dense<0.000000e+00> : vector<16x32xf32>
    %127 = tpu.matmul %120, %126, %cst_93 {dimension_numbers = #tpu.dot_dimension_numbers<[1], [0], [0], [1], [0, 0, 1, 1], [], []>} : vector<16x32xbf16>, vector<32x32xbf16>, vector<16x32xf32> -> vector<16x32xf32>
    %c16_94 = arith.constant 16 : index
    %c0_95 = arith.constant 0 : index
    %128 = vector.load %arg22[%c16_94, %c0_95] : memref<432x512xf32, #tpu.memory_space<vmem>>, vector<16x32xf32>
    tpu.vector_store %arg22[%c16_94, %c0_95], %127 {strides = array<i32>} : memref<432x512xf32, #tpu.memory_space<vmem>>, vector<16x32xf32>,
    %c2_96 = arith.constant 2 : index
    %c0_97 = arith.constant 0 : index
    %c0_98 = arith.constant 0 : index
    %129 = vector.load %arg4[%c2_96, %c0_97, %c0_98] : memref<9x32x32xbf16, #tpu.memory_space<vmem>>, vector<1x32x32xbf16>
    %130 = vector.shape_cast %129 : vector<1x32x32xbf16> to vector<32x32xbf16>
    %cst_99 = arith.constant dense<0.000000e+00> : vector<16x32xf32>
    %131 = tpu.matmul %120, %130, %cst_99 {dimension_numbers = #tpu.dot_dimension_numbers<[1], [0], [0], [1], [0, 0, 1, 1], [], []>} : vector<16x32xbf16>, vector<32x32xbf16>, vector<16x32xf32> -> vector<16x32xf32>
    %c32_100 = arith.constant 32 : index
    %c0_101 = arith.constant 0 : index
    %132 = vector.load %arg22[%c32_100, %c0_101] : memref<432x512xf32, #tpu.memory_space<vmem>>, vector<16x32xf32>
    tpu.vector_store %arg22[%c32_100, %c0_101], %131 {strides = array<i32>} : memref<432x512xf32, #tpu.memory_space<vmem>>, vector<16x32xf32>,
    %c3_102 = arith.constant 3 : index
    %c0_103 = arith.constant 0 : index
    %c0_104 = arith.constant 0 : index
    %133 = vector.load %arg4[%c3_102, %c0_103, %c0_104] : memref<9x32x32xbf16, #tpu.memory_space<vmem>>, vector<1x32x32xbf16>
    %134 = vector.shape_cast %133 : vector<1x32x32xbf16> to vector<32x32xbf16>
    %cst_105 = arith.constant dense<0.000000e+00> : vector<16x32xf32>
    %135 = tpu.matmul %120, %134, %cst_105 {dimension_numbers = #tpu.dot_dimension_numbers<[1], [0], [0], [1], [0, 0, 1, 1], [], []>} : vector<16x32xbf16>, vector<32x32xbf16>, vector<16x32xf32> -> vector<16x32xf32>
    %c48_106 = arith.constant 48 : index
    %c0_107 = arith.constant 0 : index
    %136 = vector.load %arg22[%c48_106, %c0_107] : memref<432x512xf32, #tpu.memory_space<vmem>>, vector<16x32xf32>
    tpu.vector_store %arg22[%c48_106, %c0_107], %135 {strides = array<i32>} : memref<432x512xf32, #tpu.memory_space<vmem>>, vector<16x32xf32>,
    %c4 = arith.constant 4 : index
    %c0_108 = arith.constant 0 : index
    %c0_109 = arith.constant 0 : index
    %137 = vector.load %arg4[%c4, %c0_108, %c0_109] : memref<9x32x32xbf16, #tpu.memory_space<vmem>>, vector<1x32x32xbf16>
    %138 = vector.shape_cast %137 : vector<1x32x32xbf16> to vector<32x32xbf16>
    %cst_110 = arith.constant dense<0.000000e+00> : vector<16x32xf32>
    %139 = tpu.matmul %120, %138, %cst_110 {dimension_numbers = #tpu.dot_dimension_numbers<[1], [0], [0], [1], [0, 0, 1, 1], [], []>} : vector<16x32xbf16>, vector<32x32xbf16>, vector<16x32xf32> -> vector<16x32xf32>
    %c64_111 = arith.constant 64 : index
    %c0_112 = arith.constant 0 : index
    %140 = vector.load %arg22[%c64_111, %c0_112] : memref<432x512xf32, #tpu.memory_space<vmem>>, vector<16x32xf32>
    tpu.vector_store %arg22[%c64_111, %c0_112], %139 {strides = array<i32>} : memref<432x512xf32, #tpu.memory_space<vmem>>, vector<16x32xf32>,
    %c5_113 = arith.constant 5 : index
    %c0_114 = arith.constant 0 : index
    %c0_115 = arith.constant 0 : index
    %141 = vector.load %arg4[%c5_113, %c0_114, %c0_115] : memref<9x32x32xbf16, #tpu.memory_space<vmem>>, vector<1x32x32xbf16>
    %142 = vector.shape_cast %141 : vector<1x32x32xbf16> to vector<32x32xbf16>
    %cst_116 = arith.constant dense<0.000000e+00> : vector<16x32xf32>
    %143 = tpu.matmul %120, %142, %cst_116 {dimension_numbers = #tpu.dot_dimension_numbers<[1], [0], [0], [1], [0, 0, 1, 1], [], []>} : vector<16x32xbf16>, vector<32x32xbf16>, vector<16x32xf32> -> vector<16x32xf32>
    %c80 = arith.constant 80 : index
    %c0_117 = arith.constant 0 : index
    %144 = vector.load %arg22[%c80, %c0_117] : memref<432x512xf32, #tpu.memory_space<vmem>>, vector<16x32xf32>
    tpu.vector_store %arg22[%c80, %c0_117], %143 {strides = array<i32>} : memref<432x512xf32, #tpu.memory_space<vmem>>, vector<16x32xf32>,
    %c6_118 = arith.constant 6 : index
    %c0_119 = arith.constant 0 : index
    %c0_120 = arith.constant 0 : index
    %145 = vector.load %arg4[%c6_118, %c0_119, %c0_120] : memref<9x32x32xbf16, #tpu.memory_space<vmem>>, vector<1x32x32xbf16>
    %146 = vector.shape_cast %145 : vector<1x32x32xbf16> to vector<32x32xbf16>
    %cst_121 = arith.constant dense<0.000000e+00> : vector<16x32xf32>
    %147 = tpu.matmul %120, %146, %cst_121 {dimension_numbers = #tpu.dot_dimension_numbers<[1], [0], [0], [1], [0, 0, 1, 1], [], []>} : vector<16x32xbf16>, vector<32x32xbf16>, vector<16x32xf32> -> vector<16x32xf32>
    %c96 = arith.constant 96 : index
    %c0_122 = arith.constant 0 : index
    %148 = vector.load %arg22[%c96, %c0_122] : memref<432x512xf32, #tpu.memory_space<vmem>>, vector<16x32xf32>
    tpu.vector_store %arg22[%c96, %c0_122], %147 {strides = array<i32>} : memref<432x512xf32, #tpu.memory_space<vmem>>, vector<16x32xf32>,
    %c7_123 = arith.constant 7 : index
    %c0_124 = arith.constant 0 : index
    %c0_125 = arith.constant 0 : index
    %149 = vector.load %arg4[%c7_123, %c0_124, %c0_125] : memref<9x32x32xbf16, #tpu.memory_space<vmem>>, vector<1x32x32xbf16>
    %150 = vector.shape_cast %149 : vector<1x32x32xbf16> to vector<32x32xbf16>
    %cst_126 = arith.constant dense<0.000000e+00> : vector<16x32xf32>
    %151 = tpu.matmul %120, %150, %cst_126 {dimension_numbers = #tpu.dot_dimension_numbers<[1], [0], [0], [1], [0, 0, 1, 1], [], []>} : vector<16x32xbf16>, vector<32x32xbf16>, vector<16x32xf32> -> vector<16x32xf32>
    %c112 = arith.constant 112 : index
    %c0_127 = arith.constant 0 : index
    %152 = vector.load %arg22[%c112, %c0_127] : memref<432x512xf32, #tpu.memory_space<vmem>>, vector<16x32xf32>
    tpu.vector_store %arg22[%c112, %c0_127], %151 {strides = array<i32>} : memref<432x512xf32, #tpu.memory_space<vmem>>, vector<16x32xf32>,
    %c8_128 = arith.constant 8 : index
    %c0_129 = arith.constant 0 : index
    %c0_130 = arith.constant 0 : index
    %153 = vector.load %arg4[%c8_128, %c0_129, %c0_130] : memref<9x32x32xbf16, #tpu.memory_space<vmem>>, vector<1x32x32xbf16>
    %154 = vector.shape_cast %153 : vector<1x32x32xbf16> to vector<32x32xbf16>
    %cst_131 = arith.constant dense<0.000000e+00> : vector<16x32xf32>
    %155 = tpu.matmul %120, %154, %cst_131 {dimension_numbers = #tpu.dot_dimension_numbers<[1], [0], [0], [1], [0, 0, 1, 1], [], []>} : vector<16x32xbf16>, vector<32x32xbf16>, vector<16x32xf32> -> vector<16x32xf32>
    %c128 = arith.constant 128 : index
    %c0_132 = arith.constant 0 : index
    %156 = vector.load %arg22[%c128, %c0_132] : memref<432x512xf32, #tpu.memory_space<vmem>>, vector<16x32xf32>
    tpu.vector_store %arg22[%c128, %c0_132], %155 {strides = array<i32>} : memref<432x512xf32, #tpu.memory_space<vmem>>, vector<16x32xf32>,
    %c0_133 = arith.constant 0 : index
    %c0_134 = arith.constant 0 : index
    %157 = vector.load %arg22[%c0_133, %c0_134] : memref<432x512xf32, #tpu.memory_space<vmem>>, vector<144x32xf32>
    %158 = arith.truncf %157 : vector<144x32xf32> to vector<144x32xbf16>
    %c0_135 = arith.constant 0 : index
    %c0_136 = arith.constant 0 : index
    %159 = vector.load %arg13[%c0_135, %c0_136] : memref<32x144xbf16, #tpu.memory_space<vmem>>, vector<32x144xbf16>
    %cst_137 = arith.constant dense<0.000000e+00> : vector<32x32xf32>
    %160 = tpu.matmul %159, %158, %cst_137 {dimension_numbers = #tpu.dot_dimension_numbers<[1], [0], [0], [1], [0, 0, 1, 1], [], []>} : vector<32x144xbf16>, vector<144x32xbf16>, vector<32x32xf32> -> vector<32x32xf32>
    %c0_138 = arith.constant 0 : index
    %c0_139 = arith.constant 0 : index
    %161 = vector.load %arg14[%c0_138, %c0_139] : memref<32x1xf32, #tpu.memory_space<vmem>>, vector<32x1xf32>
    %162 = vector.broadcast %161 : vector<32x1xf32> to vector<32x32xf32>
    %163 = arith.addf %160, %162 : vector<32x32xf32>
    %cst_140 = arith.constant 0.000000e+00 : f32
    %164 = vector.broadcast %cst_140 : f32 to vector<32x32xf32>
    %165 = arith.maximumf %163, %164 : vector<32x32xf32>
    %166 = arith.truncf %165 : vector<32x32xf32> to vector<32x32xbf16>
    %c0_141 = arith.constant 0 : index
    %c0_142 = arith.constant 0 : index
    %167 = vector.load %arg7[%c0_141, %c0_142] : memref<32x128xbf16, #tpu.memory_space<vmem>>, vector<32x128xbf16>
    %cst_143 = arith.constant dense<0.000000e+00> : vector<32x128xf32>
    %168 = tpu.matmul %166, %167, %cst_143 {dimension_numbers = #tpu.dot_dimension_numbers<[1], [0], [0], [1], [0, 0, 1, 1], [], []>} : vector<32x32xbf16>, vector<32x128xbf16>, vector<32x128xf32> -> vector<32x128xf32>
    %c0_144 = arith.constant 0 : index
    %c0_145 = arith.constant 0 : index
    %169 = vector.load %arg3[%c0_144, %c0_145] : memref<9x128xf32, #tpu.memory_space<vmem>>, vector<1x128xf32>
    %c9_i32_146 = arith.constant 9 : i32
    %170 = tpu.dynamic_rotate %168 by %c9_i32_146 dim 1 : vector<32x128xf32>, i32 -> vector<32x128xf32>
    %171 = vector.broadcast %169 : vector<1x128xf32> to vector<32x128xf32>
    %172 = arith.mulf %170, %171 : vector<32x128xf32>
    %c0_147 = arith.constant 0 : index
    %c0_148 = arith.constant 0 : index
    %173 = vector.load %arg22[%c0_147, %c0_148] : memref<432x512xf32, #tpu.memory_space<vmem>>, vector<32x128xf32>
    tpu.vector_store %arg22[%c0_147, %c0_148], %172 {strides = array<i32>} : memref<432x512xf32, #tpu.memory_space<vmem>>, vector<32x128xf32>,
    %c9_i32_149 = arith.constant 9 : i32
    %174 = tpu.dynamic_rotate %110 by %c9_i32_149 dim 1 : vector<16x128xf32>, i32 -> vector<16x128xf32>
    %175 = vector.broadcast %169 : vector<1x128xf32> to vector<16x128xf32>
    %176 = arith.mulf %174, %175 : vector<16x128xf32>
    %c32_150 = arith.constant 32 : index
    %c0_151 = arith.constant 0 : index
    %177 = vector.load %arg22[%c32_150, %c0_151] : memref<432x512xf32, #tpu.memory_space<vmem>>, vector<16x128xf32>
    tpu.vector_store %arg22[%c32_150, %c0_151], %176 {strides = array<i32>} : memref<432x512xf32, #tpu.memory_space<vmem>>, vector<16x128xf32>,
    %c1_152 = arith.constant 1 : index
    %c0_153 = arith.constant 0 : index
    %178 = vector.load %arg3[%c1_152, %c0_153] : memref<9x128xf32, #tpu.memory_space<vmem>>, vector<1x128xf32>
    %c8_i32_154 = arith.constant 8 : i32
    %179 = tpu.dynamic_rotate %168 by %c8_i32_154 dim 1 : vector<32x128xf32>, i32 -> vector<32x128xf32>
    %180 = vector.broadcast %178 : vector<1x128xf32> to vector<32x128xf32>
    %181 = arith.mulf %179, %180 : vector<32x128xf32>
    %c48_155 = arith.constant 48 : index
    %c0_156 = arith.constant 0 : index
    %182 = vector.load %arg22[%c48_155, %c0_156] : memref<432x512xf32, #tpu.memory_space<vmem>>, vector<32x128xf32>
    tpu.vector_store %arg22[%c48_155, %c0_156], %181 {strides = array<i32>} : memref<432x512xf32, #tpu.memory_space<vmem>>, vector<32x128xf32>,
    %c8_i32_157 = arith.constant 8 : i32
    %183 = tpu.dynamic_rotate %110 by %c8_i32_157 dim 1 : vector<16x128xf32>, i32 -> vector<16x128xf32>
    %184 = vector.broadcast %178 : vector<1x128xf32> to vector<16x128xf32>
    %185 = arith.mulf %183, %184 : vector<16x128xf32>
    %c80_158 = arith.constant 80 : index
    %c0_159 = arith.constant 0 : index
    %186 = vector.load %arg22[%c80_158, %c0_159] : memref<432x512xf32, #tpu.memory_space<vmem>>, vector<16x128xf32>
    tpu.vector_store %arg22[%c80_158, %c0_159], %185 {strides = array<i32>} : memref<432x512xf32, #tpu.memory_space<vmem>>, vector<16x128xf32>,
    %c2_160 = arith.constant 2 : index
    %c0_161 = arith.constant 0 : index
    %187 = vector.load %arg3[%c2_160, %c0_161] : memref<9x128xf32, #tpu.memory_space<vmem>>, vector<1x128xf32>
    %c7_i32_162 = arith.constant 7 : i32
    %188 = tpu.dynamic_rotate %168 by %c7_i32_162 dim 1 : vector<32x128xf32>, i32 -> vector<32x128xf32>
    %189 = vector.broadcast %187 : vector<1x128xf32> to vector<32x128xf32>
    %190 = arith.mulf %188, %189 : vector<32x128xf32>
    %c96_163 = arith.constant 96 : index
    %c0_164 = arith.constant 0 : index
    %191 = vector.load %arg22[%c96_163, %c0_164] : memref<432x512xf32, #tpu.memory_space<vmem>>, vector<32x128xf32>
    tpu.vector_store %arg22[%c96_163, %c0_164], %190 {strides = array<i32>} : memref<432x512xf32, #tpu.memory_space<vmem>>, vector<32x128xf32>,
    %c7_i32_165 = arith.constant 7 : i32
    %192 = tpu.dynamic_rotate %110 by %c7_i32_165 dim 1 : vector<16x128xf32>, i32 -> vector<16x128xf32>
    %193 = vector.broadcast %187 : vector<1x128xf32> to vector<16x128xf32>
    %194 = arith.mulf %192, %193 : vector<16x128xf32>
    %c128_166 = arith.constant 128 : index
    %c0_167 = arith.constant 0 : index
    %195 = vector.load %arg22[%c128_166, %c0_167] : memref<432x512xf32, #tpu.memory_space<vmem>>, vector<16x128xf32>
    tpu.vector_store %arg22[%c128_166, %c0_167], %194 {strides = array<i32>} : memref<432x512xf32, #tpu.memory_space<vmem>>, vector<16x128xf32>,
    %c3_168 = arith.constant 3 : index
    %c0_169 = arith.constant 0 : index
    %196 = vector.load %arg3[%c3_168, %c0_169] : memref<9x128xf32, #tpu.memory_space<vmem>>, vector<1x128xf32>
    %c1_i32_170 = arith.constant 1 : i32
    %197 = tpu.dynamic_rotate %168 by %c1_i32_170 dim 1 : vector<32x128xf32>, i32 -> vector<32x128xf32>
    %198 = vector.broadcast %196 : vector<1x128xf32> to vector<32x128xf32>
    %199 = arith.mulf %197, %198 : vector<32x128xf32>
    %c144 = arith.constant 144 : index
    %c0_171 = arith.constant 0 : index
    %200 = vector.load %arg22[%c144, %c0_171] : memref<432x512xf32, #tpu.memory_space<vmem>>, vector<32x128xf32>
    tpu.vector_store %arg22[%c144, %c0_171], %199 {strides = array<i32>} : memref<432x512xf32, #tpu.memory_space<vmem>>, vector<32x128xf32>,
    %c1_i32_172 = arith.constant 1 : i32
    %201 = tpu.dynamic_rotate %110 by %c1_i32_172 dim 1 : vector<16x128xf32>, i32 -> vector<16x128xf32>
    %202 = vector.broadcast %196 : vector<1x128xf32> to vector<16x128xf32>
    %203 = arith.mulf %201, %202 : vector<16x128xf32>
    %c176 = arith.constant 176 : index
    %c0_173 = arith.constant 0 : index
    %204 = vector.load %arg22[%c176, %c0_173] : memref<432x512xf32, #tpu.memory_space<vmem>>, vector<16x128xf32>
    tpu.vector_store %arg22[%c176, %c0_173], %203 {strides = array<i32>} : memref<432x512xf32, #tpu.memory_space<vmem>>, vector<16x128xf32>,
    %c192 = arith.constant 192 : index
    %c0_174 = arith.constant 0 : index
    %205 = vector.load %arg22[%c192, %c0_174] : memref<432x512xf32, #tpu.memory_space<vmem>>, vector<32x128xf32>
    tpu.vector_store %arg22[%c192, %c0_174], %168 {strides = array<i32>} : memref<432x512xf32, #tpu.memory_space<vmem>>, vector<32x128xf32>,
    %c224 = arith.constant 224 : index
    %c0_175 = arith.constant 0 : index
    %206 = vector.load %arg22[%c224, %c0_175] : memref<432x512xf32, #tpu.memory_space<vmem>>, vector<16x128xf32>
    tpu.vector_store %arg22[%c224, %c0_175], %110 {strides = array<i32>} : memref<432x512xf32, #tpu.memory_space<vmem>>, vector<16x128xf32>,
    %c5_176 = arith.constant 5 : index
    %c0_177 = arith.constant 0 : index
    %207 = vector.load %arg3[%c5_176, %c0_177] : memref<9x128xf32, #tpu.memory_space<vmem>>, vector<1x128xf32>
    %c127_i32_178 = arith.constant 127 : i32
    %208 = tpu.dynamic_rotate %168 by %c127_i32_178 dim 1 : vector<32x128xf32>, i32 -> vector<32x128xf32>
    %209 = vector.broadcast %207 : vector<1x128xf32> to vector<32x128xf32>
    %210 = arith.mulf %208, %209 : vector<32x128xf32>
    %c240 = arith.constant 240 : index
    %c0_179 = arith.constant 0 : index
    %211 = vector.load %arg22[%c240, %c0_179] : memref<432x512xf32, #tpu.memory_space<vmem>>, vector<32x128xf32>
    tpu.vector_store %arg22[%c240, %c0_179], %210 {strides = array<i32>} : memref<432x512xf32, #tpu.memory_space<vmem>>, vector<32x128xf32>,
    %c127_i32_180 = arith.constant 127 : i32
    %212 = tpu.dynamic_rotate %110 by %c127_i32_180 dim 1 : vector<16x128xf32>, i32 -> vector<16x128xf32>
    %213 = vector.broadcast %207 : vector<1x128xf32> to vector<16x128xf32>
    %214 = arith.mulf %212, %213 : vector<16x128xf32>
    %c272 = arith.constant 272 : index
    %c0_181 = arith.constant 0 : index
    %215 = vector.load %arg22[%c272, %c0_181] : memref<432x512xf32, #tpu.memory_space<vmem>>, vector<16x128xf32>
    tpu.vector_store %arg22[%c272, %c0_181], %214 {strides = array<i32>} : memref<432x512xf32, #tpu.memory_space<vmem>>, vector<16x128xf32>,
    %c6_182 = arith.constant 6 : index
    %c0_183 = arith.constant 0 : index
    %216 = vector.load %arg3[%c6_182, %c0_183] : memref<9x128xf32, #tpu.memory_space<vmem>>, vector<1x128xf32>
    %c121_i32_184 = arith.constant 121 : i32
    %217 = tpu.dynamic_rotate %168 by %c121_i32_184 dim 1 : vector<32x128xf32>, i32 -> vector<32x128xf32>
    %218 = vector.broadcast %216 : vector<1x128xf32> to vector<32x128xf32>
    %219 = arith.mulf %217, %218 : vector<32x128xf32>
    %c288 = arith.constant 288 : index
    %c0_185 = arith.constant 0 : index
    %220 = vector.load %arg22[%c288, %c0_185] : memref<432x512xf32, #tpu.memory_space<vmem>>, vector<32x128xf32>
    tpu.vector_store %arg22[%c288, %c0_185], %219 {strides = array<i32>} : memref<432x512xf32, #tpu.memory_space<vmem>>, vector<32x128xf32>,
    %c121_i32_186 = arith.constant 121 : i32
    %221 = tpu.dynamic_rotate %110 by %c121_i32_186 dim 1 : vector<16x128xf32>, i32 -> vector<16x128xf32>
    %222 = vector.broadcast %216 : vector<1x128xf32> to vector<16x128xf32>
    %223 = arith.mulf %221, %222 : vector<16x128xf32>
    %c320 = arith.constant 320 : index
    %c0_187 = arith.constant 0 : index
    %224 = vector.load %arg22[%c320, %c0_187] : memref<432x512xf32, #tpu.memory_space<vmem>>, vector<16x128xf32>
    tpu.vector_store %arg22[%c320, %c0_187], %223 {strides = array<i32>} : memref<432x512xf32, #tpu.memory_space<vmem>>, vector<16x128xf32>,
    %c7_188 = arith.constant 7 : index
    %c0_189 = arith.constant 0 : index
    %225 = vector.load %arg3[%c7_188, %c0_189] : memref<9x128xf32, #tpu.memory_space<vmem>>, vector<1x128xf32>
    %c120_i32_190 = arith.constant 120 : i32
    %226 = tpu.dynamic_rotate %168 by %c120_i32_190 dim 1 : vector<32x128xf32>, i32 -> vector<32x128xf32>
    %227 = vector.broadcast %225 : vector<1x128xf32> to vector<32x128xf32>
    %228 = arith.mulf %226, %227 : vector<32x128xf32>
    %c336 = arith.constant 336 : index
    %c0_191 = arith.constant 0 : index
    %229 = vector.load %arg22[%c336, %c0_191] : memref<432x512xf32, #tpu.memory_space<vmem>>, vector<32x128xf32>
    tpu.vector_store %arg22[%c336, %c0_191], %228 {strides = array<i32>} : memref<432x512xf32, #tpu.memory_space<vmem>>, vector<32x128xf32>,
    %c120_i32_192 = arith.constant 120 : i32
    %230 = tpu.dynamic_rotate %110 by %c120_i32_192 dim 1 : vector<16x128xf32>, i32 -> vector<16x128xf32>
    %231 = vector.broadcast %225 : vector<1x128xf32> to vector<16x128xf32>
    %232 = arith.mulf %230, %231 : vector<16x128xf32>
    %c368 = arith.constant 368 : index
    %c0_193 = arith.constant 0 : index
    %233 = vector.load %arg22[%c368, %c0_193] : memref<432x512xf32, #tpu.memory_space<vmem>>, vector<16x128xf32>
    tpu.vector_store %arg22[%c368, %c0_193], %232 {strides = array<i32>} : memref<432x512xf32, #tpu.memory_space<vmem>>, vector<16x128xf32>,
    %c8_194 = arith.constant 8 : index
    %c0_195 = arith.constant 0 : index
    %234 = vector.load %arg3[%c8_194, %c0_195] : memref<9x128xf32, #tpu.memory_space<vmem>>, vector<1x128xf32>
    %c119_i32_196 = arith.constant 119 : i32
    %235 = tpu.dynamic_rotate %168 by %c119_i32_196 dim 1 : vector<32x128xf32>, i32 -> vector<32x128xf32>
    %236 = vector.broadcast %234 : vector<1x128xf32> to vector<32x128xf32>
    %237 = arith.mulf %235, %236 : vector<32x128xf32>
    %c384 = arith.constant 384 : index
    %c0_197 = arith.constant 0 : index
    %238 = vector.load %arg22[%c384, %c0_197] : memref<432x512xf32, #tpu.memory_space<vmem>>, vector<32x128xf32>
    tpu.vector_store %arg22[%c384, %c0_197], %237 {strides = array<i32>} : memref<432x512xf32, #tpu.memory_space<vmem>>, vector<32x128xf32>,
    %c119_i32_198 = arith.constant 119 : i32
    %239 = tpu.dynamic_rotate %110 by %c119_i32_198 dim 1 : vector<16x128xf32>, i32 -> vector<16x128xf32>
    %240 = vector.broadcast %234 : vector<1x128xf32> to vector<16x128xf32>
    %241 = arith.mulf %239, %240 : vector<16x128xf32>
    %c416 = arith.constant 416 : index
    %c0_199 = arith.constant 0 : index
    %242 = vector.load %arg22[%c416, %c0_199] : memref<432x512xf32, #tpu.memory_space<vmem>>, vector<16x128xf32>
    tpu.vector_store %arg22[%c416, %c0_199], %241 {strides = array<i32>} : memref<432x512xf32, #tpu.memory_space<vmem>>, vector<16x128xf32>,
    %c0_200 = arith.constant 0 : index
    %c0_201 = arith.constant 0 : index
    %243 = vector.load %arg22[%c0_200, %c0_201] : memref<432x512xf32, #tpu.memory_space<vmem>>, vector<432x128xf32>
    %244 = arith.truncf %243 : vector<432x128xf32> to vector<432x128xbf16>
    %c0_202 = arith.constant 0 : index
    %c0_203 = arith.constant 0 : index
    %245 = vector.load %arg15[%c0_202, %c0_203] : memref<16x432xbf16, #tpu.memory_space<vmem>>, vector<16x432xbf16>
    %cst_204 = arith.constant dense<0.000000e+00> : vector<16x128xf32>
    %246 = tpu.matmul %245, %244, %cst_204 {dimension_numbers = #tpu.dot_dimension_numbers<[1], [0], [0], [1], [0, 0, 1, 1], [], []>} : vector<16x432xbf16>, vector<432x128xbf16>, vector<16x128xf32> -> vector<16x128xf32>
    %c0_205 = arith.constant 0 : index
    %c0_206 = arith.constant 0 : index
    %247 = vector.load %arg16[%c0_205, %c0_206] : memref<16x1xf32, #tpu.memory_space<vmem>>, vector<16x1xf32>
    %248 = vector.broadcast %247 : vector<16x1xf32> to vector<16x128xf32>
    %249 = arith.addf %246, %248 : vector<16x128xf32>
    %cst_207 = arith.constant 0.000000e+00 : f32
    %250 = vector.broadcast %cst_207 : f32 to vector<16x128xf32>
    %251 = arith.maximumf %249, %250 : vector<16x128xf32>
    %252 = arith.truncf %251 : vector<16x128xf32> to vector<16x128xbf16>
    %c0_208 = arith.constant 0 : index
    %c0_209 = arith.constant 0 : index
    %253 = vector.load %arg8[%c0_208, %c0_209] : memref<128x512xbf16, #tpu.memory_space<vmem>>, vector<128x512xbf16>
    %cst_210 = arith.constant dense<0.000000e+00> : vector<16x512xf32>
    %254 = tpu.matmul %252, %253, %cst_210 {dimension_numbers = #tpu.dot_dimension_numbers<[1], [0], [0], [1], [0, 0, 1, 1], [], []>} : vector<16x128xbf16>, vector<128x512xbf16>, vector<16x512xf32> -> vector<16x512xf32>
    %c0_211 = arith.constant 0 : index
    %c0_212 = arith.constant 0 : index
    %255 = vector.load %arg2[%c0_211, %c0_212] : memref<9x512xf32, #tpu.memory_space<vmem>>, vector<1x512xf32>
    %c17_i32_213 = arith.constant 17 : i32
    %256 = tpu.dynamic_rotate %254 by %c17_i32_213 dim 1 : vector<16x512xf32>, i32 -> vector<16x512xf32>
    %257 = vector.broadcast %255 : vector<1x512xf32> to vector<16x512xf32>
    %258 = arith.mulf %256, %257 : vector<16x512xf32>
    %c0_214 = arith.constant 0 : index
    %c0_215 = arith.constant 0 : index
    %259 = vector.load %arg22[%c0_214, %c0_215] : memref<432x512xf32, #tpu.memory_space<vmem>>, vector<16x512xf32>
    tpu.vector_store %arg22[%c0_214, %c0_215], %258 {strides = array<i32>} : memref<432x512xf32, #tpu.memory_space<vmem>>, vector<16x512xf32>,
    %c17_i32_216 = arith.constant 17 : i32
    %260 = tpu.dynamic_rotate %51 by %c17_i32_216 dim 1 : vector<8x512xf32>, i32 -> vector<8x512xf32>
    %261 = vector.broadcast %255 : vector<1x512xf32> to vector<8x512xf32>
    %262 = arith.mulf %260, %261 : vector<8x512xf32>
    %c16_217 = arith.constant 16 : index
    %c0_218 = arith.constant 0 : index
    %263 = vector.load %arg22[%c16_217, %c0_218] : memref<432x512xf32, #tpu.memory_space<vmem>>, vector<8x512xf32>
    tpu.vector_store %arg22[%c16_217, %c0_218], %262 {strides = array<i32>} : memref<432x512xf32, #tpu.memory_space<vmem>>, vector<8x512xf32>,
    %c1_219 = arith.constant 1 : index
    %c0_220 = arith.constant 0 : index
    %264 = vector.load %arg2[%c1_219, %c0_220] : memref<9x512xf32, #tpu.memory_space<vmem>>, vector<1x512xf32>
    %c16_i32_221 = arith.constant 16 : i32
    %265 = tpu.dynamic_rotate %254 by %c16_i32_221 dim 1 : vector<16x512xf32>, i32 -> vector<16x512xf32>
    %266 = vector.broadcast %264 : vector<1x512xf32> to vector<16x512xf32>
    %267 = arith.mulf %265, %266 : vector<16x512xf32>
    %c24_222 = arith.constant 24 : index
    %c0_223 = arith.constant 0 : index
    %268 = vector.load %arg22[%c24_222, %c0_223] : memref<432x512xf32, #tpu.memory_space<vmem>>, vector<16x512xf32>
    tpu.vector_store %arg22[%c24_222, %c0_223], %267 {strides = array<i32>} : memref<432x512xf32, #tpu.memory_space<vmem>>, vector<16x512xf32>,
    %c16_i32_224 = arith.constant 16 : i32
    %269 = tpu.dynamic_rotate %51 by %c16_i32_224 dim 1 : vector<8x512xf32>, i32 -> vector<8x512xf32>
    %270 = vector.broadcast %264 : vector<1x512xf32> to vector<8x512xf32>
    %271 = arith.mulf %269, %270 : vector<8x512xf32>
    %c40_225 = arith.constant 40 : index
    %c0_226 = arith.constant 0 : index
    %272 = vector.load %arg22[%c40_225, %c0_226] : memref<432x512xf32, #tpu.memory_space<vmem>>, vector<8x512xf32>
    tpu.vector_store %arg22[%c40_225, %c0_226], %271 {strides = array<i32>} : memref<432x512xf32, #tpu.memory_space<vmem>>, vector<8x512xf32>,
    %c2_227 = arith.constant 2 : index
    %c0_228 = arith.constant 0 : index
    %273 = vector.load %arg2[%c2_227, %c0_228] : memref<9x512xf32, #tpu.memory_space<vmem>>, vector<1x512xf32>
    %c15_i32_229 = arith.constant 15 : i32
    %274 = tpu.dynamic_rotate %254 by %c15_i32_229 dim 1 : vector<16x512xf32>, i32 -> vector<16x512xf32>
    %275 = vector.broadcast %273 : vector<1x512xf32> to vector<16x512xf32>
    %276 = arith.mulf %274, %275 : vector<16x512xf32>
    %c48_230 = arith.constant 48 : index
    %c0_231 = arith.constant 0 : index
    %277 = vector.load %arg22[%c48_230, %c0_231] : memref<432x512xf32, #tpu.memory_space<vmem>>, vector<16x512xf32>
    tpu.vector_store %arg22[%c48_230, %c0_231], %276 {strides = array<i32>} : memref<432x512xf32, #tpu.memory_space<vmem>>, vector<16x512xf32>,
    %c15_i32_232 = arith.constant 15 : i32
    %278 = tpu.dynamic_rotate %51 by %c15_i32_232 dim 1 : vector<8x512xf32>, i32 -> vector<8x512xf32>
    %279 = vector.broadcast %273 : vector<1x512xf32> to vector<8x512xf32>
    %280 = arith.mulf %278, %279 : vector<8x512xf32>
    %c64_233 = arith.constant 64 : index
    %c0_234 = arith.constant 0 : index
    %281 = vector.load %arg22[%c64_233, %c0_234] : memref<432x512xf32, #tpu.memory_space<vmem>>, vector<8x512xf32>
    tpu.vector_store %arg22[%c64_233, %c0_234], %280 {strides = array<i32>} : memref<432x512xf32, #tpu.memory_space<vmem>>, vector<8x512xf32>,
    %c3_235 = arith.constant 3 : index
    %c0_236 = arith.constant 0 : index
    %282 = vector.load %arg2[%c3_235, %c0_236] : memref<9x512xf32, #tpu.memory_space<vmem>>, vector<1x512xf32>
    %c1_i32_237 = arith.constant 1 : i32
    %283 = tpu.dynamic_rotate %254 by %c1_i32_237 dim 1 : vector<16x512xf32>, i32 -> vector<16x512xf32>
    %284 = vector.broadcast %282 : vector<1x512xf32> to vector<16x512xf32>
    %285 = arith.mulf %283, %284 : vector<16x512xf32>
    %c72 = arith.constant 72 : index
    %c0_238 = arith.constant 0 : index
    %286 = vector.load %arg22[%c72, %c0_238] : memref<432x512xf32, #tpu.memory_space<vmem>>, vector<16x512xf32>
    tpu.vector_store %arg22[%c72, %c0_238], %285 {strides = array<i32>} : memref<432x512xf32, #tpu.memory_space<vmem>>, vector<16x512xf32>,
    %c1_i32_239 = arith.constant 1 : i32
    %287 = tpu.dynamic_rotate %51 by %c1_i32_239 dim 1 : vector<8x512xf32>, i32 -> vector<8x512xf32>
    %288 = vector.broadcast %282 : vector<1x512xf32> to vector<8x512xf32>
    %289 = arith.mulf %287, %288 : vector<8x512xf32>
    %c88 = arith.constant 88 : index
    %c0_240 = arith.constant 0 : index
    %290 = vector.load %arg22[%c88, %c0_240] : memref<432x512xf32, #tpu.memory_space<vmem>>, vector<8x512xf32>
    tpu.vector_store %arg22[%c88, %c0_240], %289 {strides = array<i32>} : memref<432x512xf32, #tpu.memory_space<vmem>>, vector<8x512xf32>,
    %c96_241 = arith.constant 96 : index
    %c0_242 = arith.constant 0 : index
    %291 = vector.load %arg22[%c96_241, %c0_242] : memref<432x512xf32, #tpu.memory_space<vmem>>, vector<16x512xf32>
    tpu.vector_store %arg22[%c96_241, %c0_242], %254 {strides = array<i32>} : memref<432x512xf32, #tpu.memory_space<vmem>>, vector<16x512xf32>,
    %c112_243 = arith.constant 112 : index
    %c0_244 = arith.constant 0 : index
    %292 = vector.load %arg22[%c112_243, %c0_244] : memref<432x512xf32, #tpu.memory_space<vmem>>, vector<8x512xf32>
    tpu.vector_store %arg22[%c112_243, %c0_244], %51 {strides = array<i32>} : memref<432x512xf32, #tpu.memory_space<vmem>>, vector<8x512xf32>,
    %c5_245 = arith.constant 5 : index
    %c0_246 = arith.constant 0 : index
    %293 = vector.load %arg2[%c5_245, %c0_246] : memref<9x512xf32, #tpu.memory_space<vmem>>, vector<1x512xf32>
    %c511_i32_247 = arith.constant 511 : i32
    %294 = tpu.dynamic_rotate %254 by %c511_i32_247 dim 1 : vector<16x512xf32>, i32 -> vector<16x512xf32>
    %295 = vector.broadcast %293 : vector<1x512xf32> to vector<16x512xf32>
    %296 = arith.mulf %294, %295 : vector<16x512xf32>
    %c120 = arith.constant 120 : index
    %c0_248 = arith.constant 0 : index
    %297 = vector.load %arg22[%c120, %c0_248] : memref<432x512xf32, #tpu.memory_space<vmem>>, vector<16x512xf32>
    tpu.vector_store %arg22[%c120, %c0_248], %296 {strides = array<i32>} : memref<432x512xf32, #tpu.memory_space<vmem>>, vector<16x512xf32>,
    %c511_i32_249 = arith.constant 511 : i32
    %298 = tpu.dynamic_rotate %51 by %c511_i32_249 dim 1 : vector<8x512xf32>, i32 -> vector<8x512xf32>
    %299 = vector.broadcast %293 : vector<1x512xf32> to vector<8x512xf32>
    %300 = arith.mulf %298, %299 : vector<8x512xf32>
    %c136 = arith.constant 136 : index
    %c0_250 = arith.constant 0 : index
    %301 = vector.load %arg22[%c136, %c0_250] : memref<432x512xf32, #tpu.memory_space<vmem>>, vector<8x512xf32>
    tpu.vector_store %arg22[%c136, %c0_250], %300 {strides = array<i32>} : memref<432x512xf32, #tpu.memory_space<vmem>>, vector<8x512xf32>,
    %c6_251 = arith.constant 6 : index
    %c0_252 = arith.constant 0 : index
    %302 = vector.load %arg2[%c6_251, %c0_252] : memref<9x512xf32, #tpu.memory_space<vmem>>, vector<1x512xf32>
    %c497_i32_253 = arith.constant 497 : i32
    %303 = tpu.dynamic_rotate %254 by %c497_i32_253 dim 1 : vector<16x512xf32>, i32 -> vector<16x512xf32>
    %304 = vector.broadcast %302 : vector<1x512xf32> to vector<16x512xf32>
    %305 = arith.mulf %303, %304 : vector<16x512xf32>
    %c144_254 = arith.constant 144 : index
    %c0_255 = arith.constant 0 : index
    %306 = vector.load %arg22[%c144_254, %c0_255] : memref<432x512xf32, #tpu.memory_space<vmem>>, vector<16x512xf32>
    tpu.vector_store %arg22[%c144_254, %c0_255], %305 {strides = array<i32>} : memref<432x512xf32, #tpu.memory_space<vmem>>, vector<16x512xf32>,
    %c497_i32_256 = arith.constant 497 : i32
    %307 = tpu.dynamic_rotate %51 by %c497_i32_256 dim 1 : vector<8x512xf32>, i32 -> vector<8x512xf32>
    %308 = vector.broadcast %302 : vector<1x512xf32> to vector<8x512xf32>
    %309 = arith.mulf %307, %308 : vector<8x512xf32>
    %c160 = arith.constant 160 : index
    %c0_257 = arith.constant 0 : index
    %310 = vector.load %arg22[%c160, %c0_257] : memref<432x512xf32, #tpu.memory_space<vmem>>, vector<8x512xf32>
    tpu.vector_store %arg22[%c160, %c0_257], %309 {strides = array<i32>} : memref<432x512xf32, #tpu.memory_space<vmem>>, vector<8x512xf32>,
    %c7_258 = arith.constant 7 : index
    %c0_259 = arith.constant 0 : index
    %311 = vector.load %arg2[%c7_258, %c0_259] : memref<9x512xf32, #tpu.memory_space<vmem>>, vector<1x512xf32>
    %c496_i32_260 = arith.constant 496 : i32
    %312 = tpu.dynamic_rotate %254 by %c496_i32_260 dim 1 : vector<16x512xf32>, i32 -> vector<16x512xf32>
    %313 = vector.broadcast %311 : vector<1x512xf32> to vector<16x512xf32>
    %314 = arith.mulf %312, %313 : vector<16x512xf32>
    %c168 = arith.constant 168 : index
    %c0_261 = arith.constant 0 : index
    %315 = vector.load %arg22[%c168, %c0_261] : memref<432x512xf32, #tpu.memory_space<vmem>>, vector<16x512xf32>
    tpu.vector_store %arg22[%c168, %c0_261], %314 {strides = array<i32>} : memref<432x512xf32, #tpu.memory_space<vmem>>, vector<16x512xf32>,
    %c496_i32_262 = arith.constant 496 : i32
    %316 = tpu.dynamic_rotate %51 by %c496_i32_262 dim 1 : vector<8x512xf32>, i32 -> vector<8x512xf32>
    %317 = vector.broadcast %311 : vector<1x512xf32> to vector<8x512xf32>
    %318 = arith.mulf %316, %317 : vector<8x512xf32>
    %c184 = arith.constant 184 : index
    %c0_263 = arith.constant 0 : index
    %319 = vector.load %arg22[%c184, %c0_263] : memref<432x512xf32, #tpu.memory_space<vmem>>, vector<8x512xf32>
    tpu.vector_store %arg22[%c184, %c0_263], %318 {strides = array<i32>} : memref<432x512xf32, #tpu.memory_space<vmem>>, vector<8x512xf32>,
    %c8_264 = arith.constant 8 : index
    %c0_265 = arith.constant 0 : index
    %320 = vector.load %arg2[%c8_264, %c0_265] : memref<9x512xf32, #tpu.memory_space<vmem>>, vector<1x512xf32>
    %c495_i32_266 = arith.constant 495 : i32
    %321 = tpu.dynamic_rotate %254 by %c495_i32_266 dim 1 : vector<16x512xf32>, i32 -> vector<16x512xf32>
    %322 = vector.broadcast %320 : vector<1x512xf32> to vector<16x512xf32>
    %323 = arith.mulf %321, %322 : vector<16x512xf32>
    %c192_267 = arith.constant 192 : index
    %c0_268 = arith.constant 0 : index
    %324 = vector.load %arg22[%c192_267, %c0_268] : memref<432x512xf32, #tpu.memory_space<vmem>>, vector<16x512xf32>
    tpu.vector_store %arg22[%c192_267, %c0_268], %323 {strides = array<i32>} : memref<432x512xf32, #tpu.memory_space<vmem>>, vector<16x512xf32>,
    %c495_i32_269 = arith.constant 495 : i32
    %325 = tpu.dynamic_rotate %51 by %c495_i32_269 dim 1 : vector<8x512xf32>, i32 -> vector<8x512xf32>
    %326 = vector.broadcast %320 : vector<1x512xf32> to vector<8x512xf32>
    %327 = arith.mulf %325, %326 : vector<8x512xf32>
    %c208 = arith.constant 208 : index
    %c0_270 = arith.constant 0 : index
    %328 = vector.load %arg22[%c208, %c0_270] : memref<432x512xf32, #tpu.memory_space<vmem>>, vector<8x512xf32>
    tpu.vector_store %arg22[%c208, %c0_270], %327 {strides = array<i32>} : memref<432x512xf32, #tpu.memory_space<vmem>>, vector<8x512xf32>,
    %c0_271 = arith.constant 0 : index
    %c0_272 = arith.constant 0 : index
    %329 = vector.load %arg22[%c0_271, %c0_272] : memref<432x512xf32, #tpu.memory_space<vmem>>, vector<216x512xf32>
    %330 = arith.truncf %329 : vector<216x512xf32> to vector<216x512xbf16>
    %c0_273 = arith.constant 0 : index
    %c0_274 = arith.constant 0 : index
    %331 = vector.load %arg17[%c0_273, %c0_274] : memref<8x216xbf16, #tpu.memory_space<vmem>>, vector<8x216xbf16>
    %cst_275 = arith.constant dense<0.000000e+00> : vector<8x512xf32>
    %332 = tpu.matmul %331, %330, %cst_275 {dimension_numbers = #tpu.dot_dimension_numbers<[1], [0], [0], [1], [0, 0, 1, 1], [], []>} : vector<8x216xbf16>, vector<216x512xbf16>, vector<8x512xf32> -> vector<8x512xf32>
    %c0_276 = arith.constant 0 : index
    %c0_277 = arith.constant 0 : index
    %333 = vector.load %arg18[%c0_276, %c0_277] : memref<8x1xf32, #tpu.memory_space<vmem>>, vector<8x1xf32>
    %334 = vector.broadcast %333 : vector<8x1xf32> to vector<8x512xf32>
    %335 = arith.addf %332, %334 : vector<8x512xf32>
    %cst_278 = arith.constant 0.000000e+00 : f32
    %336 = vector.broadcast %cst_278 : f32 to vector<8x512xf32>
    %337 = arith.maximumf %335, %336 : vector<8x512xf32>
    %c0_279 = arith.constant 0 : index
    %c0_280 = arith.constant 0 : index
    %338 = vector.load %arg19[%c0_279, %c0_280] : memref<3x8xbf16, #tpu.memory_space<vmem>>, vector<3x8xbf16>
    %339 = arith.truncf %337 : vector<8x512xf32> to vector<8x512xbf16>
    %cst_281 = arith.constant dense<0.000000e+00> : vector<3x512xf32>
    %340 = tpu.matmul %338, %339, %cst_281 {dimension_numbers = #tpu.dot_dimension_numbers<[1], [0], [0], [1], [0, 0, 1, 1], [], []>} : vector<3x8xbf16>, vector<8x512xbf16>, vector<3x512xf32> -> vector<3x512xf32>
    %c0_282 = arith.constant 0 : index
    %c0_283 = arith.constant 0 : index
    %341 = vector.load %arg20[%c0_282, %c0_283] : memref<3x1xf32, #tpu.memory_space<vmem>>, vector<3x1xf32>
    %342 = vector.broadcast %341 : vector<3x1xf32> to vector<3x512xf32>
    %343 = arith.addf %340, %342 : vector<3x512xf32>
    %344 = vector.extract_strided_slice %343 {offsets = [0, 0], sizes = [3, 256], strides = [1, 1]} : vector<3x512xf32> to vector<3x256xf32>
    %c0_284 = arith.constant 0 : index
    %c0_285 = arith.constant 0 : index
    %c0_286 = arith.constant 0 : index
    %345 = vector.load %arg21[%c0_284, %c0_285, %c0_286] : memref<2x3x256xf32, #tpu.memory_space<vmem>>, vector<1x3x256xf32>
    %346 = vector.shape_cast %345 : vector<1x3x256xf32> to vector<3x256xf32>
    %347 = vector.shape_cast %344 : vector<3x256xf32> to vector<1x3x256xf32>
    tpu.vector_store %arg21[%c0_284, %c0_285, %c0_286], %347 {strides = array<i32>} : memref<2x3x256xf32, #tpu.memory_space<vmem>>, vector<1x3x256xf32>,
    %348 = vector.extract_strided_slice %343 {offsets = [0, 256], sizes = [3, 256], strides = [1, 1]} : vector<3x512xf32> to vector<3x256xf32>
    %c1_287 = arith.constant 1 : index
    %c0_288 = arith.constant 0 : index
    %c0_289 = arith.constant 0 : index
    %349 = vector.load %arg21[%c1_287, %c0_288, %c0_289] : memref<2x3x256xf32, #tpu.memory_space<vmem>>, vector<1x3x256xf32>
    %350 = vector.shape_cast %349 : vector<1x3x256xf32> to vector<3x256xf32>
    %351 = vector.shape_cast %348 : vector<3x256xf32> to vector<1x3x256xf32>
    tpu.vector_store %arg21[%c1_287, %c0_288, %c0_289], %351 {strides = array<i32>} : memref<2x3x256xf32, #tpu.memory_space<vmem>>, vector<1x3x256xf32>,
    return
  }
  func.func @transform_0(%arg0: i32) -> (i32, i32, i32) {
    %c0_i32 = arith.constant 0 : i32
    %c0_i32_0 = arith.constant 0 : i32
    %c0_i32_1 = arith.constant 0 : i32
    return %arg0, %c0_i32, %c0_i32_0 : i32, i32, i32
  }
  func.func @transform_1(%arg0: i32) -> (i32, i32) {
    %c0_i32 = arith.constant 0 : i32
    %c0_i32_0 = arith.constant 0 : i32
    %c0_i32_1 = arith.constant 0 : i32
    return %c0_i32, %c0_i32_0 : i32, i32
  }
  func.func @transform_2(%arg0: i32) -> (i32, i32) {
    %c0_i32 = arith.constant 0 : i32
    %c0_i32_0 = arith.constant 0 : i32
    %c0_i32_1 = arith.constant 0 : i32
    return %c0_i32, %c0_i32_0 : i32, i32
  }
  func.func @transform_3(%arg0: i32) -> (i32, i32, i32) {
    %c0_i32 = arith.constant 0 : i32
    %c0_i32_0 = arith.constant 0 : i32
    %c0_i32_1 = arith.constant 0 : i32
    %c0_i32_2 = arith.constant 0 : i32
    return %c0_i32, %c0_i32_0, %c0_i32_1 : i32, i32, i32
  }
  func.func @transform_4(%arg0: i32) -> (i32, i32) {
    %c0_i32 = arith.constant 0 : i32
    %c0_i32_0 = arith.constant 0 : i32
    %c0_i32_1 = arith.constant 0 : i32
    return %c0_i32, %c0_i32_0 : i32, i32
  }
  func.func @transform_5(%arg0: i32) -> (i32, i32) {
    %c0_i32 = arith.constant 0 : i32
    %c0_i32_0 = arith.constant 0 : i32
    %c0_i32_1 = arith.constant 0 : i32
    return %c0_i32, %c0_i32_0 : i32, i32
  }
  func.func @transform_6(%arg0: i32) -> (i32, i32) {
    %c0_i32 = arith.constant 0 : i32
    %c0_i32_0 = arith.constant 0 : i32
    %c0_i32_1 = arith.constant 0 : i32
    return %c0_i32, %c0_i32_0 : i32, i32
  }
  func.func @transform_7(%arg0: i32) -> (i32, i32) {
    %c0_i32 = arith.constant 0 : i32
    %c0_i32_0 = arith.constant 0 : i32
    %c0_i32_1 = arith.constant 0 : i32
    return %c0_i32, %c0_i32_0 : i32, i32
  }
  func.func @transform_8(%arg0: i32) -> (i32, i32) {
    %c0_i32 = arith.constant 0 : i32
    %c0_i32_0 = arith.constant 0 : i32
    %c0_i32_1 = arith.constant 0 : i32
    return %c0_i32, %c0_i32_0 : i32, i32
  }
  func.func @transform_9(%arg0: i32) -> (i32, i32) {
    %c0_i32 = arith.constant 0 : i32
    %c0_i32_0 = arith.constant 0 : i32
    %c0_i32_1 = arith.constant 0 : i32
    return %c0_i32, %c0_i32_0 : i32, i32
  }
  func.func @transform_10(%arg0: i32) -> (i32, i32) {
    %c0_i32 = arith.constant 0 : i32
    %c0_i32_0 = arith.constant 0 : i32
    %c0_i32_1 = arith.constant 0 : i32
    return %c0_i32, %c0_i32_0 : i32, i32
  }
  func.func @transform_11(%arg0: i32) -> (i32, i32) {
    %c0_i32 = arith.constant 0 : i32
    %c0_i32_0 = arith.constant 0 : i32
    %c0_i32_1 = arith.constant 0 : i32
    return %c0_i32, %c0_i32_0 : i32, i32
  }
  func.func @transform_12(%arg0: i32) -> (i32, i32) {
    %c0_i32 = arith.constant 0 : i32
    %c0_i32_0 = arith.constant 0 : i32
    %c0_i32_1 = arith.constant 0 : i32
    return %c0_i32, %c0_i32_0 : i32, i32
  }
  func.func @transform_13(%arg0: i32) -> (i32, i32) {
    %c0_i32 = arith.constant 0 : i32
    %c0_i32_0 = arith.constant 0 : i32
    %c0_i32_1 = arith.constant 0 : i32
    return %c0_i32, %c0_i32_0 : i32, i32
  }
  func.func @transform_14(%arg0: i32) -> (i32, i32) {
    %c0_i32 = arith.constant 0 : i32
    %c0_i32_0 = arith.constant 0 : i32
    %c0_i32_1 = arith.constant 0 : i32
    return %c0_i32, %c0_i32_0 : i32, i32
  }
  func.func @transform_15(%arg0: i32) -> (i32, i32) {
    %c0_i32 = arith.constant 0 : i32
    %c0_i32_0 = arith.constant 0 : i32
    %c0_i32_1 = arith.constant 0 : i32
    return %c0_i32, %c0_i32_0 : i32, i32
  }
  func.func @transform_16(%arg0: i32) -> (i32, i32) {
    %c0_i32 = arith.constant 0 : i32
    %c0_i32_0 = arith.constant 0 : i32
    %c0_i32_1 = arith.constant 0 : i32
    return %c0_i32, %c0_i32_0 : i32, i32
  }
  func.func @transform_17(%arg0: i32) -> (i32, i32) {
    %c0_i32 = arith.constant 0 : i32
    %c0_i32_0 = arith.constant 0 : i32
    %c0_i32_1 = arith.constant 0 : i32
    return %c0_i32, %c0_i32_0 : i32, i32
  }
  func.func @transform_18(%arg0: i32) -> (i32, i32) {
    %c0_i32 = arith.constant 0 : i32
    %c0_i32_0 = arith.constant 0 : i32
    %c0_i32_1 = arith.constant 0 : i32
    return %c0_i32, %c0_i32_0 : i32, i32
  }
  func.func @transform_19(%arg0: i32) -> (i32, i32) {
    %c0_i32 = arith.constant 0 : i32
    %c0_i32_0 = arith.constant 0 : i32
    %c0_i32_1 = arith.constant 0 : i32
    return %c0_i32, %c0_i32_0 : i32, i32
  }
  func.func @transform_20(%arg0: i32) -> (i32, i32, i32) {
    %c0_i32 = arith.constant 0 : i32
    %c0_i32_0 = arith.constant 0 : i32
    %c0_i32_1 = arith.constant 0 : i32
    return %arg0, %c0_i32, %c0_i32_0 : i32, i32, i32
  }
}

</mosaic_0001>

<llo_original>
// kernel: tpu_custom_call.1
$region0: #{tpu_custom_call.1}
  #allocation0 [shape = 'u32[]', space=smem, size = 0x4, offset = 0x4, fixed_abs, tag = 'smem constant byte address 0x4 - core index']
  #allocation1 [shape = 'u32[72,128]{1,0:T(1,128)}', space=vmem, size = 0x9000, scoped, tag = 'internal scratch']
  #allocation2 [shape = 'f32[432,512]{1,0:T(8,128)}', space=vmem, size = 0xd8000, scoped, tag = 'scratch operand']
  %s0 = inlined_call_operand.vmem [shape: f32[1,8,512], index: 0, kind: input, shape index: {}]
  %s1 = inlined_call_operand.vmem [shape: f32[9,512], index: 1, kind: input, shape index: {}]
  %s2 = inlined_call_operand.vmem [shape: f32[9,128], index: 2, kind: input, shape index: {}]
  %s3 = inlined_call_operand.hbm [shape: bf16[9,32,32], index: 3, kind: input, shape index: {}]
  %s4 = inlined_call_operand.hbm [shape: bf16[512,128], index: 4, kind: input, shape index: {}]
  %s5 = inlined_call_operand.vmem [shape: bf16[128,32], index: 5, kind: input, shape index: {}]
  %s6 = inlined_call_operand.hbm [shape: bf16[32,128], index: 6, kind: input, shape index: {}]
  %s7 = inlined_call_operand.hbm [shape: bf16[128,512], index: 7, kind: input, shape index: {}]
  %s8 = inlined_call_operand.vmem [shape: bf16[8,72], index: 8, kind: input, shape index: {}]
  %s9 = inlined_call_operand.vmem [shape: f32[8,1], index: 9, kind: input, shape index: {}]
  %s10 = inlined_call_operand.vmem [shape: bf16[16,72], index: 10, kind: input, shape index: {}]
  %s11 = inlined_call_operand.vmem [shape: f32[16,1], index: 11, kind: input, shape index: {}]
  %s12 = inlined_call_operand.vmem [shape: bf16[32,144], index: 12, kind: input, shape index: {}]
  %s13 = inlined_call_operand.vmem [shape: f32[32,1], index: 13, kind: input, shape index: {}]
  %s14 = inlined_call_operand.hbm [shape: bf16[16,432], index: 14, kind: input, shape index: {}]
  %s15 = inlined_call_operand.vmem [shape: f32[16,1], index: 15, kind: input, shape index: {}]
  %s16 = inlined_call_operand.hbm [shape: bf16[8,216], index: 16, kind: input, shape index: {}]
  %s17 = inlined_call_operand.vmem [shape: f32[8,1], index: 17, kind: input, shape index: {}]
  %s18 = inlined_call_operand.vmem [shape: bf16[3,8], index: 18, kind: input, shape index: {}]
  %s19 = inlined_call_operand.vmem [shape: f32[3,1], index: 19, kind: input, shape index: {}]
  %s20 = inlined_call_operand.vmem [shape: f32[2,3,256], index: 20, kind: output, shape index: {}]
  %s21 = sld [smem:[#allocation0]]
  $region114: #{tpu_custom_call.1} parent=0
    _
  %s23 = ssub.s32 1, %s21
  %s24 = scalar_select 0, %s23, %s21
  $region1: #{tpu_custom_call.1} parent=0
    #allocation3 [shape = 'u8[73728]{0}', space=vmem, size = 0x12000, scoped, tag = 'input window, operand 3, single buffered']
    #allocation4 [shape = 's32[1]{0}', space=sflag, size = 0x4, scoped, tag = 'scoped memory for tpu_custom_call.1']
    #allocation5 [shape = 'u8[131072]{0}', space=vmem, size = 0x20000, scoped, tag = 'input window, operand 4, single buffered']
    #allocation6 [shape = 's32[1]{0}', space=sflag, size = 0x4, scoped, tag = 'scoped memory for tpu_custom_call.1']
    #allocation7 [shape = 'u8[8192]{0}', space=vmem, size = 0x2000, scoped, tag = 'input window, operand 6, single buffered']
    #allocation8 [shape = 'u8[131072]{0}', space=vmem, size = 0x20000, scoped, tag = 'input window, operand 7, single buffered']
    #allocation9 [shape = 's32[1]{0}', space=sflag, size = 0x4, scoped, tag = 'scoped memory for tpu_custom_call.1']
    #allocation10 [shape = 'u8[16384]{0}', space=vmem, size = 0x4000, scoped, tag = 'input window, operand 14, single buffered']
    #allocation11 [shape = 'u8[4096]{0}', space=vmem, size = 0x1000, scoped, tag = 'input window, operand 16, single buffered']
    #allocation12 [shape = 's32[1]{0}', space=sflag, size = 0x4, scoped, tag = 'scoped memory for tpu_custom_call.1']
    %25 = vsyncpa [#allocation4], 0
    %26 = vsyncpa [#allocation6], 0
    %27 = vsyncpa [#allocation9], 0
    %28 = vsyncpa [#allocation12], 0
    // Predicated region
    $region2: #{tpu_custom_call.1} parent=1 // pred_check
      _
    $region3: #{tpu_custom_call.1} parent=1 // pred_check_branch
      %30 = sbr.rel (0) target = $region5
    $region4: #{tpu_custom_call.1} parent=1 // pred_region
      _
    $region5: #{tpu_custom_call.1} parent=1 // pred_fallthru
      _
    // Predicated region
    $region6: #{tpu_custom_call.1} parent=1 // pred_check
      _
    $region7: #{tpu_custom_call.1} parent=1 // pred_check_branch
      %32 = sbr.rel (0) target = $region9
    $region8: #{tpu_custom_call.1} parent=1 // pred_region
      _
    $region9: #{tpu_custom_call.1} parent=1 // pred_fallthru
      _
    // Predicated region
    $region10: #{tpu_custom_call.1} parent=1 // pred_check
      _
    $region11: #{tpu_custom_call.1} parent=1 // pred_check_branch
      %34 = sbr.rel (0) target = $region13
    $region12: #{tpu_custom_call.1} parent=1 // pred_region
      _
    $region13: #{tpu_custom_call.1} parent=1 // pred_fallthru
      _
    // Predicated region
    $region14: #{tpu_custom_call.1} parent=1 // pred_check
      _
    $region15: #{tpu_custom_call.1} parent=1 // pred_check_branch
      %36 = sbr.rel (0) target = $region17
    $region16: #{tpu_custom_call.1} parent=1 // pred_region
      %38 = vsyncadd [#allocation4], 0
      %s39 = sshll.u32 %s3, 4
      %s40 = int_to_ptr.hbm [resolvable:$true] %s39
      %s41 = sshll.u32 [#allocation3], 4
      %s42 = int_to_ptr.vmem [resolvable:$true] %s41
      %47 = dma.hbm_to_vmem [thread:$0]  %s40, 2304, %s42, [#allocation4], 64, 64, 4
    $region17: #{tpu_custom_call.1} parent=1 // pred_fallthru
      _
    // Predicated region
    $region18: #{tpu_custom_call.1} parent=1 // pred_check
      _
    $region19: #{tpu_custom_call.1} parent=1 // pred_check_branch
      %49 = sbr.rel (0) target = $region21
    $region20: #{tpu_custom_call.1} parent=1 // pred_region
      %51 = vsyncadd [#allocation6], 0
      %s52 = sshll.u32 %s4, 4
      %s53 = int_to_ptr.hbm [resolvable:$true] %s52
      %s54 = sshll.u32 [#allocation5], 4
      %s55 = int_to_ptr.vmem [resolvable:$true] %s54
      %60 = dma.hbm_to_vmem [thread:$0]  %s53, 4096, %s55, [#allocation6], 64, 64, 4
    $region21: #{tpu_custom_call.1} parent=1 // pred_fallthru
      _
    // Predicated region
    $region22: #{tpu_custom_call.1} parent=1 // pred_check
      _
    $region23: #{tpu_custom_call.1} parent=1 // pred_check_branch
      %62 = sbr.rel (0) target = $region25
    $region24: #{tpu_custom_call.1} parent=1 // pred_region
      _
    $region25: #{tpu_custom_call.1} parent=1 // pred_fallthru
      _
    // Predicated region
    $region26: #{tpu_custom_call.1} parent=1 // pred_check
      _
    $region27: #{tpu_custom_call.1} parent=1 // pred_check_branch
      %64 = sbr.rel (0) target = $region29
    $region28: #{tpu_custom_call.1} parent=1 // pred_region
      %66 = vsyncadd [#allocation6], 0
      %s67 = sshll.u32 %s6, 4
      %s68 = int_to_ptr.hbm [resolvable:$true] %s67
      %s69 = sshll.u32 [#allocation7], 4
      %s70 = int_to_ptr.vmem [resolvable:$true] %s69
      %75 = dma.hbm_to_vmem [thread:$0]  %s68, 256, %s70, [#allocation6], 64, 64, 4
    $region29: #{tpu_custom_call.1} parent=1 // pred_fallthru
      _
    // Predicated region
    $region30: #{tpu_custom_call.1} parent=1 // pred_check
      _
    $region31: #{tpu_custom_call.1} parent=1 // pred_check_branch
      %77 = sbr.rel (0) target = $region33
    $region32: #{tpu_custom_call.1} parent=1 // pred_region
      %79 = vsyncadd [#allocation9], 0
      %s80 = sshll.u32 %s7, 4
      %s81 = int_to_ptr.hbm [resolvable:$true] %s80
      %s82 = sshll.u32 [#allocation8], 4
      %s83 = int_to_ptr.vmem [resolvable:$true] %s82
      %88 = dma.hbm_to_vmem [thread:$0]  %s81, 4096, %s83, [#allocation9], 256, 256, 16
    $region33: #{tpu_custom_call.1} parent=1 // pred_fallthru
      _
    // Predicated region
    $region34: #{tpu_custom_call.1} parent=1 // pred_check
      _
    $region35: #{tpu_custom_call.1} parent=1 // pred_check_branch
      %90 = sbr.rel (0) target = $region37
    $region36: #{tpu_custom_call.1} parent=1 // pred_region
      _
    $region37: #{tpu_custom_call.1} parent=1 // pred_fallthru
      _
    // Predicated region
    $region38: #{tpu_custom_call.1} parent=1 // pred_check
      _
    $region39: #{tpu_custom_call.1} parent=1 // pred_check_branch
      %92 = sbr.rel (0) target = $region41
    $region40: #{tpu_custom_call.1} parent=1 // pred_region
      _
    $region41: #{tpu_custom_call.1} parent=1 // pred_fallthru
      _
    // Predicated region
    $region42: #{tpu_custom_call.1} parent=1 // pred_check
      _
    $region43: #{tpu_custom_call.1} parent=1 // pred_check_branch
      %94 = sbr.rel (0) target = $region45
    $region44: #{tpu_custom_call.1} parent=1 // pred_region
      _
    $region45: #{tpu_custom_call.1} parent=1 // pred_fallthru
      _
    // Predicated region
    $region46: #{tpu_custom_call.1} parent=1 // pred_check
      _
    $region47: #{tpu_custom_call.1} parent=1 // pred_check_branch
      %96 = sbr.rel (0) target = $region49
    $region48: #{tpu_custom_call.1} parent=1 // pred_region
      _
    $region49: #{tpu_custom_call.1} parent=1 // pred_fallthru
      _
    // Predicated region
    $region50: #{tpu_custom_call.1} parent=1 // pred_check
      _
    $region51: #{tpu_custom_call.1} parent=1 // pred_check_branch
      %98 = sbr.rel (0) target = $region53
    $region52: #{tpu_custom_call.1} parent=1 // pred_region
      _
    $region53: #{tpu_custom_call.1} parent=1 // pred_fallthru
      _
    // Predicated region
    $region54: #{tpu_custom_call.1} parent=1 // pred_check
      _
    $region55: #{tpu_custom_call.1} parent=1 // pred_check_branch
      %100 = sbr.rel (0) target = $region57
    $region56: #{tpu_custom_call.1} parent=1 // pred_region
      _
    $region57: #{tpu_custom_call.1} parent=1 // pred_fallthru
      _
    // Predicated region
    $region58: #{tpu_custom_call.1} parent=1 // pred_check
      _
    $region59: #{tpu_custom_call.1} parent=1 // pred_check_branch
      %102 = sbr.rel (0) target = $region61
    $region60: #{tpu_custom_call.1} parent=1 // pred_region
      %104 = vsyncadd [#allocation9], 0
      %s105 = sshll.u32 %s14, 4
      %s106 = int_to_ptr.hbm [resolvable:$true] %s105
      %s107 = sshll.u32 [#allocation10], 4
      %s108 = int_to_ptr.vmem [resolvable:$true] %s107
      %113 = dma.hbm_to_vmem [thread:$0]  %s106, 512, %s108, [#allocation9], 256, 256, 16
    $region61: #{tpu_custom_call.1} parent=1 // pred_fallthru
      _
    // Predicated region
    $region62: #{tpu_custom_call.1} parent=1 // pred_check
      _
    $region63: #{tpu_custom_call.1} parent=1 // pred_check_branch
      %115 = sbr.rel (0) target = $region65
    $region64: #{tpu_custom_call.1} parent=1 // pred_region
      _
    $region65: #{tpu_custom_call.1} parent=1 // pred_fallthru
      _
    // Predicated region
    $region66: #{tpu_custom_call.1} parent=1 // pred_check
      _
    $region67: #{tpu_custom_call.1} parent=1 // pred_check_branch
      %117 = sbr.rel (0) target = $region69
    $region68: #{tpu_custom_call.1} parent=1 // pred_region
      %119 = vsyncadd [#allocation12], 0
      %s121 = sshll.u32 %s16, 4
      %s122 = int_to_ptr.hbm [resolvable:$true] %s121
      %s123 = sshll.u32 [#allocation11], 4
      %s124 = int_to_ptr.vmem [resolvable:$true] %s123
      %126 = dma.hbm_to_vmem [thread:$0]  %s122, 128, %s124, [#allocation12]
    $region69: #{tpu_custom_call.1} parent=1 // pred_fallthru
      _
    // Predicated region
    $region70: #{tpu_custom_call.1} parent=1 // pred_check
      _
    $region71: #{tpu_custom_call.1} parent=1 // pred_check_branch
      %128 = sbr.rel (0) target = $region73
    $region72: #{tpu_custom_call.1} parent=1 // pred_region
      _
    $region73: #{tpu_custom_call.1} parent=1 // pred_fallthru
      _
    // Predicated region
    $region74: #{tpu_custom_call.1} parent=1 // pred_check
      _
    $region75: #{tpu_custom_call.1} parent=1 // pred_check_branch
      %130 = sbr.rel (0) target = $region77
    $region76: #{tpu_custom_call.1} parent=1 // pred_region
      _
    $region77: #{tpu_custom_call.1} parent=1 // pred_fallthru
      _
    // Predicated region
    $region78: #{tpu_custom_call.1} parent=1 // pred_check
      _
    $region79: #{tpu_custom_call.1} parent=1 // pred_check_branch
      %132 = sbr.rel (0) target = $region81
    $region80: #{tpu_custom_call.1} parent=1 // pred_region
      _
    $region81: #{tpu_custom_call.1} parent=1 // pred_fallthru
      _
    // Predicated region
    $region82: #{tpu_custom_call.1} parent=1 // pred_check
      _
    $region83: #{tpu_custom_call.1} parent=1 // pred_check_branch
      %134 = sbr.rel (0) target = $region85
    $region84: #{tpu_custom_call.1} parent=1 // pred_region
      %136 = dma.done [#allocation4], 2304
    $region85: #{tpu_custom_call.1} parent=1 // pred_fallthru
      _
    // Predicated region
    $region86: #{tpu_custom_call.1} parent=1 // pred_check
      _
    $region87: #{tpu_custom_call.1} parent=1 // pred_check_branch
      %138 = sbr.rel (0) target = $region89
    $region88: #{tpu_custom_call.1} parent=1 // pred_region
      %140 = dma.done [#allocation6], 4096
    $region89: #{tpu_custom_call.1} parent=1 // pred_fallthru
      _
    // Predicated region
    $region90: #{tpu_custom_call.1} parent=1 // pred_check
      _
    $region91: #{tpu_custom_call.1} parent=1 // pred_check_branch
      %142 = sbr.rel (0) target = $region93
    $region92: #{tpu_custom_call.1} parent=1 // pred_region
      %144 = dma.done [#allocation6], 256
    $region93: #{tpu_custom_call.1} parent=1 // pred_fallthru
      _
    // Predicated region
    $region94: #{tpu_custom_call.1} parent=1 // pred_check
      _
    $region95: #{tpu_custom_call.1} parent=1 // pred_check_branch
      %146 = sbr.rel (0) target = $region97
    $region96: #{tpu_custom_call.1} parent=1 // pred_region
      %148 = dma.done [#allocation9], 4096
    $region97: #{tpu_custom_call.1} parent=1 // pred_fallthru
      _
    // Predicated region
    $region98: #{tpu_custom_call.1} parent=1 // pred_check
      _
    $region99: #{tpu_custom_call.1} parent=1 // pred_check_branch
      %150 = sbr.rel (0) target = $region101
    $region100: #{tpu_custom_call.1} parent=1 // pred_region
      %152 = dma.done [#allocation9], 512
    $region101: #{tpu_custom_call.1} parent=1 // pred_fallthru
      _
    // Predicated region
    $region102: #{tpu_custom_call.1} parent=1 // pred_check
      _
    $region103: #{tpu_custom_call.1} parent=1 // pred_check_branch
      %154 = sbr.rel (0) target = $region105
    $region104: #{tpu_custom_call.1} parent=1 // pred_region
      %156 = dma.done [#allocation12], 128
    $region105: #{tpu_custom_call.1} parent=1 // pred_fallthru
      _
    %v158 = vld [vmem:[%s0] sm:$0xff]
    %v159 = vld [vmem:[%s0 + $0x8] sm:$0xff]
    %v160 = vld [vmem:[%s0 + $0x10] sm:$0xff]
    %v161 = vld [vmem:[%s0 + $0x18] sm:$0xff]
    %v162 = vld [vmem:[%s1] ss:$8 sm:$0xf]
    %163 = vrot.lane.b32.xlu0 %v158, 17
    %v164 = vpop.permute.xlu0 %163
    %165 = vrot.lane.b32.xlu0 %v159, 17
    %v166 = vpop.permute.xlu0 %165
    %167 = vrot.lane.b32.xlu0 %v160, 17
    %v168 = vpop.permute.xlu0 %167
    %169 = vrot.lane.b32.xlu0 %v161, 17
    %v170 = vpop.permute.xlu0 %169
    %v171 = vlaneseq
    %v172 = vand.u32 %v171, 127
    %vm173 = vcmp.lt.s32.totalorder %v172, 17
    %v174 = vsel %vm173, %v168, %v170
    %v175 = vsel %vm173, %v166, %v168
    %v176 = vsel %vm173, %v164, %v166
    %v177 = vsel %vm173, %v170, %v164
    %v179 = vperm.slane %v162, 0
    %v180 = vperm.slane %v162, 1
    %v181 = vperm.slane %v162, 2
    %v182 = vperm.slane %v162, 3
    %v187 = vmul.f32 %v177, %v179
    %v188 = vmul.f32 %v176, %v180
    %v189 = vmul.f32 %v175, %v181
    %v190 = vmul.f32 %v174, %v182
    %191 = vst [vmem:[#allocation2] sm:$0xff] %v187
    %192 = vst [vmem:[#allocation2 + $0x8] sm:$0xff] %v188
    %193 = vst [vmem:[#allocation2 + $0x10] sm:$0xff] %v189
    %194 = vst [vmem:[#allocation2 + $0x18] sm:$0xff] %v190
    %s195 = scalar_lea.vmem %s1, 1
    %v196 = vld [vmem:[%s195] ss:$8 sm:$0xf]
    %197 = vrot.lane.b32.xlu0 %v158, 16
    %v198 = vpop.permute.xlu0 %197
    %199 = vrot.lane.b32.xlu0 %v159, 16
    %v200 = vpop.permute.xlu0 %199
    %201 = vrot.lane.b32.xlu0 %v160, 16
    %v202 = vpop.permute.xlu0 %201
    %203 = vrot.lane.b32.xlu0 %v161, 16
    %v204 = vpop.permute.xlu0 %203
    %vm205 = vcmp.lt.s32.totalorder %v172, 16
    %v206 = vsel %vm205, %v202, %v204
    %v207 = vsel %vm205, %v200, %v202
    %v208 = vsel %vm205, %v198, %v200
    %v209 = vsel %vm205, %v204, %v198
    %v211 = vperm.slane %v196, 0
    %v212 = vperm.slane %v196, 1
    %v213 = vperm.slane %v196, 2
    %v214 = vperm.slane %v196, 3
    %v219 = vmul.f32 %v209, %v211
    %v220 = vmul.f32 %v208, %v212
    %v221 = vmul.f32 %v207, %v213
    %v222 = vmul.f32 %v206, %v214
    %223 = vst [vmem:[#allocation2 + $0x20] sm:$0xff] %v219
    %224 = vst [vmem:[#allocation2 + $0x28] sm:$0xff] %v220
    %225 = vst [vmem:[#allocation2 + $0x30] sm:$0xff] %v221
    %226 = vst [vmem:[#allocation2 + $0x38] sm:$0xff] %v222
    %s227 = scalar_lea.vmem %s1, 2
    %v228 = vld [vmem:[%s227] ss:$8 sm:$0xf]
    %229 = vrot.lane.b32.xlu0 %v158, 15
    %v230 = vpop.permute.xlu0 %229
    %231 = vrot.lane.b32.xlu0 %v159, 15
    %v232 = vpop.permute.xlu0 %231
    %233 = vrot.lane.b32.xlu0 %v160, 15
    %v234 = vpop.permute.xlu0 %233
    %235 = vrot.lane.b32.xlu0 %v161, 15
    %v236 = vpop.permute.xlu0 %235
    %vm237 = vcmp.lt.s32.totalorder %v172, 15
    %v238 = vsel %vm237, %v234, %v236
    %v239 = vsel %vm237, %v232, %v234
    %v240 = vsel %vm237, %v230, %v232
    %v241 = vsel %vm237, %v236, %v230
    %v243 = vperm.slane %v228, 0
    %v244 = vperm.slane %v228, 1
    %v245 = vperm.slane %v228, 2
    %v246 = vperm.slane %v228, 3
    %v251 = vmul.f32 %v241, %v243
    %v252 = vmul.f32 %v240, %v244
    %v253 = vmul.f32 %v239, %v245
    %v254 = vmul.f32 %v238, %v246
    %255 = vst [vmem:[#allocation2 + $0x40] sm:$0xff] %v251
    %256 = vst [vmem:[#allocation2 + $0x48] sm:$0xff] %v252
    %257 = vst [vmem:[#allocation2 + $0x50] sm:$0xff] %v253
    %258 = vst [vmem:[#allocation2 + $0x58] sm:$0xff] %v254
    %s259 = scalar_lea.vmem %s1, 3
    %v260 = vld [vmem:[%s259] ss:$8 sm:$0xf]
    %261 = vrot.lane.b32.xlu0 %v158, 1
    %v262 = vpop.permute.xlu0 %261
    %263 = vrot.lane.b32.xlu0 %v159, 1
    %v264 = vpop.permute.xlu0 %263
    %265 = vrot.lane.b32.xlu0 %v160, 1
    %v266 = vpop.permute.xlu0 %265
    %267 = vrot.lane.b32.xlu0 %v161, 1
    %v268 = vpop.permute.xlu0 %267
    %vm269 = vcmp.lt.s32.totalorder %v172, 1
    %v270 = vsel %vm269, %v266, %v268
    %v271 = vsel %vm269, %v264, %v266
    %v272 = vsel %vm269, %v262, %v264
    %v273 = vsel %vm269, %v268, %v262
    %v275 = vperm.slane %v260, 0
    %v276 = vperm.slane %v260, 1
    %v277 = vperm.slane %v260, 2
    %v278 = vperm.slane %v260, 3
    %v283 = vmul.f32 %v273, %v275
    %v284 = vmul.f32 %v272, %v276
    %v285 = vmul.f32 %v271, %v277
    %v286 = vmul.f32 %v270, %v278
    %287 = vst [vmem:[#allocation2 + $0x60] sm:$0xff] %v283
    %288 = vst [vmem:[#allocation2 + $0x68] sm:$0xff] %v284
    %289 = vst [vmem:[#allocation2 + $0x70] sm:$0xff] %v285
    %290 = vst [vmem:[#allocation2 + $0x78] sm:$0xff] %v286
    %291 = vst [vmem:[#allocation2 + $0x80] sm:$0xff] %v158
    %292 = vst [vmem:[#allocation2 + $0x88] sm:$0xff] %v159
    %293 = vst [vmem:[#allocation2 + $0x90] sm:$0xff] %v160
    %294 = vst [vmem:[#allocation2 + $0x98] sm:$0xff] %v161
    %s295 = scalar_lea.vmem %s1, 5
    %v296 = vld [vmem:[%s295] ss:$8 sm:$0xf]
    %297 = vrot.lane.b32.xlu0 %v158, 127
    %v298 = vpop.permute.xlu0 %297
    %299 = vrot.lane.b32.xlu0 %v159, 127
    %v300 = vpop.permute.xlu0 %299
    %301 = vrot.lane.b32.xlu0 %v160, 127
    %v302 = vpop.permute.xlu0 %301
    %303 = vrot.lane.b32.xlu0 %v161, 127
    %v304 = vpop.permute.xlu0 %303
    %vm305 = vcmp.lt.s32.totalorder %v172, 127
    %v306 = vsel %vm305, %v302, %v304
    %v307 = vsel %vm305, %v300, %v302
    %v308 = vsel %vm305, %v298, %v300
    %v309 = vsel %vm305, %v304, %v298
    %v311 = vperm.slane %v296, 0
    %v312 = vperm.slane %v296, 1
    %v313 = vperm.slane %v296, 2
    %v314 = vperm.slane %v296, 3
    %v319 = vmul.f32 %v308, %v311
    %v320 = vmul.f32 %v307, %v312
    %v321 = vmul.f32 %v306, %v313
    %v322 = vmul.f32 %v309, %v314
    %323 = vst [vmem:[#allocation2 + $0xa0] sm:$0xff] %v319
    %324 = vst [vmem:[#allocation2 + $0xa8] sm:$0xff] %v320
    %325 = vst [vmem:[#allocation2 + $0xb0] sm:$0xff] %v321
    %326 = vst [vmem:[#allocation2 + $0xb8] sm:$0xff] %v322
    %s327 = scalar_lea.vmem %s1, 6
    %v328 = vld [vmem:[%s327] ss:$8 sm:$0xf]
    %329 = vrot.lane.b32.xlu0 %v158, 113
    %v330 = vpop.permute.xlu0 %329
    %331 = vrot.lane.b32.xlu0 %v159, 113
    %v332 = vpop.permute.xlu0 %331
    %333 = vrot.lane.b32.xlu0 %v160, 113
    %v334 = vpop.permute.xlu0 %333
    %335 = vrot.lane.b32.xlu0 %v161, 113
    %v336 = vpop.permute.xlu0 %335
    %vm337 = vcmp.lt.s32.totalorder %v172, 113
    %v338 = vsel %vm337, %v334, %v336
    %v339 = vsel %vm337, %v332, %v334
    %v340 = vsel %vm337, %v330, %v332
    %v341 = vsel %vm337, %v336, %v330
    %v343 = vperm.slane %v328, 0
    %v344 = vperm.slane %v328, 1
    %v345 = vperm.slane %v328, 2
    %v346 = vperm.slane %v328, 3
    %v351 = vmul.f32 %v340, %v343
    %v352 = vmul.f32 %v339, %v344
    %v353 = vmul.f32 %v338, %v345
    %v354 = vmul.f32 %v341, %v346
    %355 = vst [vmem:[#allocation2 + $0xc0] sm:$0xff] %v351
    %356 = vst [vmem:[#allocation2 + $0xc8] sm:$0xff] %v352
    %357 = vst [vmem:[#allocation2 + $0xd0] sm:$0xff] %v353
    %358 = vst [vmem:[#allocation2 + $0xd8] sm:$0xff] %v354
    %s359 = scalar_lea.vmem %s1, 7
    %v360 = vld [vmem:[%s359] ss:$8 sm:$0xf]
    %361 = vrot.lane.b32.xlu0 %v158, 112
    %v362 = vpop.permute.xlu0 %361
    %363 = vrot.lane.b32.xlu0 %v159, 112
    %v364 = vpop.permute.xlu0 %363
    %365 = vrot.lane.b32.xlu0 %v160, 112
    %v366 = vpop.permute.xlu0 %365
    %367 = vrot.lane.b32.xlu0 %v161, 112
    %v368 = vpop.permute.xlu0 %367
    %vm369 = vcmp.lt.s32.totalorder %v172, 112
    %v370 = vsel %vm369, %v366, %v368
    %v371 = vsel %vm369, %v364, %v366
    %v372 = vsel %vm369, %v362, %v364
    %v373 = vsel %vm369, %v368, %v362
    %v375 = vperm.slane %v360, 0
    %v376 = vperm.slane %v360, 1
    %v377 = vperm.slane %v360, 2
    %v378 = vperm.slane %v360, 3
    %v383 = vmul.f32 %v372, %v375
    %v384 = vmul.f32 %v371, %v376
    %v385 = vmul.f32 %v370, %v377
    %v386 = vmul.f32 %v373, %v378
    %387 = vst [vmem:[#allocation2 + $0xe0] sm:$0xff] %v383
    %388 = vst [vmem:[#allocation2 + $0xe8] sm:$0xff] %v384
    %389 = vst [vmem:[#allocation2 + $0xf0] sm:$0xff] %v385
    %390 = vst [vmem:[#allocation2 + $0xf8] sm:$0xff] %v386
    %s391 = scalar_lea.vmem %s1, 32
    %v392 = vld [vmem:[%s391] ss:$8 sm:$0xf]
    %393 = vrot.lane.b32.xlu0 %v158, 111
    %v394 = vpop.permute.xlu0 %393
    %395 = vrot.lane.b32.xlu0 %v159, 111
    %v396 = vpop.permute.xlu0 %395
    %397 = vrot.lane.b32.xlu0 %v160, 111
    %v398 = vpop.permute.xlu0 %397
    %399 = vrot.lane.b32.xlu0 %v161, 111
    %v400 = vpop.permute.xlu0 %399
    %vm401 = vcmp.lt.s32.totalorder %v172, 111
    %v402 = vsel %vm401, %v398, %v400
    %v403 = vsel %vm401, %v396, %v398
    %v404 = vsel %vm401, %v394, %v396
    %v405 = vsel %vm401, %v400, %v394
    %v407 = vperm.slane %v392, 0
    %v408 = vperm.slane %v392, 1
    %v409 = vperm.slane %v392, 2
    %v410 = vperm.slane %v392, 3
    %v415 = vmul.f32 %v404, %v407
    %v416 = vmul.f32 %v403, %v408
    %v417 = vmul.f32 %v402, %v409
    %v418 = vmul.f32 %v405, %v410
    %419 = vst [vmem:[#allocation2 + $0x100] sm:$0xff] %v415
    %420 = vst [vmem:[#allocation2 + $0x108] sm:$0xff] %v416
    %421 = vst [vmem:[#allocation2 + $0x110] sm:$0xff] %v417
    %422 = vst [vmem:[#allocation2 + $0x118] sm:$0xff] %v418
    %v423 = vld [vmem:[#allocation2] sm:$0xff]
    %v424 = vld [vmem:[#allocation2 + $0x8] sm:$0xff]
    %v425 = vld [vmem:[#allocation2 + $0x10] sm:$0xff]
    %v426 = vld [vmem:[#allocation2 + $0x18] sm:$0xff]
    %v427 = vld [vmem:[#allocation2 + $0x20] sm:$0xff]
    %v428 = vld [vmem:[#allocation2 + $0x28] sm:$0xff]
    %v429 = vld [vmem:[#allocation2 + $0x30] sm:$0xff]
    %v430 = vld [vmem:[#allocation2 + $0x38] sm:$0xff]
    %v431 = vld [vmem:[#allocation2 + $0x40] sm:$0xff]
    %v432 = vld [vmem:[#allocation2 + $0x48] sm:$0xff]
    %v433 = vld [vmem:[#allocation2 + $0x50] sm:$0xff]
    %v434 = vld [vmem:[#allocation2 + $0x58] sm:$0xff]
    %v435 = vld [vmem:[#allocation2 + $0x60] sm:$0xff]
    %v436 = vld [vmem:[#allocation2 + $0x68] sm:$0xff]
    %v437 = vld [vmem:[#allocation2 + $0x70] sm:$0xff]
    %v438 = vld [vmem:[#allocation2 + $0x78] sm:$0xff]
    %v439 = vld [vmem:[#allocation2 + $0x80] sm:$0xff]
    %v440 = vld [vmem:[#allocation2 + $0x88] sm:$0xff]
    %v441 = vld [vmem:[#allocation2 + $0x90] sm:$0xff]
    %v442 = vld [vmem:[#allocation2 + $0x98] sm:$0xff]
    %v443 = vld [vmem:[#allocation2 + $0xa0] sm:$0xff]
    %v444 = vld [vmem:[#allocation2 + $0xa8] sm:$0xff]
    %v445 = vld [vmem:[#allocation2 + $0xb0] sm:$0xff]
    %v446 = vld [vmem:[#allocation2 + $0xb8] sm:$0xff]
    %v447 = vld [vmem:[#allocation2 + $0xc0] sm:$0xff]
    %v448 = vld [vmem:[#allocation2 + $0xc8] sm:$0xff]
    %v449 = vld [vmem:[#allocation2 + $0xd0] sm:$0xff]
    %v450 = vld [vmem:[#allocation2 + $0xd8] sm:$0xff]
    %v451 = vld [vmem:[#allocation2 + $0xe0] sm:$0xff]
    %v452 = vld [vmem:[#allocation2 + $0xe8] sm:$0xff]
    %v453 = vld [vmem:[#allocation2 + $0xf0] sm:$0xff]
    %v454 = vld [vmem:[#allocation2 + $0xf8] sm:$0xff]
    %v455 = vld [vmem:[#allocation2 + $0x100] sm:$0xff]
    %v456 = vld [vmem:[#allocation2 + $0x108] sm:$0xff]
    %v457 = vld [vmem:[#allocation2 + $0x110] sm:$0xff]
    %v458 = vld [vmem:[#allocation2 + $0x118] sm:$0xff]
    %v459 = vpack.c.bf16 %v427, %v423
    %v460 = vpack.c.bf16 %v428, %v424
    %v461 = vpack.c.bf16 %v429, %v425
    %v462 = vpack.c.bf16 %v430, %v426
    %v463 = vpack.c.bf16 %v435, %v431
    %v464 = vpack.c.bf16 %v436, %v432
    %v465 = vpack.c.bf16 %v437, %v433
    %v466 = vpack.c.bf16 %v438, %v434
    %v467 = vpack.c.bf16 %v443, %v439
    %v468 = vpack.c.bf16 %v444, %v440
    %v469 = vpack.c.bf16 %v445, %v441
    %v470 = vpack.c.bf16 %v446, %v442
    %v471 = vpack.c.bf16 %v451, %v447
    %v472 = vpack.c.bf16 %v452, %v448
    %v473 = vpack.c.bf16 %v453, %v449
    %v474 = vpack.c.bf16 %v454, %v450
    %v475 = vpack.c.bf16 %v455, %v455
    %v476 = vpack.c.bf16 %v456, %v456
    %v477 = vpack.c.bf16 %v457, %v457
    %v478 = vpack.c.bf16 %v458, %v458
    %v479 = vld [vmem:[%s8] sm:$0xf]
    %v480 = vld [vmem:[%s9] sm:$0xff]
    %482 = vset.pattern.permute.xlu0 0
    %483 = vperm.xlu0 %482, %v480
    %v484 = vpop.permute.xlu0 %483
    %vm486 = vcmask 588800
    %v488 = vsel %vm486, %v479, 0
    %vm490 = vcmask 1043456
    %v492 = vsel %vm490, %v475, 0
    %v495 = vsel %vm490, %v476, 0
    %v498 = vsel %vm490, %v477, 0
    %v501 = vsel %vm490, %v478, 0
    %503 = vmatpush.bf16.msra.mxu0 0
    %504 = vmatpush.bf16.msra.mxu0 0
    %505 = vmatpush.bf16.msra.mxu0 0
    %506 = vmatpush.bf16.msra.mxu0 %v492
    %507 = vmatpush.bf16.msra.mxu0 %v471
    %508 = vmatpush.bf16.msra.mxu0 %v467
    %509 = vmatpush.bf16.msra.mxu0 %v463
    %510 = vmatpush.bf16.msra.mxu0 %v459
    %511 = vmatmul.bf16.gmra.mxu0 %v488
    %v512 = vpop.f32.mrf.mxu0
    %v513 = vadd.f32 %v484, %v512
    %v514 = vpop.f32.mrf.mxu0
    %515 = vdwg.mxu0
    %516 = vmatpush.bf16.msra.mxu0 0
    %517 = vmatpush.bf16.msra.mxu0 0
    %518 = vmatpush.bf16.msra.mxu0 0
    %519 = vmatpush.bf16.msra.mxu0 %v495
    %520 = vmatpush.bf16.msra.mxu0 %v472
    %521 = vmatpush.bf16.msra.mxu0 %v468
    %522 = vmatpush.bf16.msra.mxu0 %v464
    %523 = vmatpush.bf16.msra.mxu0 %v460
    %524 = vmatmul.bf16.gmra.mxu0 %v488
    %v525 = vpop.f32.mrf.mxu0
    %v526 = vadd.f32 %v484, %v525
    %v527 = vpop.f32.mrf.mxu0
    %528 = vdwg.mxu0
    %529 = vmatpush.bf16.msra.mxu0 0
    %530 = vmatpush.bf16.msra.mxu0 0
    %531 = vmatpush.bf16.msra.mxu0 0
    %532 = vmatpush.bf16.msra.mxu0 %v498
    %533 = vmatpush.bf16.msra.mxu0 %v473
    %534 = vmatpush.bf16.msra.mxu0 %v469
    %535 = vmatpush.bf16.msra.mxu0 %v465
    %536 = vmatpush.bf16.msra.mxu0 %v461
    %537 = vmatmul.bf16.gmra.mxu0 %v488
    %v538 = vpop.f32.mrf.mxu0
    %v539 = vadd.f32 %v484, %v538
    %v540 = vpop.f32.mrf.mxu0
    %541 = vdwg.mxu0
    %542 = vmatpush.bf16.msra.mxu0 0
    %543 = vmatpush.bf16.msra.mxu0 0
    %544 = vmatpush.bf16.msra.mxu0 0
    %545 = vmatpush.bf16.msra.mxu0 %v501
    %546 = vmatpush.bf16.msra.mxu0 %v474
    %547 = vmatpush.bf16.msra.mxu0 %v470
    %548 = vmatpush.bf16.msra.mxu0 %v466
    %549 = vmatpush.bf16.msra.mxu0 %v462
    %550 = vmatmul.bf16.gmra.mxu0 %v488
    %v551 = vpop.f32.mrf.mxu0
    %v552 = vadd.f32 %v484, %v551
    %v553 = vpop.f32.mrf.mxu0
    %554 = vdwg.mxu0
    %v555 = vmax.f32 %v513, 0.0
    %v556 = vmax.f32 %v526, 0.0
    %v557 = vmax.f32 %v539, 0.0
    %v558 = vmax.f32 %v552, 0.0
    %559 = vrot.lane.b32.xlu0 %v555, 127
    %v560 = vpop.permute.xlu0 %559
    %561 = vrot.lane.b32.xlu0 %v556, 127
    %v562 = vpop.permute.xlu0 %561
    %563 = vrot.lane.b32.xlu0 %v557, 127
    %v564 = vpop.permute.xlu0 %563
    %565 = vrot.lane.b32.xlu0 %v558, 127
    %v566 = vpop.permute.xlu0 %565
    %v567 = vsel %vm305, %v564, %v566
    %v568 = vsel %vm305, %v562, %v564
    %v569 = vsel %vm305, %v560, %v562
    %v570 = vsel %vm305, %v566, %v560
    %571 = vrot.lane.b32.xlu0 %v555, 112
    %v572 = vpop.permute.xlu0 %571
    %573 = vrot.lane.b32.xlu0 %v556, 112
    %v574 = vpop.permute.xlu0 %573
    %575 = vrot.lane.b32.xlu0 %v557, 112
    %v576 = vpop.permute.xlu0 %575
    %577 = vrot.lane.b32.xlu0 %v558, 112
    %v578 = vpop.permute.xlu0 %577
    %v579 = vsel %vm369, %v576, %v578
    %v580 = vsel %vm369, %v574, %v576
    %v581 = vsel %vm369, %v572, %v574
    %v582 = vsel %vm369, %v578, %v572
    %583 = vrot.lane.b32.xlu0 %v555, 111
    %v584 = vpop.permute.xlu0 %583
    %585 = vrot.lane.b32.xlu0 %v556, 111
    %v586 = vpop.permute.xlu0 %585
    %587 = vrot.lane.b32.xlu0 %v557, 111
    %v588 = vpop.permute.xlu0 %587
    %589 = vrot.lane.b32.xlu0 %v558, 111
    %v590 = vpop.permute.xlu0 %589
    %v591 = vsel %vm401, %v588, %v590
    %v592 = vsel %vm401, %v586, %v588
    %v593 = vsel %vm401, %v584, %v586
    %v594 = vsel %vm401, %v590, %v584
    %v595 = vmax.f32 %v555, %v569
    %v596 = vmax.f32 %v556, %v568
    %v597 = vmax.f32 %v557, %v567
    %v598 = vmax.f32 %v558, %v570
    %v599 = vmax.f32 %v581, %v593
    %v600 = vmax.f32 %v580, %v592
    %v601 = vmax.f32 %v579, %v591
    %v602 = vmax.f32 %v582, %v594
    %v603 = vmax.f32 %v595, %v599
    %v604 = vmax.f32 %v596, %v600
    %v605 = vmax.f32 %v597, %v601
    %v606 = vmax.f32 %v598, %v602
    %v607 = vpack.c.bf16 %v603, %v603
    %v608 = vpack.c.bf16 %v604, %v604
    %v609 = vpack.c.bf16 %v605, %v605
    %v610 = vpack.c.bf16 %v606, %v606
    %v611 = vld [vmem:[#allocation5] sm:$0xf]
    %v612 = vld [vmem:[#allocation5 + $0x4] sm:$0xf]
    %v613 = vld [vmem:[#allocation5 + $0x8] sm:$0xf]
    %v614 = vld [vmem:[#allocation5 + $0xc] sm:$0xf]
    %v615 = vld [vmem:[#allocation5 + $0x10] sm:$0xf]
    %v616 = vld [vmem:[#allocation5 + $0x14] sm:$0xf]
    %v617 = vld [vmem:[#allocation5 + $0x18] sm:$0xf]
    %v618 = vld [vmem:[#allocation5 + $0x1c] sm:$0xf]
    %v619 = vld [vmem:[#allocation5 + $0x20] sm:$0xf]
    %v620 = vld [vmem:[#allocation5 + $0x24] sm:$0xf]
    %v621 = vld [vmem:[#allocation5 + $0x28] sm:$0xf]
    %v622 = vld [vmem:[#allocation5 + $0x2c] sm:$0xf]
    %v623 = vld [vmem:[#allocation5 + $0x30] sm:$0xf]
    %v624 = vld [vmem:[#allocation5 + $0x34] sm:$0xf]
    %v625 = vld [vmem:[#allocation5 + $0x38] sm:$0xf]
    %v626 = vld [vmem:[#allocation5 + $0x3c] sm:$0xf]
    %v627 = vld [vmem:[#allocation5 + $0x40] sm:$0xf]
    %v628 = vld [vmem:[#allocation5 + $0x44] sm:$0xf]
    %v629 = vld [vmem:[#allocation5 + $0x48] sm:$0xf]
    %v630 = vld [vmem:[#allocation5 + $0x4c] sm:$0xf]
    %v631 = vld [vmem:[#allocation5 + $0x50] sm:$0xf]
    %v632 = vld [vmem:[#allocation5 + $0x54] sm:$0xf]
    %v633 = vld [vmem:[#allocation5 + $0x58] sm:$0xf]
    %v634 = vld [vmem:[#allocation5 + $0x5c] sm:$0xf]
    %v635 = vld [vmem:[#allocation5 + $0x60] sm:$0xf]
    %v636 = vld [vmem:[#allocation5 + $0x64] sm:$0xf]
    %v637 = vld [vmem:[#allocation5 + $0x68] sm:$0xf]
    %v638 = vld [vmem:[#allocation5 + $0x6c] sm:$0xf]
    %v639 = vld [vmem:[#allocation5 + $0x70] sm:$0xf]
    %v640 = vld [vmem:[#allocation5 + $0x74] sm:$0xf]
    %v641 = vld [vmem:[#allocation5 + $0x78] sm:$0xf]
    %v642 = vld [vmem:[#allocation5 + $0x7c] sm:$0xf]
    %v643 = vld [vmem:[#allocation5 + $0x80] sm:$0xf]
    %v644 = vld [vmem:[#allocation5 + $0x84] sm:$0xf]
    %v645 = vld [vmem:[#allocation5 + $0x88] sm:$0xf]
    %v646 = vld [vmem:[#allocation5 + $0x8c] sm:$0xf]
    %v647 = vld [vmem:[#allocation5 + $0x90] sm:$0xf]
    %v648 = vld [vmem:[#allocation5 + $0x94] sm:$0xf]
    %v649 = vld [vmem:[#allocation5 + $0x98] sm:$0xf]
    %v650 = vld [vmem:[#allocation5 + $0x9c] sm:$0xf]
    %v651 = vld [vmem:[#allocation5 + $0xa0] sm:$0xf]
    %v652 = vld [vmem:[#allocation5 + $0xa4] sm:$0xf]
    %v653 = vld [vmem:[#allocation5 + $0xa8] sm:$0xf]
    %v654 = vld [vmem:[#allocation5 + $0xac] sm:$0xf]
    %v655 = vld [vmem:[#allocation5 + $0xb0] sm:$0xf]
    %v656 = vld [vmem:[#allocation5 + $0xb4] sm:$0xf]
    %v657 = vld [vmem:[#allocation5 + $0xb8] sm:$0xf]
    %v658 = vld [vmem:[#allocation5 + $0xbc] sm:$0xf]
    %v659 = vld [vmem:[#allocation5 + $0xc0] sm:$0xf]
    %v660 = vld [vmem:[#allocation5 + $0xc4] sm:$0xf]
    %v661 = vld [vmem:[#allocation5 + $0xc8] sm:$0xf]
    %v662 = vld [vmem:[#allocation5 + $0xcc] sm:$0xf]
    %v663 = vld [vmem:[#allocation5 + $0xd0] sm:$0xf]
    %v664 = vld [vmem:[#allocation5 + $0xd4] sm:$0xf]
    %v665 = vld [vmem:[#allocation5 + $0xd8] sm:$0xf]
    %v666 = vld [vmem:[#allocation5 + $0xdc] sm:$0xf]
    %v667 = vld [vmem:[#allocation5 + $0xe0] sm:$0xf]
    %v668 = vld [vmem:[#allocation5 + $0xe4] sm:$0xf]
    %v669 = vld [vmem:[#allocation5 + $0xe8] sm:$0xf]
    %v670 = vld [vmem:[#allocation5 + $0xec] sm:$0xf]
    %v671 = vld [vmem:[#allocation5 + $0xf0] sm:$0xf]
    %v672 = vld [vmem:[#allocation5 + $0xf4] sm:$0xf]
    %v673 = vld [vmem:[#allocation5 + $0xf8] sm:$0xf]
    %v674 = vld [vmem:[#allocation5 + $0xfc] sm:$0xf]
    %v739 = vunpack.c.l.b16 %v611
    %v740 = vunpack.c.l.b16 %v612
    %v741 = vunpack.c.l.b16 %v613
    %v742 = vunpack.c.l.b16 %v614
    %v743 = vunpack.c.l.b16 %v615
    %v744 = vunpack.c.l.b16 %v616
    %v745 = vunpack.c.l.b16 %v617
    %v746 = vunpack.c.l.b16 %v618
    %v747 = vunpack.c.l.b16 %v619
    %v748 = vunpack.c.l.b16 %v620
    %v749 = vunpack.c.l.b16 %v621
    %v750 = vunpack.c.l.b16 %v622
    %v751 = vunpack.c.l.b16 %v623
    %v752 = vunpack.c.l.b16 %v624
    %v753 = vunpack.c.l.b16 %v625
    %v754 = vunpack.c.l.b16 %v626
    %v755 = vunpack.c.l.b16 %v627
    %v756 = vunpack.c.l.b16 %v628
    %v757 = vunpack.c.l.b16 %v629
    %v758 = vunpack.c.l.b16 %v630
    %v759 = vunpack.c.l.b16 %v631
    %v760 = vunpack.c.l.b16 %v632
    %v761 = vunpack.c.l.b16 %v633
    %v762 = vunpack.c.l.b16 %v634
    %v763 = vunpack.c.l.b16 %v635
    %v764 = vunpack.c.l.b16 %v636
    %v765 = vunpack.c.l.b16 %v637
    %v766 = vunpack.c.l.b16 %v638
    %v767 = vunpack.c.l.b16 %v639
    %v768 = vunpack.c.l.b16 %v640
    %v769 = vunpack.c.l.b16 %v641
    %v770 = vunpack.c.l.b16 %v642
    %v771 = vunpack.c.l.b16 %v643
    %v772 = vunpack.c.l.b16 %v644
    %v773 = vunpack.c.l.b16 %v645
    %v774 = vunpack.c.l.b16 %v646
    %v775 = vunpack.c.l.b16 %v647
    %v776 = vunpack.c.l.b16 %v648
    %v777 = vunpack.c.l.b16 %v649
    %v778 = vunpack.c.l.b16 %v650
    %v779 = vunpack.c.l.b16 %v651
    %v780 = vunpack.c.l.b16 %v652
    %v781 = vunpack.c.l.b16 %v653
    %v782 = vunpack.c.l.b16 %v654
    %v783 = vunpack.c.l.b16 %v655
    %v784 = vunpack.c.l.b16 %v656
    %v785 = vunpack.c.l.b16 %v657
    %v786 = vunpack.c.l.b16 %v658
    %v787 = vunpack.c.l.b16 %v659
    %v788 = vunpack.c.l.b16 %v660
    %v789 = vunpack.c.l.b16 %v661
    %v790 = vunpack.c.l.b16 %v662
    %v791 = vunpack.c.l.b16 %v663
    %v792 = vunpack.c.l.b16 %v664
    %v793 = vunpack.c.l.b16 %v665
    %v794 = vunpack.c.l.b16 %v666
    %v795 = vunpack.c.l.b16 %v667
    %v796 = vunpack.c.l.b16 %v668
    %v797 = vunpack.c.l.b16 %v669
    %v798 = vunpack.c.l.b16 %v670
    %v799 = vunpack.c.l.b16 %v671
    %v800 = vunpack.c.l.b16 %v672
    %v801 = vunpack.c.l.b16 %v673
    %v802 = vunpack.c.l.b16 %v674
    %v803 = vpack.c.b16 %v740, %v739
    %v804 = vpack.c.b16 %v742, %v741
    %v805 = vpack.c.b16 %v744, %v743
    %v806 = vpack.c.b16 %v746, %v745
    %v807 = vpack.c.b16 %v748, %v747
    %v808 = vpack.c.b16 %v750, %v749
    %v809 = vpack.c.b16 %v752, %v751
    %v810 = vpack.c.b16 %v754, %v753
    %v811 = vpack.c.b16 %v756, %v755
    %v812 = vpack.c.b16 %v758, %v757
    %v813 = vpack.c.b16 %v760, %v759
    %v814 = vpack.c.b16 %v762, %v761
    %v815 = vpack.c.b16 %v764, %v763
    %v816 = vpack.c.b16 %v766, %v765
    %v817 = vpack.c.b16 %v768, %v767
    %v818 = vpack.c.b16 %v770, %v769
    %v819 = vpack.c.b16 %v772, %v771
    %v820 = vpack.c.b16 %v774, %v773
    %v821 = vpack.c.b16 %v776, %v775
    %v822 = vpack.c.b16 %v778, %v777
    %v823 = vpack.c.b16 %v780, %v779
    %v824 = vpack.c.b16 %v782, %v781
    %v825 = vpack.c.b16 %v784, %v783
    %v826 = vpack.c.b16 %v786, %v785
    %v827 = vpack.c.b16 %v788, %v787
    %v828 = vpack.c.b16 %v790, %v789
    %v829 = vpack.c.b16 %v792, %v791
    %v830 = vpack.c.b16 %v794, %v793
    %v831 = vpack.c.b16 %v796, %v795
    %v832 = vpack.c.b16 %v798, %v797
    %v833 = vpack.c.b16 %v800, %v799
    %v834 = vpack.c.b16 %v802, %v801
    %867 = vmatpush.bf16.msra.mxu0 %v810
    %868 = vmatpush.bf16.msra.mxu0 %v809
    %869 = vmatpush.bf16.msra.mxu0 %v808
    %870 = vmatpush.bf16.msra.mxu0 %v807
    %871 = vmatpush.bf16.msra.mxu0 %v806
    %872 = vmatpush.bf16.msra.mxu0 %v805
    %873 = vmatpush.bf16.msra.mxu0 %v804
    %874 = vmatpush.bf16.msra.mxu0 %v803
    %875 = vmatmul.bf16.gmra.mxu0 %v607
    %v876 = vpop.f32.mrf.mxu0
    %v877 = vadd.f32 0.0, %v876
    %v878 = vpop.f32.mrf.mxu0
    %879 = vdwg.mxu0
    %880 = vmatpush.bf16.msra.mxu0 %v818
    %881 = vmatpush.bf16.msra.mxu0 %v817
    %882 = vmatpush.bf16.msra.mxu0 %v816
    %883 = vmatpush.bf16.msra.mxu0 %v815
    %884 = vmatpush.bf16.msra.mxu0 %v814
    %885 = vmatpush.bf16.msra.mxu0 %v813
    %886 = vmatpush.bf16.msra.mxu0 %v812
    %887 = vmatpush.bf16.msra.mxu0 %v811
    %888 = vmatmul.bf16.gmra.mxu0 %v608
    %v889 = vpop.f32.mrf.mxu0
    %v890 = vadd.f32 %v877, %v889
    %v891 = vpop.f32.mrf.mxu0
    %892 = vdwg.mxu0
    %893 = vmatpush.bf16.msra.mxu0 %v826
    %894 = vmatpush.bf16.msra.mxu0 %v825
    %895 = vmatpush.bf16.msra.mxu0 %v824
    %896 = vmatpush.bf16.msra.mxu0 %v823
    %897 = vmatpush.bf16.msra.mxu0 %v822
    %898 = vmatpush.bf16.msra.mxu0 %v821
    %899 = vmatpush.bf16.msra.mxu0 %v820
    %900 = vmatpush.bf16.msra.mxu0 %v819
    %901 = vmatmul.bf16.gmra.mxu0 %v609
    %v902 = vpop.f32.mrf.mxu0
    %v903 = vadd.f32 %v890, %v902
    %v904 = vpop.f32.mrf.mxu0
    %905 = vdwg.mxu0
    %906 = vmatpush.bf16.msra.mxu0 %v834
    %907 = vmatpush.bf16.msra.mxu0 %v833
    %908 = vmatpush.bf16.msra.mxu0 %v832
    %909 = vmatpush.bf16.msra.mxu0 %v831
    %910 = vmatpush.bf16.msra.mxu0 %v830
    %911 = vmatpush.bf16.msra.mxu0 %v829
    %912 = vmatpush.bf16.msra.mxu0 %v828
    %913 = vmatpush.bf16.msra.mxu0 %v827
    %914 = vmatmul.bf16.gmra.mxu0 %v610
    %v915 = vpop.f32.mrf.mxu0
    %v916 = vadd.f32 %v903, %v915
    %v917 = vpop.f32.mrf.mxu0
    %918 = vdwg.mxu0
    %v919 = vld [vmem:[%s2] sm:$0x1]
    %920 = vrot.lane.b32.xlu0 %v916, 9
    %v921 = vpop.permute.xlu0 %920
    %v922 = vperm.slane %v919, 0
    %v923 = vmul.f32 %v921, %v922
    %924 = vst [vmem:[#allocation2] sm:$0xff] %v923
    %v925 = vld [vmem:[%s2 + $0x1] sm:$0x1]
    %926 = vrot.lane.b32.xlu0 %v916, 8
    %v927 = vpop.permute.xlu0 %926
    %v928 = vperm.slane %v925, 0
    %v929 = vmul.f32 %v927, %v928
    %930 = vst [vmem:[#allocation2 + $0x20] sm:$0xff] %v929
    %v931 = vld [vmem:[%s2 + $0x2] sm:$0x1]
    %932 = vrot.lane.b32.xlu0 %v916, 7
    %v933 = vpop.permute.xlu0 %932
    %v934 = vperm.slane %v931, 0
    %v935 = vmul.f32 %v933, %v934
    %936 = vst [vmem:[#allocation2 + $0x40] sm:$0xff] %v935
    %v937 = vld [vmem:[%s2 + $0x3] sm:$0x1]
    %938 = vrot.lane.b32.xlu0 %v916, 1
    %v939 = vpop.permute.xlu0 %938
    %v940 = vperm.slane %v937, 0
    %v941 = vmul.f32 %v939, %v940
    %942 = vst [vmem:[#allocation2 + $0x60] sm:$0xff] %v941
    %943 = vst [vmem:[#allocation2 + $0x80] sm:$0xff] %v916
    %v944 = vld [vmem:[%s2 + $0x5] sm:$0x1]
    %945 = vrot.lane.b32.xlu0 %v916, 127
    %v946 = vpop.permute.xlu0 %945
    %v947 = vperm.slane %v944, 0
    %v948 = vmul.f32 %v946, %v947
    %949 = vst [vmem:[#allocation2 + $0xa0] sm:$0xff] %v948
    %v950 = vld [vmem:[%s2 + $0x6] sm:$0x1]
    %951 = vrot.lane.b32.xlu0 %v916, 121
    %v952 = vpop.permute.xlu0 %951
    %v953 = vperm.slane %v950, 0
    %v954 = vmul.f32 %v952, %v953
    %955 = vst [vmem:[#allocation2 + $0xc0] sm:$0xff] %v954
    %v956 = vld [vmem:[%s2 + $0x7] sm:$0x1]
    %957 = vrot.lane.b32.xlu0 %v916, 120
    %v958 = vpop.permute.xlu0 %957
    %v959 = vperm.slane %v956, 0
    %v960 = vmul.f32 %v958, %v959
    %961 = vst [vmem:[#allocation2 + $0xe0] sm:$0xff] %v960
    %v962 = vld [vmem:[%s2 + $0x8] sm:$0x1]
    %963 = vrot.lane.b32.xlu0 %v916, 119
    %v964 = vpop.permute.xlu0 %963
    %v965 = vperm.slane %v962, 0
    %v966 = vmul.f32 %v964, %v965
    %967 = vst [vmem:[#allocation2 + $0x100] sm:$0xff] %v966
    %v968 = vld [vmem:[#allocation2] sm:$0xff]
    %v969 = vld [vmem:[#allocation2 + $0x20] sm:$0xff]
    %v970 = vld [vmem:[#allocation2 + $0x40] sm:$0xff]
    %v971 = vld [vmem:[#allocation2 + $0x60] sm:$0xff]
    %v972 = vld [vmem:[#allocation2 + $0x80] sm:$0xff]
    %v973 = vld [vmem:[#allocation2 + $0xa0] sm:$0xff]
    %v974 = vld [vmem:[#allocation2 + $0xc0] sm:$0xff]
    %v975 = vld [vmem:[#allocation2 + $0xe0] sm:$0xff]
    %v976 = vld [vmem:[#allocation2 + $0x100] sm:$0xff]
    %v977 = vpack.c.bf16 %v969, %v968
    %v978 = vpack.c.bf16 %v971, %v970
    %v979 = vpack.c.bf16 %v973, %v972
    %v980 = vpack.c.bf16 %v975, %v974
    %v981 = vpack.c.bf16 %v976, %v976
    %v982 = vld [vmem:[%s10] sm:$0xf]
    %v983 = vld [vmem:[%s10 + $0x4] sm:$0xf]
    %v984 = vld [vmem:[%s11] sm:$0xff]
    %v985 = vld [vmem:[%s11 + $0x8] sm:$0xff]
    %987 = vset.pattern.permute.xlu0 0
    %988 = vperm.xlu0 %987, %v984
    %v989 = vpop.permute.xlu0 %988
    %992 = vset.pattern.permute.xlu0 0
    %993 = vperm.xlu0 %992, %v985
    %v994 = vpop.permute.xlu0 %993
    %v998 = vunpack.c.l.b16 %v982
    %v999 = vunpack.c.l.b16 %v983
    %v1000 = vpack.c.b16 %v999, %v998
    %v1002 = vsel %vm486, %v1000, 0
    %v1005 = vsel %vm490, %v981, 0
    %1007 = vmatpush.bf16.msra.mxu0 0
    %1008 = vmatpush.bf16.msra.mxu0 0
    %1009 = vmatpush.bf16.msra.mxu0 0
    %1010 = vmatpush.bf16.msra.mxu0 %v1005
    %1011 = vmatpush.bf16.msra.mxu0 %v980
    %1012 = vmatpush.bf16.msra.mxu0 %v979
    %1013 = vmatpush.bf16.msra.mxu0 %v978
    %1014 = vmatpush.bf16.msra.mxu0 %v977
    %1015 = vmatmul.bf16.gmra.mxu0 %v1002
    %v1016 = vpop.f32.mrf.mxu0
    %v1017 = vadd.f32 %v989, %v1016
    %v1018 = vpop.f32.mrf.mxu0
    %v1019 = vadd.f32 %v994, %v1018
    %1020 = vdwg.mxu0
    %v1021 = vmax.f32 %v1017, 0.0
    %v1022 = vmax.f32 %v1019, 0.0
    %1023 = vrot.lane.b32.xlu0 %v1021, 127
    %v1024 = vpop.permute.xlu0 %1023
    %1025 = vrot.lane.b32.xlu0 %v1022, 127
    %v1026 = vpop.permute.xlu0 %1025
    %1027 = vrot.lane.b32.xlu0 %v1021, 120
    %v1028 = vpop.permute.xlu0 %1027
    %1029 = vrot.lane.b32.xlu0 %v1022, 120
    %v1030 = vpop.permute.xlu0 %1029
    %1031 = vrot.lane.b32.xlu0 %v1021, 119
    %v1032 = vpop.permute.xlu0 %1031
    %1033 = vrot.lane.b32.xlu0 %v1022, 119
    %v1034 = vpop.permute.xlu0 %1033
    %v1035 = vmax.f32 %v1021, %v1024
    %v1036 = vmax.f32 %v1022, %v1026
    %v1037 = vmax.f32 %v1028, %v1032
    %v1038 = vmax.f32 %v1030, %v1034
    %v1039 = vmax.f32 %v1035, %v1037
    %v1040 = vmax.f32 %v1036, %v1038
    %v1041 = vpack.c.bf16 %v1040, %v1039
    %v1042 = vld [vmem:[%s5] sm:$0xf]
    %v1043 = vld [vmem:[%s5 + $0x4] sm:$0xf]
    %v1044 = vld [vmem:[%s5 + $0x8] sm:$0xf]
    %v1045 = vld [vmem:[%s5 + $0xc] sm:$0xf]
    %v1046 = vld [vmem:[%s5 + $0x10] sm:$0xf]
    %v1047 = vld [vmem:[%s5 + $0x14] sm:$0xf]
    %v1048 = vld [vmem:[%s5 + $0x18] sm:$0xf]
    %v1049 = vld [vmem:[%s5 + $0x1c] sm:$0xf]
    %v1050 = vld [vmem:[%s5 + $0x20] sm:$0xf]
    %v1051 = vld [vmem:[%s5 + $0x24] sm:$0xf]
    %v1052 = vld [vmem:[%s5 + $0x28] sm:$0xf]
    %v1053 = vld [vmem:[%s5 + $0x2c] sm:$0xf]
    %v1054 = vld [vmem:[%s5 + $0x30] sm:$0xf]
    %v1055 = vld [vmem:[%s5 + $0x34] sm:$0xf]
    %v1056 = vld [vmem:[%s5 + $0x38] sm:$0xf]
    %v1057 = vld [vmem:[%s5 + $0x3c] sm:$0xf]
    %v1074 = vunpack.c.l.b16 %v1042
    %v1075 = vunpack.c.l.b16 %v1043
    %v1076 = vunpack.c.l.b16 %v1044
    %v1077 = vunpack.c.l.b16 %v1045
    %v1078 = vunpack.c.l.b16 %v1046
    %v1079 = vunpack.c.l.b16 %v1047
    %v1080 = vunpack.c.l.b16 %v1048
    %v1081 = vunpack.c.l.b16 %v1049
    %v1082 = vunpack.c.l.b16 %v1050
    %v1083 = vunpack.c.l.b16 %v1051
    %v1084 = vunpack.c.l.b16 %v1052
    %v1085 = vunpack.c.l.b16 %v1053
    %v1086 = vunpack.c.l.b16 %v1054
    %v1087 = vunpack.c.l.b16 %v1055
    %v1088 = vunpack.c.l.b16 %v1056
    %v1089 = vunpack.c.l.b16 %v1057
    %v1090 = vpack.c.b16 %v1075, %v1074
    %v1091 = vpack.c.b16 %v1077, %v1076
    %v1092 = vpack.c.b16 %v1079, %v1078
    %v1093 = vpack.c.b16 %v1081, %v1080
    %v1094 = vpack.c.b16 %v1083, %v1082
    %v1095 = vpack.c.b16 %v1085, %v1084
    %v1096 = vpack.c.b16 %v1087, %v1086
    %v1097 = vpack.c.b16 %v1089, %v1088
    %1106 = vmatpush.bf16.msra.mxu0 %v1097
    %1107 = vmatpush.bf16.msra.mxu0 %v1096
    %1108 = vmatpush.bf16.msra.mxu0 %v1095
    %1109 = vmatpush.bf16.msra.mxu0 %v1094
    %1110 = vmatpush.bf16.msra.mxu0 %v1093
    %1111 = vmatpush.bf16.msra.mxu0 %v1092
    %1112 = vmatpush.bf16.msra.mxu0 %v1091
    %1113 = vmatpush.bf16.msra.mxu0 %v1090
    %1114 = vmatmul.bf16.gmra.mxu0 %v1041
    %v1115 = vpop.f32.mrf.mxu0
    %v1116 = vadd.f32 0.0, %v1115
    %v1117 = vpop.f32.mrf.mxu0
    %v1118 = vadd.f32 0.0, %v1117
    %1119 = vdwg.mxu0
    %v1120 = vpack.c.bf16 %v1118, %v1116
    %v1121 = vld [vmem:[#allocation3] sm:$0xf]
    %v1122 = vld [vmem:[#allocation3 + $0x4] sm:$0xf]
    %v1123 = vld [vmem:[#allocation3 + $0x8] sm:$0xf]
    %v1124 = vld [vmem:[#allocation3 + $0xc] sm:$0xf]
    %v1129 = vunpack.c.l.b16 %v1121
    %v1130 = vunpack.c.l.b16 %v1122
    %v1131 = vunpack.c.l.b16 %v1123
    %v1132 = vunpack.c.l.b16 %v1124
    %v1133 = vpack.c.b16 %v1130, %v1129
    %v1134 = vpack.c.b16 %v1132, %v1131
    %vm1137 = vcmask 261120
    %v1139 = vsel %vm1137, %v1120, 0
    %1141 = vmatpush.bf16.msra.mxu0 0
    %1142 = vmatpush.bf16.msra.mxu0 0
    %1143 = vmatpush.bf16.msra.mxu0 0
    %1144 = vmatpush.bf16.msra.mxu0 0
    %1145 = vmatpush.bf16.msra.mxu0 0
    %1146 = vmatpush.bf16.msra.mxu0 0
    %1147 = vmatpush.bf16.msra.mxu0 %v1134
    %1148 = vmatpush.bf16.msra.mxu0 %v1133
    %1149 = vmatmul.bf16.gmra.mxu0 %v1139
    %v1150 = vpop.f32.mrf.mxu0
    %v1151 = vadd.f32 0.0, %v1150
    %v1152 = vpop.f32.mrf.mxu0
    %v1153 = vadd.f32 0.0, %v1152
    %1154 = vdwg.mxu0
    %1155 = vst.msk [vmem:[#allocation2] sm:$0xff] %vm1137, %v1151
    %1156 = vst.msk [vmem:[#allocation2 + $0x20] sm:$0xff] %vm1137, %v1153
    %s1157 = scalar_lea.vmem [#allocation3], 16
    %v1158 = vld [vmem:[%s1157] sm:$0xf]
    %v1159 = vld [vmem:[%s1157 + $0x4] sm:$0xf]
    %v1160 = vld [vmem:[%s1157 + $0x8] sm:$0xf]
    %v1161 = vld [vmem:[%s1157 + $0xc] sm:$0xf]
    %v1166 = vunpack.c.l.b16 %v1158
    %v1167 = vunpack.c.l.b16 %v1159
    %v1168 = vunpack.c.l.b16 %v1160
    %v1169 = vunpack.c.l.b16 %v1161
    %v1170 = vpack.c.b16 %v1167, %v1166
    %v1171 = vpack.c.b16 %v1169, %v1168
    %1174 = vmatpush.bf16.msra.mxu0 0
    %1175 = vmatpush.bf16.msra.mxu0 0
    %1176 = vmatpush.bf16.msra.mxu0 0
    %1177 = vmatpush.bf16.msra.mxu0 0
    %1178 = vmatpush.bf16.msra.mxu0 0
    %1179 = vmatpush.bf16.msra.mxu0 0
    %1180 = vmatpush.bf16.msra.mxu0 %v1171
    %1181 = vmatpush.bf16.msra.mxu0 %v1170
    %1182 = vmatmul.bf16.gmra.mxu0 %v1139
    %v1183 = vpop.f32.mrf.mxu0
    %v1184 = vadd.f32 0.0, %v1183
    %v1185 = vpop.f32.mrf.mxu0
    %v1186 = vadd.f32 0.0, %v1185
    %1187 = vdwg.mxu0
    %1188 = vst.msk [vmem:[#allocation2 + $0x40] sm:$0xff] %vm1137, %v1184
    %1189 = vst.msk [vmem:[#allocation2 + $0x60] sm:$0xff] %vm1137, %v1186
    %s1190 = scalar_lea.vmem [#allocation3], 32
    %v1191 = vld [vmem:[%s1190] sm:$0xf]
    %v1192 = vld [vmem:[%s1190 + $0x4] sm:$0xf]
    %v1193 = vld [vmem:[%s1190 + $0x8] sm:$0xf]
    %v1194 = vld [vmem:[%s1190 + $0xc] sm:$0xf]
    %v1199 = vunpack.c.l.b16 %v1191
    %v1200 = vunpack.c.l.b16 %v1192
    %v1201 = vunpack.c.l.b16 %v1193
    %v1202 = vunpack.c.l.b16 %v1194
    %v1203 = vpack.c.b16 %v1200, %v1199
    %v1204 = vpack.c.b16 %v1202, %v1201
    %1207 = vmatpush.bf16.msra.mxu0 0
    %1208 = vmatpush.bf16.msra.mxu0 0
    %1209 = vmatpush.bf16.msra.mxu0 0
    %1210 = vmatpush.bf16.msra.mxu0 0
    %1211 = vmatpush.bf16.msra.mxu0 0
    %1212 = vmatpush.bf16.msra.mxu0 0
    %1213 = vmatpush.bf16.msra.mxu0 %v1204
    %1214 = vmatpush.bf16.msra.mxu0 %v1203
    %1215 = vmatmul.bf16.gmra.mxu0 %v1139
    %v1216 = vpop.f32.mrf.mxu0
    %v1217 = vadd.f32 0.0, %v1216
    %v1218 = vpop.f32.mrf.mxu0
    %v1219 = vadd.f32 0.0, %v1218
    %1220 = vdwg.mxu0
    %1221 = vst.msk [vmem:[#allocation2 + $0x80] sm:$0xff] %vm1137, %v1217
    %1222 = vst.msk [vmem:[#allocation2 + $0xa0] sm:$0xff] %vm1137, %v1219
    %s1223 = scalar_lea.vmem [#allocation3], 48
    %v1224 = vld [vmem:[%s1223] sm:$0xf]
    %v1225 = vld [vmem:[%s1223 + $0x4] sm:$0xf]
    %v1226 = vld [vmem:[%s1223 + $0x8] sm:$0xf]
    %v1227 = vld [vmem:[%s1223 + $0xc] sm:$0xf]
    %v1232 = vunpack.c.l.b16 %v1224
    %v1233 = vunpack.c.l.b16 %v1225
    %v1234 = vunpack.c.l.b16 %v1226
    %v1235 = vunpack.c.l.b16 %v1227
    %v1236 = vpack.c.b16 %v1233, %v1232
    %v1237 = vpack.c.b16 %v1235, %v1234
    %1240 = vmatpush.bf16.msra.mxu0 0
    %1241 = vmatpush.bf16.msra.mxu0 0
    %1242 = vmatpush.bf16.msra.mxu0 0
    %1243 = vmatpush.bf16.msra.mxu0 0
    %1244 = vmatpush.bf16.msra.mxu0 0
    %1245 = vmatpush.bf16.msra.mxu0 0
    %1246 = vmatpush.bf16.msra.mxu0 %v1237
    %1247 = vmatpush.bf16.msra.mxu0 %v1236
    %1248 = vmatmul.bf16.gmra.mxu0 %v1139
    %v1249 = vpop.f32.mrf.mxu0
    %v1250 = vadd.f32 0.0, %v1249
    %v1251 = vpop.f32.mrf.mxu0
    %v1252 = vadd.f32 0.0, %v1251
    %1253 = vdwg.mxu0
    %1254 = vst.msk [vmem:[#allocation2 + $0xc0] sm:$0xff] %vm1137, %v1250
    %1255 = vst.msk [vmem:[#allocation2 + $0xe0] sm:$0xff] %vm1137, %v1252
    %s1256 = scalar_lea.vmem [#allocation3], 64
    %v1257 = vld [vmem:[%s1256] sm:$0xf]
    %v1258 = vld [vmem:[%s1256 + $0x4] sm:$0xf]
    %v1259 = vld [vmem:[%s1256 + $0x8] sm:$0xf]
    %v1260 = vld [vmem:[%s1256 + $0xc] sm:$0xf]
    %v1265 = vunpack.c.l.b16 %v1257
    %v1266 = vunpack.c.l.b16 %v1258
    %v1267 = vunpack.c.l.b16 %v1259
    %v1268 = vunpack.c.l.b16 %v1260
    %v1269 = vpack.c.b16 %v1266, %v1265
    %v1270 = vpack.c.b16 %v1268, %v1267
    %1273 = vmatpush.bf16.msra.mxu0 0
    %1274 = vmatpush.bf16.msra.mxu0 0
    %1275 = vmatpush.bf16.msra.mxu0 0
    %1276 = vmatpush.bf16.msra.mxu0 0
    %1277 = vmatpush.bf16.msra.mxu0 0
    %1278 = vmatpush.bf16.msra.mxu0 0
    %1279 = vmatpush.bf16.msra.mxu0 %v1270
    %1280 = vmatpush.bf16.msra.mxu0 %v1269
    %1281 = vmatmul.bf16.gmra.mxu0 %v1139
    %v1282 = vpop.f32.mrf.mxu0
    %v1283 = vadd.f32 0.0, %v1282
    %v1284 = vpop.f32.mrf.mxu0
    %v1285 = vadd.f32 0.0, %v1284
    %1286 = vdwg.mxu0
    %1287 = vst.msk [vmem:[#allocation2 + $0x100] sm:$0xff] %vm1137, %v1283
    %1288 = vst.msk [vmem:[#allocation2 + $0x120] sm:$0xff] %vm1137, %v1285
    %s1289 = scalar_lea.vmem [#allocation3], 80
    %v1290 = vld [vmem:[%s1289] sm:$0xf]
    %v1291 = vld [vmem:[%s1289 + $0x4] sm:$0xf]
    %v1292 = vld [vmem:[%s1289 + $0x8] sm:$0xf]
    %v1293 = vld [vmem:[%s1289 + $0xc] sm:$0xf]
    %v1298 = vunpack.c.l.b16 %v1290
    %v1299 = vunpack.c.l.b16 %v1291
    %v1300 = vunpack.c.l.b16 %v1292
    %v1301 = vunpack.c.l.b16 %v1293
    %v1302 = vpack.c.b16 %v1299, %v1298
    %v1303 = vpack.c.b16 %v1301, %v1300
    %1306 = vmatpush.bf16.msra.mxu0 0
    %1307 = vmatpush.bf16.msra.mxu0 0
    %1308 = vmatpush.bf16.msra.mxu0 0
    %1309 = vmatpush.bf16.msra.mxu0 0
    %1310 = vmatpush.bf16.msra.mxu0 0
    %1311 = vmatpush.bf16.msra.mxu0 0
    %1312 = vmatpush.bf16.msra.mxu0 %v1303
    %1313 = vmatpush.bf16.msra.mxu0 %v1302
    %1314 = vmatmul.bf16.gmra.mxu0 %v1139
    %v1315 = vpop.f32.mrf.mxu0
    %v1316 = vadd.f32 0.0, %v1315
    %v1317 = vpop.f32.mrf.mxu0
    %v1318 = vadd.f32 0.0, %v1317
    %1319 = vdwg.mxu0
    %1320 = vst.msk [vmem:[#allocation2 + $0x140] sm:$0xff] %vm1137, %v1316
    %1321 = vst.msk [vmem:[#allocation2 + $0x160] sm:$0xff] %vm1137, %v1318
    %s1322 = scalar_lea.vmem [#allocation3], 96
    %v1323 = vld [vmem:[%s1322] sm:$0xf]
    %v1324 = vld [vmem:[%s1322 + $0x4] sm:$0xf]
    %v1325 = vld [vmem:[%s1322 + $0x8] sm:$0xf]
    %v1326 = vld [vmem:[%s1322 + $0xc] sm:$0xf]
    %v1331 = vunpack.c.l.b16 %v1323
    %v1332 = vunpack.c.l.b16 %v1324
    %v1333 = vunpack.c.l.b16 %v1325
    %v1334 = vunpack.c.l.b16 %v1326
    %v1335 = vpack.c.b16 %v1332, %v1331
    %v1336 = vpack.c.b16 %v1334, %v1333
    %1339 = vmatpush.bf16.msra.mxu0 0
    %1340 = vmatpush.bf16.msra.mxu0 0
    %1341 = vmatpush.bf16.msra.mxu0 0
    %1342 = vmatpush.bf16.msra.mxu0 0
    %1343 = vmatpush.bf16.msra.mxu0 0
    %1344 = vmatpush.bf16.msra.mxu0 0
    %1345 = vmatpush.bf16.msra.mxu0 %v1336
    %1346 = vmatpush.bf16.msra.mxu0 %v1335
    %1347 = vmatmul.bf16.gmra.mxu0 %v1139
    %v1348 = vpop.f32.mrf.mxu0
    %v1349 = vadd.f32 0.0, %v1348
    %v1350 = vpop.f32.mrf.mxu0
    %v1351 = vadd.f32 0.0, %v1350
    %1352 = vdwg.mxu0
    %1353 = vst.msk [vmem:[#allocation2 + $0x180] sm:$0xff] %vm1137, %v1349
    %1354 = vst.msk [vmem:[#allocation2 + $0x1a0] sm:$0xff] %vm1137, %v1351
    %s1355 = scalar_lea.vmem [#allocation3], 112
    %v1356 = vld [vmem:[%s1355] sm:$0xf]
    %v1357 = vld [vmem:[%s1355 + $0x4] sm:$0xf]
    %v1358 = vld [vmem:[%s1355 + $0x8] sm:$0xf]
    %v1359 = vld [vmem:[%s1355 + $0xc] sm:$0xf]
    %v1364 = vunpack.c.l.b16 %v1356
    %v1365 = vunpack.c.l.b16 %v1357
    %v1366 = vunpack.c.l.b16 %v1358
    %v1367 = vunpack.c.l.b16 %v1359
    %v1368 = vpack.c.b16 %v1365, %v1364
    %v1369 = vpack.c.b16 %v1367, %v1366
    %1372 = vmatpush.bf16.msra.mxu0 0
    %1373 = vmatpush.bf16.msra.mxu0 0
    %1374 = vmatpush.bf16.msra.mxu0 0
    %1375 = vmatpush.bf16.msra.mxu0 0
    %1376 = vmatpush.bf16.msra.mxu0 0
    %1377 = vmatpush.bf16.msra.mxu0 0
    %1378 = vmatpush.bf16.msra.mxu0 %v1369
    %1379 = vmatpush.bf16.msra.mxu0 %v1368
    %1380 = vmatmul.bf16.gmra.mxu0 %v1139
    %v1381 = vpop.f32.mrf.mxu0
    %v1382 = vadd.f32 0.0, %v1381
    %v1383 = vpop.f32.mrf.mxu0
    %v1384 = vadd.f32 0.0, %v1383
    %1385 = vdwg.mxu0
    %1386 = vst.msk [vmem:[#allocation2 + $0x1c0] sm:$0xff] %vm1137, %v1382
    %1387 = vst.msk [vmem:[#allocation2 + $0x1e0] sm:$0xff] %vm1137, %v1384
    %s1388 = scalar_lea.vmem [#allocation3], 128
    %v1389 = vld [vmem:[%s1388] sm:$0xf]
    %v1390 = vld [vmem:[%s1388 + $0x4] sm:$0xf]
    %v1391 = vld [vmem:[%s1388 + $0x8] sm:$0xf]
    %v1392 = vld [vmem:[%s1388 + $0xc] sm:$0xf]
    %v1397 = vunpack.c.l.b16 %v1389
    %v1398 = vunpack.c.l.b16 %v1390
    %v1399 = vunpack.c.l.b16 %v1391
    %v1400 = vunpack.c.l.b16 %v1392
    %v1401 = vpack.c.b16 %v1398, %v1397
    %v1402 = vpack.c.b16 %v1400, %v1399
    %1405 = vmatpush.bf16.msra.mxu0 0
    %1406 = vmatpush.bf16.msra.mxu0 0
    %1407 = vmatpush.bf16.msra.mxu0 0
    %1408 = vmatpush.bf16.msra.mxu0 0
    %1409 = vmatpush.bf16.msra.mxu0 0
    %1410 = vmatpush.bf16.msra.mxu0 0
    %1411 = vmatpush.bf16.msra.mxu0 %v1402
    %1412 = vmatpush.bf16.msra.mxu0 %v1401
    %1413 = vmatmul.bf16.gmra.mxu0 %v1139
    %v1414 = vpop.f32.mrf.mxu0
    %v1415 = vadd.f32 0.0, %v1414
    %v1416 = vpop.f32.mrf.mxu0
    %v1417 = vadd.f32 0.0, %v1416
    %1418 = vdwg.mxu0
    %1419 = vst.msk [vmem:[#allocation2 + $0x200] sm:$0xff] %vm1137, %v1415
    %1420 = vst.msk [vmem:[#allocation2 + $0x220] sm:$0xff] %vm1137, %v1417
    %v1421 = vld [vmem:[#allocation2] sm:$0xff]
    %v1422 = vld [vmem:[#allocation2 + $0x20] sm:$0xff]
    %v1423 = vld [vmem:[#allocation2 + $0x40] sm:$0xff]
    %v1424 = vld [vmem:[#allocation2 + $0x60] sm:$0xff]
    %v1425 = vld [vmem:[#allocation2 + $0x80] sm:$0xff]
    %v1426 = vld [vmem:[#allocation2 + $0xa0] sm:$0xff]
    %v1427 = vld [vmem:[#allocation2 + $0xc0] sm:$0xff]
    %v1428 = vld [vmem:[#allocation2 + $0xe0] sm:$0xff]
    %v1429 = vld [vmem:[#allocation2 + $0x100] sm:$0xff]
    %v1430 = vld [vmem:[#allocation2 + $0x120] sm:$0xff]
    %v1431 = vld [vmem:[#allocation2 + $0x140] sm:$0xff]
    %v1432 = vld [vmem:[#allocation2 + $0x160] sm:$0xff]
    %v1433 = vld [vmem:[#allocation2 + $0x180] sm:$0xff]
    %v1434 = vld [vmem:[#allocation2 + $0x1a0] sm:$0xff]
    %v1435 = vld [vmem:[#allocation2 + $0x1c0] sm:$0xff]
    %v1436 = vld [vmem:[#allocation2 + $0x1e0] sm:$0xff]
    %v1437 = vld [vmem:[#allocation2 + $0x200] sm:$0xff]
    %v1438 = vld [vmem:[#allocation2 + $0x220] sm:$0xff]
    %v1439 = vpack.c.bf16 %v1422, %v1421
    %v1440 = vpack.c.bf16 %v1424, %v1423
    %v1441 = vpack.c.bf16 %v1426, %v1425
    %v1442 = vpack.c.bf16 %v1428, %v1427
    %v1443 = vpack.c.bf16 %v1430, %v1429
    %v1444 = vpack.c.bf16 %v1432, %v1431
    %v1445 = vpack.c.bf16 %v1434, %v1433
    %v1446 = vpack.c.bf16 %v1436, %v1435
    %v1447 = vpack.c.bf16 %v1438, %v1437
    %v1448 = vld [vmem:[%s12] sm:$0xff]
    %v1449 = vld [vmem:[%s12 + $0x8] sm:$0xff]
    %v1450 = vld [vmem:[%s12 + $0x10] sm:$0xff]
    %v1451 = vld [vmem:[%s12 + $0x18] sm:$0xff]
    %v1452 = vld [vmem:[%s13] sm:$0xff]
    %v1453 = vld [vmem:[%s13 + $0x8] sm:$0xff]
    %v1454 = vld [vmem:[%s13 + $0x10] sm:$0xff]
    %v1455 = vld [vmem:[%s13 + $0x18] sm:$0xff]
    %1457 = vset.pattern.permute.xlu0 0
    %1458 = vperm.xlu0 %1457, %v1452
    %v1459 = vpop.permute.xlu0 %1458
    %1462 = vset.pattern.permute.xlu0 0
    %1463 = vperm.xlu0 %1462, %v1453
    %v1464 = vpop.permute.xlu0 %1463
    %1467 = vset.pattern.permute.xlu0 0
    %1468 = vperm.xlu0 %1467, %v1454
    %v1469 = vpop.permute.xlu0 %1468
    %1472 = vset.pattern.permute.xlu0 0
    %1473 = vperm.xlu0 %1472, %v1455
    %v1474 = vpop.permute.xlu0 %1473
    %v1480 = vunpack.c.l.b16 %v1448
    %v1481 = vunpack.c.h.b16 %v1448
    %v1482 = vunpack.c.l.b16 %v1449
    %v1483 = vunpack.c.h.b16 %v1449
    %v1484 = vunpack.c.l.b16 %v1450
    %v1485 = vunpack.c.h.b16 %v1450
    %v1486 = vunpack.c.l.b16 %v1451
    %v1487 = vunpack.c.h.b16 %v1451
    %v1488 = vpack.c.b16 %v1482, %v1480
    %v1489 = vpack.c.b16 %v1483, %v1481
    %v1490 = vpack.c.b16 %v1486, %v1484
    %v1491 = vpack.c.b16 %v1487, %v1485
    %vm1494 = vcmask 130048
    %v1496 = vsel %vm1494, %v1489, 0
    %v1499 = vsel %vm1494, %v1491, 0
    %1501 = vmatpush.bf16.msra.mxu0 %v1446
    %1502 = vmatpush.bf16.msra.mxu0 %v1445
    %1503 = vmatpush.bf16.msra.mxu0 %v1444
    %1504 = vmatpush.bf16.msra.mxu0 %v1443
    %1505 = vmatpush.bf16.msra.mxu0 %v1442
    %1506 = vmatpush.bf16.msra.mxu0 %v1441
    %1507 = vmatpush.bf16.msra.mxu0 %v1440
    %1508 = vmatpush.bf16.msra.mxu0 %v1439
    %1509 = vmatmul.bf16.gmra.mxu0 %v1488
    %v1510 = vpop.f32.mrf.mxu0
    %v1511 = vadd.f32 %v1459, %v1510
    %v1512 = vpop.f32.mrf.mxu0
    %v1513 = vadd.f32 %v1464, %v1512
    %1514 = vmatmul.bf16.gmra.mxu0 %v1490
    %v1515 = vpop.f32.mrf.mxu0
    %v1516 = vadd.f32 %v1469, %v1515
    %v1517 = vpop.f32.mrf.mxu0
    %v1518 = vadd.f32 %v1474, %v1517
    %1519 = vdwg.mxu0
    %1520 = vmatpush.bf16.msra.mxu0 0
    %1521 = vmatpush.bf16.msra.mxu0 0
    %1522 = vmatpush.bf16.msra.mxu0 0
    %1523 = vmatpush.bf16.msra.mxu0 0
    %1524 = vmatpush.bf16.msra.mxu0 0
    %1525 = vmatpush.bf16.msra.mxu0 0
    %1526 = vmatpush.bf16.msra.mxu0 0
    %1527 = vmatpush.bf16.msra.mxu0 %v1447
    %1528 = vmatmul.bf16.gmra.mxu0 %v1496
    %v1529 = vpop.f32.mrf.mxu0
    %v1530 = vadd.f32 %v1511, %v1529
    %v1531 = vpop.f32.mrf.mxu0
    %v1532 = vadd.f32 %v1513, %v1531
    %1533 = vmatmul.bf16.gmra.mxu0 %v1499
    %v1534 = vpop.f32.mrf.mxu0
    %v1535 = vadd.f32 %v1516, %v1534
    %v1536 = vpop.f32.mrf.mxu0
    %v1537 = vadd.f32 %v1518, %v1536
    %1538 = vdwg.mxu0
    %v1539 = vmax.f32 %v1530, 0.0
    %v1540 = vmax.f32 %v1532, 0.0
    %v1541 = vmax.f32 %v1535, 0.0
    %v1542 = vmax.f32 %v1537, 0.0
    %v1543 = vpack.c.bf16 %v1540, %v1539
    %v1544 = vpack.c.bf16 %v1542, %v1541
    %v1545 = vld [vmem:[#allocation7] sm:$0xf]
    %v1546 = vld [vmem:[#allocation7 + $0x4] sm:$0xf]
    %v1547 = vld [vmem:[#allocation7 + $0x8] sm:$0xf]
    %v1548 = vld [vmem:[#allocation7 + $0xc] sm:$0xf]
    %v1553 = vunpack.c.l.b16 %v1545
    %v1554 = vunpack.c.l.b16 %v1546
    %v1555 = vunpack.c.l.b16 %v1547
    %v1556 = vunpack.c.l.b16 %v1548
    %v1557 = vpack.c.b16 %v1554, %v1553
    %v1558 = vpack.c.b16 %v1556, %v1555
    %v1562 = vsel %vm1137, %v1543, 0
    %v1565 = vsel %vm1137, %v1544, 0
    %1567 = vmatpush.bf16.msra.mxu0 0
    %1568 = vmatpush.bf16.msra.mxu0 0
    %1569 = vmatpush.bf16.msra.mxu0 0
    %1570 = vmatpush.bf16.msra.mxu0 0
    %1571 = vmatpush.bf16.msra.mxu0 0
    %1572 = vmatpush.bf16.msra.mxu0 0
    %1573 = vmatpush.bf16.msra.mxu0 %v1558
    %1574 = vmatpush.bf16.msra.mxu0 %v1557
    %1575 = vmatmul.bf16.gmra.mxu0 %v1562
    %v1576 = vpop.f32.mrf.mxu0
    %v1577 = vadd.f32 0.0, %v1576
    %v1578 = vpop.f32.mrf.mxu0
    %v1579 = vadd.f32 0.0, %v1578
    %1580 = vmatmul.bf16.gmra.mxu0 %v1565
    %v1581 = vpop.f32.mrf.mxu0
    %v1582 = vadd.f32 0.0, %v1581
    %v1583 = vpop.f32.mrf.mxu0
    %v1584 = vadd.f32 0.0, %v1583
    %1585 = vdwg.mxu0
    %v1586 = vld [vmem:[%s2] sm:$0x1]
    %1587 = vrot.lane.b32.xlu0 %v1577, 9
    %v1588 = vpop.permute.xlu0 %1587
    %1589 = vrot.lane.b32.xlu0 %v1579, 9
    %v1590 = vpop.permute.xlu0 %1589
    %1591 = vrot.lane.b32.xlu0 %v1582, 9
    %v1592 = vpop.permute.xlu0 %1591
    %1593 = vrot.lane.b32.xlu0 %v1584, 9
    %v1594 = vpop.permute.xlu0 %1593
    %v1595 = vperm.slane %v1586, 0
    %v1596 = vmul.f32 %v1588, %v1595
    %v1597 = vmul.f32 %v1590, %v1595
    %v1598 = vmul.f32 %v1592, %v1595
    %v1599 = vmul.f32 %v1594, %v1595
    %1600 = vst [vmem:[#allocation2] sm:$0xff] %v1596
    %1601 = vst [vmem:[#allocation2 + $0x20] sm:$0xff] %v1597
    %1602 = vst [vmem:[#allocation2 + $0x40] sm:$0xff] %v1598
    %1603 = vst [vmem:[#allocation2 + $0x60] sm:$0xff] %v1599
    %1604 = vrot.lane.b32.xlu0 %v1021, 9
    %v1605 = vpop.permute.xlu0 %1604
    %1606 = vrot.lane.b32.xlu0 %v1022, 9
    %v1607 = vpop.permute.xlu0 %1606
    %v1608 = vmul.f32 %v1605, %v1595
    %v1609 = vmul.f32 %v1607, %v1595
    %1610 = vst [vmem:[#allocation2 + $0x80] sm:$0xff] %v1608
    %1611 = vst [vmem:[#allocation2 + $0xa0] sm:$0xff] %v1609
    %v1612 = vld [vmem:[%s2 + $0x1] sm:$0x1]
    %1613 = vrot.lane.b32.xlu0 %v1577, 8
    %v1614 = vpop.permute.xlu0 %1613
    %1615 = vrot.lane.b32.xlu0 %v1579, 8
    %v1616 = vpop.permute.xlu0 %1615
    %1617 = vrot.lane.b32.xlu0 %v1582, 8
    %v1618 = vpop.permute.xlu0 %1617
    %1619 = vrot.lane.b32.xlu0 %v1584, 8
    %v1620 = vpop.permute.xlu0 %1619
    %v1621 = vperm.slane %v1612, 0
    %v1622 = vmul.f32 %v1614, %v1621
    %v1623 = vmul.f32 %v1616, %v1621
    %v1624 = vmul.f32 %v1618, %v1621
    %v1625 = vmul.f32 %v1620, %v1621
    %1626 = vst [vmem:[#allocation2 + $0xc0] sm:$0xff] %v1622
    %1627 = vst [vmem:[#allocation2 + $0xe0] sm:$0xff] %v1623
    %1628 = vst [vmem:[#allocation2 + $0x100] sm:$0xff] %v1624
    %1629 = vst [vmem:[#allocation2 + $0x120] sm:$0xff] %v1625
    %1630 = vrot.lane.b32.xlu0 %v1021, 8
    %v1631 = vpop.permute.xlu0 %1630
    %1632 = vrot.lane.b32.xlu0 %v1022, 8
    %v1633 = vpop.permute.xlu0 %1632
    %v1634 = vmul.f32 %v1631, %v1621
    %v1635 = vmul.f32 %v1633, %v1621
    %1636 = vst [vmem:[#allocation2 + $0x140] sm:$0xff] %v1634
    %1637 = vst [vmem:[#allocation2 + $0x160] sm:$0xff] %v1635
    %v1638 = vld [vmem:[%s2 + $0x2] sm:$0x1]
    %1639 = vrot.lane.b32.xlu0 %v1577, 7
    %v1640 = vpop.permute.xlu0 %1639
    %1641 = vrot.lane.b32.xlu0 %v1579, 7
    %v1642 = vpop.permute.xlu0 %1641
    %1643 = vrot.lane.b32.xlu0 %v1582, 7
    %v1644 = vpop.permute.xlu0 %1643
    %1645 = vrot.lane.b32.xlu0 %v1584, 7
    %v1646 = vpop.permute.xlu0 %1645
    %v1647 = vperm.slane %v1638, 0
    %v1648 = vmul.f32 %v1640, %v1647
    %v1649 = vmul.f32 %v1642, %v1647
    %v1650 = vmul.f32 %v1644, %v1647
    %v1651 = vmul.f32 %v1646, %v1647
    %1652 = vst [vmem:[#allocation2 + $0x180] sm:$0xff] %v1648
    %1653 = vst [vmem:[#allocation2 + $0x1a0] sm:$0xff] %v1649
    %1654 = vst [vmem:[#allocation2 + $0x1c0] sm:$0xff] %v1650
    %1655 = vst [vmem:[#allocation2 + $0x1e0] sm:$0xff] %v1651
    %1656 = vrot.lane.b32.xlu0 %v1021, 7
    %v1657 = vpop.permute.xlu0 %1656
    %1658 = vrot.lane.b32.xlu0 %v1022, 7
    %v1659 = vpop.permute.xlu0 %1658
    %v1660 = vmul.f32 %v1657, %v1647
    %v1661 = vmul.f32 %v1659, %v1647
    %1662 = vst [vmem:[#allocation2 + $0x200] sm:$0xff] %v1660
    %1663 = vst [vmem:[#allocation2 + $0x220] sm:$0xff] %v1661
    %v1664 = vld [vmem:[%s2 + $0x3] sm:$0x1]
    %1665 = vrot.lane.b32.xlu0 %v1577, 1
    %v1666 = vpop.permute.xlu0 %1665
    %1667 = vrot.lane.b32.xlu0 %v1579, 1
    %v1668 = vpop.permute.xlu0 %1667
    %1669 = vrot.lane.b32.xlu0 %v1582, 1
    %v1670 = vpop.permute.xlu0 %1669
    %1671 = vrot.lane.b32.xlu0 %v1584, 1
    %v1672 = vpop.permute.xlu0 %1671
    %v1673 = vperm.slane %v1664, 0
    %v1674 = vmul.f32 %v1666, %v1673
    %v1675 = vmul.f32 %v1668, %v1673
    %v1676 = vmul.f32 %v1670, %v1673
    %v1677 = vmul.f32 %v1672, %v1673
    %1678 = vst [vmem:[#allocation2 + $0x240] sm:$0xff] %v1674
    %1679 = vst [vmem:[#allocation2 + $0x260] sm:$0xff] %v1675
    %1680 = vst [vmem:[#allocation2 + $0x280] sm:$0xff] %v1676
    %1681 = vst [vmem:[#allocation2 + $0x2a0] sm:$0xff] %v1677
    %1682 = vrot.lane.b32.xlu0 %v1021, 1
    %v1683 = vpop.permute.xlu0 %1682
    %1684 = vrot.lane.b32.xlu0 %v1022, 1
    %v1685 = vpop.permute.xlu0 %1684
    %v1686 = vmul.f32 %v1683, %v1673
    %v1687 = vmul.f32 %v1685, %v1673
    %1688 = vst [vmem:[#allocation2 + $0x2c0] sm:$0xff] %v1686
    %1689 = vst [vmem:[#allocation2 + $0x2e0] sm:$0xff] %v1687
    %1690 = vst [vmem:[#allocation2 + $0x300] sm:$0xff] %v1577
    %1691 = vst [vmem:[#allocation2 + $0x320] sm:$0xff] %v1579
    %1692 = vst [vmem:[#allocation2 + $0x340] sm:$0xff] %v1582
    %1693 = vst [vmem:[#allocation2 + $0x360] sm:$0xff] %v1584
    %1694 = vst [vmem:[#allocation2 + $0x380] sm:$0xff] %v1021
    %1695 = vst [vmem:[#allocation2 + $0x3a0] sm:$0xff] %v1022
    %v1696 = vld [vmem:[%s2 + $0x5] sm:$0x1]
    %1697 = vrot.lane.b32.xlu0 %v1577, 127
    %v1698 = vpop.permute.xlu0 %1697
    %1699 = vrot.lane.b32.xlu0 %v1579, 127
    %v1700 = vpop.permute.xlu0 %1699
    %1701 = vrot.lane.b32.xlu0 %v1582, 127
    %v1702 = vpop.permute.xlu0 %1701
    %1703 = vrot.lane.b32.xlu0 %v1584, 127
    %v1704 = vpop.permute.xlu0 %1703
    %v1705 = vperm.slane %v1696, 0
    %v1706 = vmul.f32 %v1698, %v1705
    %v1707 = vmul.f32 %v1700, %v1705
    %v1708 = vmul.f32 %v1702, %v1705
    %v1709 = vmul.f32 %v1704, %v1705
    %1710 = vst [vmem:[#allocation2 + $0x3c0] sm:$0xff] %v1706
    %1711 = vst [vmem:[#allocation2 + $0x3e0] sm:$0xff] %v1707
    %1712 = vst [vmem:[#allocation2 + $0x400] sm:$0xff] %v1708
    %1713 = vst [vmem:[#allocation2 + $0x420] sm:$0xff] %v1709
    %v1714 = vmul.f32 %v1024, %v1705
    %v1715 = vmul.f32 %v1026, %v1705
    %1716 = vst [vmem:[#allocation2 + $0x440] sm:$0xff] %v1714
    %1717 = vst [vmem:[#allocation2 + $0x460] sm:$0xff] %v1715
    %v1718 = vld [vmem:[%s2 + $0x6] sm:$0x1]
    %1719 = vrot.lane.b32.xlu0 %v1577, 121
    %v1720 = vpop.permute.xlu0 %1719
    %1721 = vrot.lane.b32.xlu0 %v1579, 121
    %v1722 = vpop.permute.xlu0 %1721
    %1723 = vrot.lane.b32.xlu0 %v1582, 121
    %v1724 = vpop.permute.xlu0 %1723
    %1725 = vrot.lane.b32.xlu0 %v1584, 121
    %v1726 = vpop.permute.xlu0 %1725
    %v1727 = vperm.slane %v1718, 0
    %v1728 = vmul.f32 %v1720, %v1727
    %v1729 = vmul.f32 %v1722, %v1727
    %v1730 = vmul.f32 %v1724, %v1727
    %v1731 = vmul.f32 %v1726, %v1727
    %1732 = vst [vmem:[#allocation2 + $0x480] sm:$0xff] %v1728
    %1733 = vst [vmem:[#allocation2 + $0x4a0] sm:$0xff] %v1729
    %1734 = vst [vmem:[#allocation2 + $0x4c0] sm:$0xff] %v1730
    %1735 = vst [vmem:[#allocation2 + $0x4e0] sm:$0xff] %v1731
    %1736 = vrot.lane.b32.xlu0 %v1021, 121
    %v1737 = vpop.permute.xlu0 %1736
    %1738 = vrot.lane.b32.xlu0 %v1022, 121
    %v1739 = vpop.permute.xlu0 %1738
    %v1740 = vmul.f32 %v1737, %v1727
    %v1741 = vmul.f32 %v1739, %v1727
    %1742 = vst [vmem:[#allocation2 + $0x500] sm:$0xff] %v1740
    %1743 = vst [vmem:[#allocation2 + $0x520] sm:$0xff] %v1741
    %v1744 = vld [vmem:[%s2 + $0x7] sm:$0x1]
    %1745 = vrot.lane.b32.xlu0 %v1577, 120
    %v1746 = vpop.permute.xlu0 %1745
    %1747 = vrot.lane.b32.xlu0 %v1579, 120
    %v1748 = vpop.permute.xlu0 %1747
    %1749 = vrot.lane.b32.xlu0 %v1582, 120
    %v1750 = vpop.permute.xlu0 %1749
    %1751 = vrot.lane.b32.xlu0 %v1584, 120
    %v1752 = vpop.permute.xlu0 %1751
    %v1753 = vperm.slane %v1744, 0
    %v1754 = vmul.f32 %v1746, %v1753
    %v1755 = vmul.f32 %v1748, %v1753
    %v1756 = vmul.f32 %v1750, %v1753
    %v1757 = vmul.f32 %v1752, %v1753
    %1758 = vst [vmem:[#allocation2 + $0x540] sm:$0xff] %v1754
    %1759 = vst [vmem:[#allocation2 + $0x560] sm:$0xff] %v1755
    %1760 = vst [vmem:[#allocation2 + $0x580] sm:$0xff] %v1756
    %1761 = vst [vmem:[#allocation2 + $0x5a0] sm:$0xff] %v1757
    %v1762 = vmul.f32 %v1028, %v1753
    %v1763 = vmul.f32 %v1030, %v1753
    %1764 = vst [vmem:[#allocation2 + $0x5c0] sm:$0xff] %v1762
    %1765 = vst [vmem:[#allocation2 + $0x5e0] sm:$0xff] %v1763
    %v1766 = vld [vmem:[%s2 + $0x8] sm:$0x1]
    %1767 = vrot.lane.b32.xlu0 %v1577, 119
    %v1768 = vpop.permute.xlu0 %1767
    %1769 = vrot.lane.b32.xlu0 %v1579, 119
    %v1770 = vpop.permute.xlu0 %1769
    %1771 = vrot.lane.b32.xlu0 %v1582, 119
    %v1772 = vpop.permute.xlu0 %1771
    %1773 = vrot.lane.b32.xlu0 %v1584, 119
    %v1774 = vpop.permute.xlu0 %1773
    %v1775 = vperm.slane %v1766, 0
    %v1776 = vmul.f32 %v1768, %v1775
    %v1777 = vmul.f32 %v1770, %v1775
    %v1778 = vmul.f32 %v1772, %v1775
    %v1779 = vmul.f32 %v1774, %v1775
    %1780 = vst [vmem:[#allocation2 + $0x600] sm:$0xff] %v1776
    %1781 = vst [vmem:[#allocation2 + $0x620] sm:$0xff] %v1777
    %1782 = vst [vmem:[#allocation2 + $0x640] sm:$0xff] %v1778
    %1783 = vst [vmem:[#allocation2 + $0x660] sm:$0xff] %v1779
    %v1784 = vmul.f32 %v1032, %v1775
    %v1785 = vmul.f32 %v1034, %v1775
    %1786 = vst [vmem:[#allocation2 + $0x680] sm:$0xff] %v1784
    %1787 = vst [vmem:[#allocation2 + $0x6a0] sm:$0xff] %v1785
    %v1788 = vld [vmem:[#allocation2] sm:$0xff]
    %v1789 = vld [vmem:[#allocation2 + $0x20] sm:$0xff]
    %v1790 = vld [vmem:[#allocation2 + $0x40] sm:$0xff]
    %v1791 = vld [vmem:[#allocation2 + $0x60] sm:$0xff]
    %v1792 = vld [vmem:[#allocation2 + $0x80] sm:$0xff]
    %v1793 = vld [vmem:[#allocation2 + $0xa0] sm:$0xff]
    %v1794 = vld [vmem:[#allocation2 + $0xc0] sm:$0xff]
    %v1795 = vld [vmem:[#allocation2 + $0xe0] sm:$0xff]
    %v1796 = vld [vmem:[#allocation2 + $0x100] sm:$0xff]
    %v1797 = vld [vmem:[#allocation2 + $0x120] sm:$0xff]
    %v1798 = vld [vmem:[#allocation2 + $0x140] sm:$0xff]
    %v1799 = vld [vmem:[#allocation2 + $0x160] sm:$0xff]
    %v1800 = vld [vmem:[#allocation2 + $0x180] sm:$0xff]
    %v1801 = vld [vmem:[#allocation2 + $0x1a0] sm:$0xff]
    %v1802 = vld [vmem:[#allocation2 + $0x1c0] sm:$0xff]
    %v1803 = vld [vmem:[#allocation2 + $0x1e0] sm:$0xff]
    %v1804 = vld [vmem:[#allocation2 + $0x200] sm:$0xff]
    %v1805 = vld [vmem:[#allocation2 + $0x220] sm:$0xff]
    %v1806 = vld [vmem:[#allocation2 + $0x240] sm:$0xff]
    %v1807 = vld [vmem:[#allocation2 + $0x260] sm:$0xff]
    %v1808 = vld [vmem:[#allocation2 + $0x280] sm:$0xff]
    %v1809 = vld [vmem:[#allocation2 + $0x2a0] sm:$0xff]
    %v1810 = vld [vmem:[#allocation2 + $0x2c0] sm:$0xff]
    %v1811 = vld [vmem:[#allocation2 + $0x2e0] sm:$0xff]
    %v1812 = vld [vmem:[#allocation2 + $0x300] sm:$0xff]
    %v1813 = vld [vmem:[#allocation2 + $0x320] sm:$0xff]
    %v1814 = vld [vmem:[#allocation2 + $0x340] sm:$0xff]
    %v1815 = vld [vmem:[#allocation2 + $0x360] sm:$0xff]
    %v1816 = vld [vmem:[#allocation2 + $0x380] sm:$0xff]
    %v1817 = vld [vmem:[#allocation2 + $0x3a0] sm:$0xff]
    %v1818 = vld [vmem:[#allocation2 + $0x3c0] sm:$0xff]
    %v1819 = vld [vmem:[#allocation2 + $0x3e0] sm:$0xff]
    %v1820 = vld [vmem:[#allocation2 + $0x400] sm:$0xff]
    %v1821 = vld [vmem:[#allocation2 + $0x420] sm:$0xff]
    %v1822 = vld [vmem:[#allocation2 + $0x440] sm:$0xff]
    %v1823 = vld [vmem:[#allocation2 + $0x460] sm:$0xff]
    %v1824 = vld [vmem:[#allocation2 + $0x480] sm:$0xff]
    %v1825 = vld [vmem:[#allocation2 + $0x4a0] sm:$0xff]
    %v1826 = vld [vmem:[#allocation2 + $0x4c0] sm:$0xff]
    %v1827 = vld [vmem:[#allocation2 + $0x4e0] sm:$0xff]
    %v1828 = vld [vmem:[#allocation2 + $0x500] sm:$0xff]
    %v1829 = vld [vmem:[#allocation2 + $0x520] sm:$0xff]
    %v1830 = vld [vmem:[#allocation2 + $0x540] sm:$0xff]
    %v1831 = vld [vmem:[#allocation2 + $0x560] sm:$0xff]
    %v1832 = vld [vmem:[#allocation2 + $0x580] sm:$0xff]
    %v1833 = vld [vmem:[#allocation2 + $0x5a0] sm:$0xff]
    %v1834 = vld [vmem:[#allocation2 + $0x5c0] sm:$0xff]
    %v1835 = vld [vmem:[#allocation2 + $0x5e0] sm:$0xff]
    %v1836 = vld [vmem:[#allocation2 + $0x600] sm:$0xff]
    %v1837 = vld [vmem:[#allocation2 + $0x620] sm:$0xff]
    %v1838 = vld [vmem:[#allocation2 + $0x640] sm:$0xff]
    %v1839 = vld [vmem:[#allocation2 + $0x660] sm:$0xff]
    %v1840 = vld [vmem:[#allocation2 + $0x680] sm:$0xff]
    %v1841 = vld [vmem:[#allocation2 + $0x6a0] sm:$0xff]
    %v1842 = vpack.c.bf16 %v1789, %v1788
    %v1843 = vpack.c.bf16 %v1791, %v1790
    %v1844 = vpack.c.bf16 %v1793, %v1792
    %v1845 = vpack.c.bf16 %v1795, %v1794
    %v1846 = vpack.c.bf16 %v1797, %v1796
    %v1847 = vpack.c.bf16 %v1799, %v1798
    %v1848 = vpack.c.bf16 %v1801, %v1800
    %v1849 = vpack.c.bf16 %v1803, %v1802
    %v1850 = vpack.c.bf16 %v1805, %v1804
    %v1851 = vpack.c.bf16 %v1807, %v1806
    %v1852 = vpack.c.bf16 %v1809, %v1808
    %v1853 = vpack.c.bf16 %v1811, %v1810
    %v1854 = vpack.c.bf16 %v1813, %v1812
    %v1855 = vpack.c.bf16 %v1815, %v1814
    %v1856 = vpack.c.bf16 %v1817, %v1816
    %v1857 = vpack.c.bf16 %v1819, %v1818
    %v1858 = vpack.c.bf16 %v1821, %v1820
    %v1859 = vpack.c.bf16 %v1823, %v1822
    %v1860 = vpack.c.bf16 %v1825, %v1824
    %v1861 = vpack.c.bf16 %v1827, %v1826
    %v1862 = vpack.c.bf16 %v1829, %v1828
    %v1863 = vpack.c.bf16 %v1831, %v1830
    %v1864 = vpack.c.bf16 %v1833, %v1832
    %v1865 = vpack.c.bf16 %v1835, %v1834
    %v1866 = vpack.c.bf16 %v1837, %v1836
    %v1867 = vpack.c.bf16 %v1839, %v1838
    %v1868 = vpack.c.bf16 %v1841, %v1840
    %v1869 = vld [vmem:[#allocation10] sm:$0xff]
    %v1870 = vld [vmem:[#allocation10 + $0x8] sm:$0xff]
    %v1871 = vld [vmem:[#allocation10 + $0x10] sm:$0xff]
    %v1872 = vld [vmem:[#allocation10 + $0x18] sm:$0xff]
    %v1873 = vld [vmem:[%s15] sm:$0xff]
    %v1874 = vld [vmem:[%s15 + $0x8] sm:$0xff]
    %1876 = vset.pattern.permute.xlu0 0
    %1877 = vperm.xlu0 %1876, %v1873
    %v1878 = vpop.permute.xlu0 %1877
    %1881 = vset.pattern.permute.xlu0 0
    %1882 = vperm.xlu0 %1881, %v1874
    %v1883 = vpop.permute.xlu0 %1882
    %v1889 = vunpack.c.l.b16 %v1869
    %v1890 = vunpack.c.h.b16 %v1869
    %v1891 = vunpack.c.l.b16 %v1870
    %v1892 = vunpack.c.h.b16 %v1870
    %v1893 = vunpack.c.l.b16 %v1871
    %v1894 = vunpack.c.h.b16 %v1871
    %v1895 = vunpack.c.l.b16 %v1872
    %v1896 = vunpack.c.h.b16 %v1872
    %v1897 = vpack.c.b16 %v1893, %v1889
    %v1898 = vpack.c.b16 %v1894, %v1890
    %v1899 = vpack.c.b16 %v1895, %v1891
    %v1900 = vpack.c.b16 %v1896, %v1892
    %vm1904 = vcmask 392192
    %v1906 = vsel %vm1904, %v1900, 0
    %1908 = vmatpush.bf16.msra.mxu0 %v1849
    %1909 = vmatpush.bf16.msra.mxu0 %v1848
    %1910 = vmatpush.bf16.msra.mxu0 %v1847
    %1911 = vmatpush.bf16.msra.mxu0 %v1846
    %1912 = vmatpush.bf16.msra.mxu0 %v1845
    %1913 = vmatpush.bf16.msra.mxu0 %v1844
    %1914 = vmatpush.bf16.msra.mxu0 %v1843
    %1915 = vmatpush.bf16.msra.mxu0 %v1842
    %1916 = vmatmul.bf16.gmra.mxu0 %v1897
    %v1917 = vpop.f32.mrf.mxu0
    %v1918 = vadd.f32 %v1878, %v1917
    %v1919 = vpop.f32.mrf.mxu0
    %v1920 = vadd.f32 %v1883, %v1919
    %1921 = vdwg.mxu0
    %1922 = vmatpush.bf16.msra.mxu0 %v1857
    %1923 = vmatpush.bf16.msra.mxu0 %v1856
    %1924 = vmatpush.bf16.msra.mxu0 %v1855
    %1925 = vmatpush.bf16.msra.mxu0 %v1854
    %1926 = vmatpush.bf16.msra.mxu0 %v1853
    %1927 = vmatpush.bf16.msra.mxu0 %v1852
    %1928 = vmatpush.bf16.msra.mxu0 %v1851
    %1929 = vmatpush.bf16.msra.mxu0 %v1850
    %1930 = vmatmul.bf16.gmra.mxu0 %v1898
    %v1931 = vpop.f32.mrf.mxu0
    %v1932 = vadd.f32 %v1918, %v1931
    %v1933 = vpop.f32.mrf.mxu0
    %v1934 = vadd.f32 %v1920, %v1933
    %1935 = vdwg.mxu0
    %1936 = vmatpush.bf16.msra.mxu0 %v1865
    %1937 = vmatpush.bf16.msra.mxu0 %v1864
    %1938 = vmatpush.bf16.msra.mxu0 %v1863
    %1939 = vmatpush.bf16.msra.mxu0 %v1862
    %1940 = vmatpush.bf16.msra.mxu0 %v1861
    %1941 = vmatpush.bf16.msra.mxu0 %v1860
    %1942 = vmatpush.bf16.msra.mxu0 %v1859
    %1943 = vmatpush.bf16.msra.mxu0 %v1858
    %1944 = vmatmul.bf16.gmra.mxu0 %v1899
    %v1945 = vpop.f32.mrf.mxu0
    %v1946 = vadd.f32 %v1932, %v1945
    %v1947 = vpop.f32.mrf.mxu0
    %v1948 = vadd.f32 %v1934, %v1947
    %1949 = vdwg.mxu0
    %1950 = vmatpush.bf16.msra.mxu0 0
    %1951 = vmatpush.bf16.msra.mxu0 0
    %1952 = vmatpush.bf16.msra.mxu0 0
    %1953 = vmatpush.bf16.msra.mxu0 0
    %1954 = vmatpush.bf16.msra.mxu0 0
    %1955 = vmatpush.bf16.msra.mxu0 %v1868
    %1956 = vmatpush.bf16.msra.mxu0 %v1867
    %1957 = vmatpush.bf16.msra.mxu0 %v1866
    %1958 = vmatmul.bf16.gmra.mxu0 %v1906
    %v1959 = vpop.f32.mrf.mxu0
    %v1960 = vadd.f32 %v1946, %v1959
    %v1961 = vpop.f32.mrf.mxu0
    %v1962 = vadd.f32 %v1948, %v1961
    %1963 = vdwg.mxu0
    %v1964 = vmax.f32 %v1960, 0.0
    %v1965 = vmax.f32 %v1962, 0.0
    %v1966 = vpack.c.bf16 %v1965, %v1964
    %v1967 = vld [vmem:[#allocation8] sm:$0xff]
    %v1968 = vld [vmem:[#allocation8 + $0x8] sm:$0xff]
    %v1969 = vld [vmem:[#allocation8 + $0x10] sm:$0xff]
    %v1970 = vld [vmem:[#allocation8 + $0x18] sm:$0xff]
    %v1971 = vld [vmem:[#allocation8 + $0x20] sm:$0xff]
    %v1972 = vld [vmem:[#allocation8 + $0x28] sm:$0xff]
    %v1973 = vld [vmem:[#allocation8 + $0x30] sm:$0xff]
    %v1974 = vld [vmem:[#allocation8 + $0x38] sm:$0xff]
    %v1975 = vld [vmem:[#allocation8 + $0x40] sm:$0xff]
    %v1976 = vld [vmem:[#allocation8 + $0x48] sm:$0xff]
    %v1977 = vld [vmem:[#allocation8 + $0x50] sm:$0xff]
    %v1978 = vld [vmem:[#allocation8 + $0x58] sm:$0xff]
    %v1979 = vld [vmem:[#allocation8 + $0x60] sm:$0xff]
    %v1980 = vld [vmem:[#allocation8 + $0x68] sm:$0xff]
    %v1981 = vld [vmem:[#allocation8 + $0x70] sm:$0xff]
    %v1982 = vld [vmem:[#allocation8 + $0x78] sm:$0xff]
    %v1983 = vld [vmem:[#allocation8 + $0x80] sm:$0xff]
    %v1984 = vld [vmem:[#allocation8 + $0x88] sm:$0xff]
    %v1985 = vld [vmem:[#allocation8 + $0x90] sm:$0xff]
    %v1986 = vld [vmem:[#allocation8 + $0x98] sm:$0xff]
    %v1987 = vld [vmem:[#allocation8 + $0xa0] sm:$0xff]
    %v1988 = vld [vmem:[#allocation8 + $0xa8] sm:$0xff]
    %v1989 = vld [vmem:[#allocation8 + $0xb0] sm:$0xff]
    %v1990 = vld [vmem:[#allocation8 + $0xb8] sm:$0xff]
    %v1991 = vld [vmem:[#allocation8 + $0xc0] sm:$0xff]
    %v1992 = vld [vmem:[#allocation8 + $0xc8] sm:$0xff]
    %v1993 = vld [vmem:[#allocation8 + $0xd0] sm:$0xff]
    %v1994 = vld [vmem:[#allocation8 + $0xd8] sm:$0xff]
    %v1995 = vld [vmem:[#allocation8 + $0xe0] sm:$0xff]
    %v1996 = vld [vmem:[#allocation8 + $0xe8] sm:$0xff]
    %v1997 = vld [vmem:[#allocation8 + $0xf0] sm:$0xff]
    %v1998 = vld [vmem:[#allocation8 + $0xf8] sm:$0xff]
    %v2031 = vunpack.c.l.b16 %v1967
    %v2032 = vunpack.c.h.b16 %v1967
    %v2033 = vunpack.c.l.b16 %v1968
    %v2034 = vunpack.c.h.b16 %v1968
    %v2035 = vunpack.c.l.b16 %v1969
    %v2036 = vunpack.c.h.b16 %v1969
    %v2037 = vunpack.c.l.b16 %v1970
    %v2038 = vunpack.c.h.b16 %v1970
    %v2039 = vunpack.c.l.b16 %v1971
    %v2040 = vunpack.c.h.b16 %v1971
    %v2041 = vunpack.c.l.b16 %v1972
    %v2042 = vunpack.c.h.b16 %v1972
    %v2043 = vunpack.c.l.b16 %v1973
    %v2044 = vunpack.c.h.b16 %v1973
    %v2045 = vunpack.c.l.b16 %v1974
    %v2046 = vunpack.c.h.b16 %v1974
    %v2047 = vunpack.c.l.b16 %v1975
    %v2048 = vunpack.c.h.b16 %v1975
    %v2049 = vunpack.c.l.b16 %v1976
    %v2050 = vunpack.c.h.b16 %v1976
    %v2051 = vunpack.c.l.b16 %v1977
    %v2052 = vunpack.c.h.b16 %v1977
    %v2053 = vunpack.c.l.b16 %v1978
    %v2054 = vunpack.c.h.b16 %v1978
    %v2055 = vunpack.c.l.b16 %v1979
    %v2056 = vunpack.c.h.b16 %v1979
    %v2057 = vunpack.c.l.b16 %v1980
    %v2058 = vunpack.c.h.b16 %v1980
    %v2059 = vunpack.c.l.b16 %v1981
    %v2060 = vunpack.c.h.b16 %v1981
    %v2061 = vunpack.c.l.b16 %v1982
    %v2062 = vunpack.c.h.b16 %v1982
    %v2063 = vunpack.c.l.b16 %v1983
    %v2064 = vunpack.c.h.b16 %v1983
    %v2065 = vunpack.c.l.b16 %v1984
    %v2066 = vunpack.c.h.b16 %v1984
    %v2067 = vunpack.c.l.b16 %v1985
    %v2068 = vunpack.c.h.b16 %v1985
    %v2069 = vunpack.c.l.b16 %v1986
    %v2070 = vunpack.c.h.b16 %v1986
    %v2071 = vunpack.c.l.b16 %v1987
    %v2072 = vunpack.c.h.b16 %v1987
    %v2073 = vunpack.c.l.b16 %v1988
    %v2074 = vunpack.c.h.b16 %v1988
    %v2075 = vunpack.c.l.b16 %v1989
    %v2076 = vunpack.c.h.b16 %v1989
    %v2077 = vunpack.c.l.b16 %v1990
    %v2078 = vunpack.c.h.b16 %v1990
    %v2079 = vunpack.c.l.b16 %v1991
    %v2080 = vunpack.c.h.b16 %v1991
    %v2081 = vunpack.c.l.b16 %v1992
    %v2082 = vunpack.c.h.b16 %v1992
    %v2083 = vunpack.c.l.b16 %v1993
    %v2084 = vunpack.c.h.b16 %v1993
    %v2085 = vunpack.c.l.b16 %v1994
    %v2086 = vunpack.c.h.b16 %v1994
    %v2087 = vunpack.c.l.b16 %v1995
    %v2088 = vunpack.c.h.b16 %v1995
    %v2089 = vunpack.c.l.b16 %v1996
    %v2090 = vunpack.c.h.b16 %v1996
    %v2091 = vunpack.c.l.b16 %v1997
    %v2092 = vunpack.c.h.b16 %v1997
    %v2093 = vunpack.c.l.b16 %v1998
    %v2094 = vunpack.c.h.b16 %v1998
    %v2095 = vpack.c.b16 %v2035, %v2031
    %v2096 = vpack.c.b16 %v2036, %v2032
    %v2097 = vpack.c.b16 %v2037, %v2033
    %v2098 = vpack.c.b16 %v2038, %v2034
    %v2099 = vpack.c.b16 %v2043, %v2039
    %v2100 = vpack.c.b16 %v2044, %v2040
    %v2101 = vpack.c.b16 %v2045, %v2041
    %v2102 = vpack.c.b16 %v2046, %v2042
    %v2103 = vpack.c.b16 %v2051, %v2047
    %v2104 = vpack.c.b16 %v2052, %v2048
    %v2105 = vpack.c.b16 %v2053, %v2049
    %v2106 = vpack.c.b16 %v2054, %v2050
    %v2107 = vpack.c.b16 %v2059, %v2055
    %v2108 = vpack.c.b16 %v2060, %v2056
    %v2109 = vpack.c.b16 %v2061, %v2057
    %v2110 = vpack.c.b16 %v2062, %v2058
    %v2111 = vpack.c.b16 %v2067, %v2063
    %v2112 = vpack.c.b16 %v2068, %v2064
    %v2113 = vpack.c.b16 %v2069, %v2065
    %v2114 = vpack.c.b16 %v2070, %v2066
    %v2115 = vpack.c.b16 %v2075, %v2071
    %v2116 = vpack.c.b16 %v2076, %v2072
    %v2117 = vpack.c.b16 %v2077, %v2073
    %v2118 = vpack.c.b16 %v2078, %v2074
    %v2119 = vpack.c.b16 %v2083, %v2079
    %v2120 = vpack.c.b16 %v2084, %v2080
    %v2121 = vpack.c.b16 %v2085, %v2081
    %v2122 = vpack.c.b16 %v2086, %v2082
    %v2123 = vpack.c.b16 %v2091, %v2087
    %v2124 = vpack.c.b16 %v2092, %v2088
    %v2125 = vpack.c.b16 %v2093, %v2089
    %v2126 = vpack.c.b16 %v2094, %v2090
    %2159 = vmatpush.bf16.msra.mxu0 %v2123
    %2160 = vmatpush.bf16.msra.mxu0 %v2119
    %2161 = vmatpush.bf16.msra.mxu0 %v2115
    %2162 = vmatpush.bf16.msra.mxu0 %v2111
    %2163 = vmatpush.bf16.msra.mxu0 %v2107
    %2164 = vmatpush.bf16.msra.mxu0 %v2103
    %2165 = vmatpush.bf16.msra.mxu0 %v2099
    %2166 = vmatpush.bf16.msra.mxu0 %v2095
    %2167 = vmatmul.bf16.gmra.mxu0 %v1966
    %v2168 = vpop.f32.mrf.mxu0
    %v2169 = vadd.f32 0.0, %v2168
    %v2170 = vpop.f32.mrf.mxu0
    %v2171 = vadd.f32 0.0, %v2170
    %2172 = vdwg.mxu0
    %2173 = vmatpush.bf16.msra.mxu0 %v2124
    %2174 = vmatpush.bf16.msra.mxu0 %v2120
    %2175 = vmatpush.bf16.msra.mxu0 %v2116
    %2176 = vmatpush.bf16.msra.mxu0 %v2112
    %2177 = vmatpush.bf16.msra.mxu0 %v2108
    %2178 = vmatpush.bf16.msra.mxu0 %v2104
    %2179 = vmatpush.bf16.msra.mxu0 %v2100
    %2180 = vmatpush.bf16.msra.mxu0 %v2096
    %2181 = vmatmul.bf16.gmra.mxu0 %v1966
    %v2182 = vpop.f32.mrf.mxu0
    %v2183 = vadd.f32 0.0, %v2182
    %v2184 = vpop.f32.mrf.mxu0
    %v2185 = vadd.f32 0.0, %v2184
    %2186 = vdwg.mxu0
    %2187 = vmatpush.bf16.msra.mxu0 %v2125
    %2188 = vmatpush.bf16.msra.mxu0 %v2121
    %2189 = vmatpush.bf16.msra.mxu0 %v2117
    %2190 = vmatpush.bf16.msra.mxu0 %v2113
    %2191 = vmatpush.bf16.msra.mxu0 %v2109
    %2192 = vmatpush.bf16.msra.mxu0 %v2105
    %2193 = vmatpush.bf16.msra.mxu0 %v2101
    %2194 = vmatpush.bf16.msra.mxu0 %v2097
    %2195 = vmatmul.bf16.gmra.mxu0 %v1966
    %v2196 = vpop.f32.mrf.mxu0
    %v2197 = vadd.f32 0.0, %v2196
    %v2198 = vpop.f32.mrf.mxu0
    %v2199 = vadd.f32 0.0, %v2198
    %2200 = vdwg.mxu0
    %2201 = vmatpush.bf16.msra.mxu0 %v2126
    %2202 = vmatpush.bf16.msra.mxu0 %v2122
    %2203 = vmatpush.bf16.msra.mxu0 %v2118
    %2204 = vmatpush.bf16.msra.mxu0 %v2114
    %2205 = vmatpush.bf16.msra.mxu0 %v2110
    %2206 = vmatpush.bf16.msra.mxu0 %v2106
    %2207 = vmatpush.bf16.msra.mxu0 %v2102
    %2208 = vmatpush.bf16.msra.mxu0 %v2098
    %2209 = vmatmul.bf16.gmra.mxu0 %v1966
    %v2210 = vpop.f32.mrf.mxu0
    %v2211 = vadd.f32 0.0, %v2210
    %v2212 = vpop.f32.mrf.mxu0
    %v2213 = vadd.f32 0.0, %v2212
    %2214 = vdwg.mxu0
    %v2215 = vld [vmem:[%s1] ss:$8 sm:$0xf]
    %2216 = vrot.lane.b32.xlu0 %v2169, 17
    %v2217 = vpop.permute.xlu0 %2216
    %2218 = vrot.lane.b32.xlu0 %v2171, 17
    %v2219 = vpop.permute.xlu0 %2218
    %2220 = vrot.lane.b32.xlu0 %v2183, 17
    %v2221 = vpop.permute.xlu0 %2220
    %2222 = vrot.lane.b32.xlu0 %v2185, 17
    %v2223 = vpop.permute.xlu0 %2222
    %2224 = vrot.lane.b32.xlu0 %v2197, 17
    %v2225 = vpop.permute.xlu0 %2224
    %2226 = vrot.lane.b32.xlu0 %v2199, 17
    %v2227 = vpop.permute.xlu0 %2226
    %2228 = vrot.lane.b32.xlu0 %v2211, 17
    %v2229 = vpop.permute.xlu0 %2228
    %2230 = vrot.lane.b32.xlu0 %v2213, 17
    %v2231 = vpop.permute.xlu0 %2230
    %v2232 = vsel %vm173, %v2225, %v2229
    %v2233 = vsel %vm173, %v2227, %v2231
    %v2234 = vsel %vm173, %v2221, %v2225
    %v2235 = vsel %vm173, %v2223, %v2227
    %v2236 = vsel %vm173, %v2217, %v2221
    %v2237 = vsel %vm173, %v2219, %v2223
    %v2238 = vsel %vm173, %v2229, %v2217
    %v2239 = vsel %vm173, %v2231, %v2219
    %v2241 = vperm.slane %v2215, 0
    %v2242 = vperm.slane %v2215, 1
    %v2243 = vperm.slane %v2215, 2
    %v2244 = vperm.slane %v2215, 3
    %v2249 = vmul.f32 %v2238, %v2241
    %v2250 = vmul.f32 %v2236, %v2242
    %v2251 = vmul.f32 %v2234, %v2243
    %v2252 = vmul.f32 %v2232, %v2244
    %v2253 = vmul.f32 %v2239, %v2241
    %v2254 = vmul.f32 %v2237, %v2242
    %v2255 = vmul.f32 %v2235, %v2243
    %v2256 = vmul.f32 %v2233, %v2244
    %2257 = vst [vmem:[#allocation2] sm:$0xff] %v2249
    %2258 = vst [vmem:[#allocation2 + $0x8] sm:$0xff] %v2250
    %2259 = vst [vmem:[#allocation2 + $0x10] sm:$0xff] %v2251
    %2260 = vst [vmem:[#allocation2 + $0x18] sm:$0xff] %v2252
    %2261 = vst [vmem:[#allocation2 + $0x20] sm:$0xff] %v2253
    %2262 = vst [vmem:[#allocation2 + $0x28] sm:$0xff] %v2254
    %2263 = vst [vmem:[#allocation2 + $0x30] sm:$0xff] %v2255
    %2264 = vst [vmem:[#allocation2 + $0x38] sm:$0xff] %v2256
    %2265 = vrot.lane.b32.xlu0 %v555, 17
    %v2266 = vpop.permute.xlu0 %2265
    %2267 = vrot.lane.b32.xlu0 %v556, 17
    %v2268 = vpop.permute.xlu0 %2267
    %2269 = vrot.lane.b32.xlu0 %v557, 17
    %v2270 = vpop.permute.xlu0 %2269
    %2271 = vrot.lane.b32.xlu0 %v558, 17
    %v2272 = vpop.permute.xlu0 %2271
    %v2273 = vsel %vm173, %v2270, %v2272
    %v2274 = vsel %vm173, %v2268, %v2270
    %v2275 = vsel %vm173, %v2266, %v2268
    %v2276 = vsel %vm173, %v2272, %v2266
    %v2277 = vmul.f32 %v2276, %v2241
    %v2278 = vmul.f32 %v2275, %v2242
    %v2279 = vmul.f32 %v2274, %v2243
    %v2280 = vmul.f32 %v2273, %v2244
    %2281 = vst [vmem:[#allocation2 + $0x40] sm:$0xff] %v2277
    %2282 = vst [vmem:[#allocation2 + $0x48] sm:$0xff] %v2278
    %2283 = vst [vmem:[#allocation2 + $0x50] sm:$0xff] %v2279
    %2284 = vst [vmem:[#allocation2 + $0x58] sm:$0xff] %v2280
    %v2285 = vld [vmem:[%s195] ss:$8 sm:$0xf]
    %2286 = vrot.lane.b32.xlu0 %v2169, 16
    %v2287 = vpop.permute.xlu0 %2286
    %2288 = vrot.lane.b32.xlu0 %v2171, 16
    %v2289 = vpop.permute.xlu0 %2288
    %2290 = vrot.lane.b32.xlu0 %v2183, 16
    %v2291 = vpop.permute.xlu0 %2290
    %2292 = vrot.lane.b32.xlu0 %v2185, 16
    %v2293 = vpop.permute.xlu0 %2292
    %2294 = vrot.lane.b32.xlu0 %v2197, 16
    %v2295 = vpop.permute.xlu0 %2294
    %2296 = vrot.lane.b32.xlu0 %v2199, 16
    %v2297 = vpop.permute.xlu0 %2296
    %2298 = vrot.lane.b32.xlu0 %v2211, 16
    %v2299 = vpop.permute.xlu0 %2298
    %2300 = vrot.lane.b32.xlu0 %v2213, 16
    %v2301 = vpop.permute.xlu0 %2300
    %v2302 = vsel %vm205, %v2295, %v2299
    %v2303 = vsel %vm205, %v2297, %v2301
    %v2304 = vsel %vm205, %v2291, %v2295
    %v2305 = vsel %vm205, %v2293, %v2297
    %v2306 = vsel %vm205, %v2287, %v2291
    %v2307 = vsel %vm205, %v2289, %v2293
    %v2308 = vsel %vm205, %v2299, %v2287
    %v2309 = vsel %vm205, %v2301, %v2289
    %v2311 = vperm.slane %v2285, 0
    %v2312 = vperm.slane %v2285, 1
    %v2313 = vperm.slane %v2285, 2
    %v2314 = vperm.slane %v2285, 3
    %v2319 = vmul.f32 %v2308, %v2311
    %v2320 = vmul.f32 %v2306, %v2312
    %v2321 = vmul.f32 %v2304, %v2313
    %v2322 = vmul.f32 %v2302, %v2314
    %v2323 = vmul.f32 %v2309, %v2311
    %v2324 = vmul.f32 %v2307, %v2312
    %v2325 = vmul.f32 %v2305, %v2313
    %v2326 = vmul.f32 %v2303, %v2314
    %2327 = vst [vmem:[#allocation2 + $0x60] sm:$0xff] %v2319
    %2328 = vst [vmem:[#allocation2 + $0x68] sm:$0xff] %v2320
    %2329 = vst [vmem:[#allocation2 + $0x70] sm:$0xff] %v2321
    %2330 = vst [vmem:[#allocation2 + $0x78] sm:$0xff] %v2322
    %2331 = vst [vmem:[#allocation2 + $0x80] sm:$0xff] %v2323
    %2332 = vst [vmem:[#allocation2 + $0x88] sm:$0xff] %v2324
    %2333 = vst [vmem:[#allocation2 + $0x90] sm:$0xff] %v2325
    %2334 = vst [vmem:[#allocation2 + $0x98] sm:$0xff] %v2326
    %2335 = vrot.lane.b32.xlu0 %v555, 16
    %v2336 = vpop.permute.xlu0 %2335
    %2337 = vrot.lane.b32.xlu0 %v556, 16
    %v2338 = vpop.permute.xlu0 %2337
    %2339 = vrot.lane.b32.xlu0 %v557, 16
    %v2340 = vpop.permute.xlu0 %2339
    %2341 = vrot.lane.b32.xlu0 %v558, 16
    %v2342 = vpop.permute.xlu0 %2341
    %v2343 = vsel %vm205, %v2340, %v2342
    %v2344 = vsel %vm205, %v2338, %v2340
    %v2345 = vsel %vm205, %v2336, %v2338
    %v2346 = vsel %vm205, %v2342, %v2336
    %v2347 = vmul.f32 %v2346, %v2311
    %v2348 = vmul.f32 %v2345, %v2312
    %v2349 = vmul.f32 %v2344, %v2313
    %v2350 = vmul.f32 %v2343, %v2314
    %2351 = vst [vmem:[#allocation2 + $0xa0] sm:$0xff] %v2347
    %2352 = vst [vmem:[#allocation2 + $0xa8] sm:$0xff] %v2348
    %2353 = vst [vmem:[#allocation2 + $0xb0] sm:$0xff] %v2349
    %2354 = vst [vmem:[#allocation2 + $0xb8] sm:$0xff] %v2350
    %v2355 = vld [vmem:[%s227] ss:$8 sm:$0xf]
    %2356 = vrot.lane.b32.xlu0 %v2169, 15
    %v2357 = vpop.permute.xlu0 %2356
    %2358 = vrot.lane.b32.xlu0 %v2171, 15
    %v2359 = vpop.permute.xlu0 %2358
    %2360 = vrot.lane.b32.xlu0 %v2183, 15
    %v2361 = vpop.permute.xlu0 %2360
    %2362 = vrot.lane.b32.xlu0 %v2185, 15
    %v2363 = vpop.permute.xlu0 %2362
    %2364 = vrot.lane.b32.xlu0 %v2197, 15
    %v2365 = vpop.permute.xlu0 %2364
    %2366 = vrot.lane.b32.xlu0 %v2199, 15
    %v2367 = vpop.permute.xlu0 %2366
    %2368 = vrot.lane.b32.xlu0 %v2211, 15
    %v2369 = vpop.permute.xlu0 %2368
    %2370 = vrot.lane.b32.xlu0 %v2213, 15
    %v2371 = vpop.permute.xlu0 %2370
    %v2372 = vsel %vm237, %v2365, %v2369
    %v2373 = vsel %vm237, %v2367, %v2371
    %v2374 = vsel %vm237, %v2361, %v2365
    %v2375 = vsel %vm237, %v2363, %v2367
    %v2376 = vsel %vm237, %v2357, %v2361
    %v2377 = vsel %vm237, %v2359, %v2363
    %v2378 = vsel %vm237, %v2369, %v2357
    %v2379 = vsel %vm237, %v2371, %v2359
    %v2381 = vperm.slane %v2355, 0
    %v2382 = vperm.slane %v2355, 1
    %v2383 = vperm.slane %v2355, 2
    %v2384 = vperm.slane %v2355, 3
    %v2389 = vmul.f32 %v2378, %v2381
    %v2390 = vmul.f32 %v2376, %v2382
    %v2391 = vmul.f32 %v2374, %v2383
    %v2392 = vmul.f32 %v2372, %v2384
    %v2393 = vmul.f32 %v2379, %v2381
    %v2394 = vmul.f32 %v2377, %v2382
    %v2395 = vmul.f32 %v2375, %v2383
    %v2396 = vmul.f32 %v2373, %v2384
    %2397 = vst [vmem:[#allocation2 + $0xc0] sm:$0xff] %v2389
    %2398 = vst [vmem:[#allocation2 + $0xc8] sm:$0xff] %v2390
    %2399 = vst [vmem:[#allocation2 + $0xd0] sm:$0xff] %v2391
    %2400 = vst [vmem:[#allocation2 + $0xd8] sm:$0xff] %v2392
    %2401 = vst [vmem:[#allocation2 + $0xe0] sm:$0xff] %v2393
    %2402 = vst [vmem:[#allocation2 + $0xe8] sm:$0xff] %v2394
    %2403 = vst [vmem:[#allocation2 + $0xf0] sm:$0xff] %v2395
    %2404 = vst [vmem:[#allocation2 + $0xf8] sm:$0xff] %v2396
    %2405 = vrot.lane.b32.xlu0 %v555, 15
    %v2406 = vpop.permute.xlu0 %2405
    %2407 = vrot.lane.b32.xlu0 %v556, 15
    %v2408 = vpop.permute.xlu0 %2407
    %2409 = vrot.lane.b32.xlu0 %v557, 15
    %v2410 = vpop.permute.xlu0 %2409
    %2411 = vrot.lane.b32.xlu0 %v558, 15
    %v2412 = vpop.permute.xlu0 %2411
    %v2413 = vsel %vm237, %v2410, %v2412
    %v2414 = vsel %vm237, %v2408, %v2410
    %v2415 = vsel %vm237, %v2406, %v2408
    %v2416 = vsel %vm237, %v2412, %v2406
    %v2417 = vmul.f32 %v2416, %v2381
    %v2418 = vmul.f32 %v2415, %v2382
    %v2419 = vmul.f32 %v2414, %v2383
    %v2420 = vmul.f32 %v2413, %v2384
    %2421 = vst [vmem:[#allocation2 + $0x100] sm:$0xff] %v2417
    %2422 = vst [vmem:[#allocation2 + $0x108] sm:$0xff] %v2418
    %2423 = vst [vmem:[#allocation2 + $0x110] sm:$0xff] %v2419
    %2424 = vst [vmem:[#allocation2 + $0x118] sm:$0xff] %v2420
    %v2425 = vld [vmem:[%s259] ss:$8 sm:$0xf]
    %2426 = vrot.lane.b32.xlu0 %v2169, 1
    %v2427 = vpop.permute.xlu0 %2426
    %2428 = vrot.lane.b32.xlu0 %v2171, 1
    %v2429 = vpop.permute.xlu0 %2428
    %2430 = vrot.lane.b32.xlu0 %v2183, 1
    %v2431 = vpop.permute.xlu0 %2430
    %2432 = vrot.lane.b32.xlu0 %v2185, 1
    %v2433 = vpop.permute.xlu0 %2432
    %2434 = vrot.lane.b32.xlu0 %v2197, 1
    %v2435 = vpop.permute.xlu0 %2434
    %2436 = vrot.lane.b32.xlu0 %v2199, 1
    %v2437 = vpop.permute.xlu0 %2436
    %2438 = vrot.lane.b32.xlu0 %v2211, 1
    %v2439 = vpop.permute.xlu0 %2438
    %2440 = vrot.lane.b32.xlu0 %v2213, 1
    %v2441 = vpop.permute.xlu0 %2440
    %v2442 = vsel %vm269, %v2435, %v2439
    %v2443 = vsel %vm269, %v2437, %v2441
    %v2444 = vsel %vm269, %v2431, %v2435
    %v2445 = vsel %vm269, %v2433, %v2437
    %v2446 = vsel %vm269, %v2427, %v2431
    %v2447 = vsel %vm269, %v2429, %v2433
    %v2448 = vsel %vm269, %v2439, %v2427
    %v2449 = vsel %vm269, %v2441, %v2429
    %v2451 = vperm.slane %v2425, 0
    %v2452 = vperm.slane %v2425, 1
    %v2453 = vperm.slane %v2425, 2
    %v2454 = vperm.slane %v2425, 3
    %v2459 = vmul.f32 %v2448, %v2451
    %v2460 = vmul.f32 %v2446, %v2452
    %v2461 = vmul.f32 %v2444, %v2453
    %v2462 = vmul.f32 %v2442, %v2454
    %v2463 = vmul.f32 %v2449, %v2451
    %v2464 = vmul.f32 %v2447, %v2452
    %v2465 = vmul.f32 %v2445, %v2453
    %v2466 = vmul.f32 %v2443, %v2454
    %2467 = vst [vmem:[#allocation2 + $0x120] sm:$0xff] %v2459
    %2468 = vst [vmem:[#allocation2 + $0x128] sm:$0xff] %v2460
    %2469 = vst [vmem:[#allocation2 + $0x130] sm:$0xff] %v2461
    %2470 = vst [vmem:[#allocation2 + $0x138] sm:$0xff] %v2462
    %2471 = vst [vmem:[#allocation2 + $0x140] sm:$0xff] %v2463
    %2472 = vst [vmem:[#allocation2 + $0x148] sm:$0xff] %v2464
    %2473 = vst [vmem:[#allocation2 + $0x150] sm:$0xff] %v2465
    %2474 = vst [vmem:[#allocation2 + $0x158] sm:$0xff] %v2466
    %2475 = vrot.lane.b32.xlu0 %v555, 1
    %v2476 = vpop.permute.xlu0 %2475
    %2477 = vrot.lane.b32.xlu0 %v556, 1
    %v2478 = vpop.permute.xlu0 %2477
    %2479 = vrot.lane.b32.xlu0 %v557, 1
    %v2480 = vpop.permute.xlu0 %2479
    %2481 = vrot.lane.b32.xlu0 %v558, 1
    %v2482 = vpop.permute.xlu0 %2481
    %v2483 = vsel %vm269, %v2480, %v2482
    %v2484 = vsel %vm269, %v2478, %v2480
    %v2485 = vsel %vm269, %v2476, %v2478
    %v2486 = vsel %vm269, %v2482, %v2476
    %v2487 = vmul.f32 %v2486, %v2451
    %v2488 = vmul.f32 %v2485, %v2452
    %v2489 = vmul.f32 %v2484, %v2453
    %v2490 = vmul.f32 %v2483, %v2454
    %2491 = vst [vmem:[#allocation2 + $0x160] sm:$0xff] %v2487
    %2492 = vst [vmem:[#allocation2 + $0x168] sm:$0xff] %v2488
    %2493 = vst [vmem:[#allocation2 + $0x170] sm:$0xff] %v2489
    %2494 = vst [vmem:[#allocation2 + $0x178] sm:$0xff] %v2490
    %2495 = vst [vmem:[#allocation2 + $0x180] sm:$0xff] %v2169
    %2496 = vst [vmem:[#allocation2 + $0x188] sm:$0xff] %v2183
    %2497 = vst [vmem:[#allocation2 + $0x190] sm:$0xff] %v2197
    %2498 = vst [vmem:[#allocation2 + $0x198] sm:$0xff] %v2211
    %2499 = vst [vmem:[#allocation2 + $0x1a0] sm:$0xff] %v2171
    %2500 = vst [vmem:[#allocation2 + $0x1a8] sm:$0xff] %v2185
    %2501 = vst [vmem:[#allocation2 + $0x1b0] sm:$0xff] %v2199
    %2502 = vst [vmem:[#allocation2 + $0x1b8] sm:$0xff] %v2213
    %2503 = vst [vmem:[#allocation2 + $0x1c0] sm:$0xff] %v555
    %2504 = vst [vmem:[#allocation2 + $0x1c8] sm:$0xff] %v556
    %2505 = vst [vmem:[#allocation2 + $0x1d0] sm:$0xff] %v557
    %2506 = vst [vmem:[#allocation2 + $0x1d8] sm:$0xff] %v558
    %v2507 = vld [vmem:[%s295] ss:$8 sm:$0xf]
    %2508 = vrot.lane.b32.xlu0 %v2169, 127
    %v2509 = vpop.permute.xlu0 %2508
    %2510 = vrot.lane.b32.xlu0 %v2171, 127
    %v2511 = vpop.permute.xlu0 %2510
    %2512 = vrot.lane.b32.xlu0 %v2183, 127
    %v2513 = vpop.permute.xlu0 %2512
    %2514 = vrot.lane.b32.xlu0 %v2185, 127
    %v2515 = vpop.permute.xlu0 %2514
    %2516 = vrot.lane.b32.xlu0 %v2197, 127
    %v2517 = vpop.permute.xlu0 %2516
    %2518 = vrot.lane.b32.xlu0 %v2199, 127
    %v2519 = vpop.permute.xlu0 %2518
    %2520 = vrot.lane.b32.xlu0 %v2211, 127
    %v2521 = vpop.permute.xlu0 %2520
    %2522 = vrot.lane.b32.xlu0 %v2213, 127
    %v2523 = vpop.permute.xlu0 %2522
    %v2524 = vsel %vm305, %v2517, %v2521
    %v2525 = vsel %vm305, %v2519, %v2523
    %v2526 = vsel %vm305, %v2513, %v2517
    %v2527 = vsel %vm305, %v2515, %v2519
    %v2528 = vsel %vm305, %v2509, %v2513
    %v2529 = vsel %vm305, %v2511, %v2515
    %v2530 = vsel %vm305, %v2521, %v2509
    %v2531 = vsel %vm305, %v2523, %v2511
    %v2533 = vperm.slane %v2507, 0
    %v2534 = vperm.slane %v2507, 1
    %v2535 = vperm.slane %v2507, 2
    %v2536 = vperm.slane %v2507, 3
    %v2541 = vmul.f32 %v2528, %v2533
    %v2542 = vmul.f32 %v2526, %v2534
    %v2543 = vmul.f32 %v2524, %v2535
    %v2544 = vmul.f32 %v2530, %v2536
    %v2545 = vmul.f32 %v2529, %v2533
    %v2546 = vmul.f32 %v2527, %v2534
    %v2547 = vmul.f32 %v2525, %v2535
    %v2548 = vmul.f32 %v2531, %v2536
    %2549 = vst [vmem:[#allocation2 + $0x1e0] sm:$0xff] %v2541
    %2550 = vst [vmem:[#allocation2 + $0x1e8] sm:$0xff] %v2542
    %2551 = vst [vmem:[#allocation2 + $0x1f0] sm:$0xff] %v2543
    %2552 = vst [vmem:[#allocation2 + $0x1f8] sm:$0xff] %v2544
    %2553 = vst [vmem:[#allocation2 + $0x200] sm:$0xff] %v2545
    %2554 = vst [vmem:[#allocation2 + $0x208] sm:$0xff] %v2546
    %2555 = vst [vmem:[#allocation2 + $0x210] sm:$0xff] %v2547
    %2556 = vst [vmem:[#allocation2 + $0x218] sm:$0xff] %v2548
    %v2557 = vmul.f32 %v569, %v2533
    %v2558 = vmul.f32 %v568, %v2534
    %v2559 = vmul.f32 %v567, %v2535
    %v2560 = vmul.f32 %v570, %v2536
    %2561 = vst [vmem:[#allocation2 + $0x220] sm:$0xff] %v2557
    %2562 = vst [vmem:[#allocation2 + $0x228] sm:$0xff] %v2558
    %2563 = vst [vmem:[#allocation2 + $0x230] sm:$0xff] %v2559
    %2564 = vst [vmem:[#allocation2 + $0x238] sm:$0xff] %v2560
    %v2565 = vld [vmem:[%s327] ss:$8 sm:$0xf]
    %2566 = vrot.lane.b32.xlu0 %v2169, 113
    %v2567 = vpop.permute.xlu0 %2566
    %2568 = vrot.lane.b32.xlu0 %v2171, 113
    %v2569 = vpop.permute.xlu0 %2568
    %2570 = vrot.lane.b32.xlu0 %v2183, 113
    %v2571 = vpop.permute.xlu0 %2570
    %2572 = vrot.lane.b32.xlu0 %v2185, 113
    %v2573 = vpop.permute.xlu0 %2572
    %2574 = vrot.lane.b32.xlu0 %v2197, 113
    %v2575 = vpop.permute.xlu0 %2574
    %2576 = vrot.lane.b32.xlu0 %v2199, 113
    %v2577 = vpop.permute.xlu0 %2576
    %2578 = vrot.lane.b32.xlu0 %v2211, 113
    %v2579 = vpop.permute.xlu0 %2578
    %2580 = vrot.lane.b32.xlu0 %v2213, 113
    %v2581 = vpop.permute.xlu0 %2580
    %v2582 = vsel %vm337, %v2575, %v2579
    %v2583 = vsel %vm337, %v2577, %v2581
    %v2584 = vsel %vm337, %v2571, %v2575
    %v2585 = vsel %vm337, %v2573, %v2577
    %v2586 = vsel %vm337, %v2567, %v2571
    %v2587 = vsel %vm337, %v2569, %v2573
    %v2588 = vsel %vm337, %v2579, %v2567
    %v2589 = vsel %vm337, %v2581, %v2569
    %v2591 = vperm.slane %v2565, 0
    %v2592 = vperm.slane %v2565, 1
    %v2593 = vperm.slane %v2565, 2
    %v2594 = vperm.slane %v2565, 3
    %v2599 = vmul.f32 %v2586, %v2591
    %v2600 = vmul.f32 %v2584, %v2592
    %v2601 = vmul.f32 %v2582, %v2593
    %v2602 = vmul.f32 %v2588, %v2594
    %v2603 = vmul.f32 %v2587, %v2591
    %v2604 = vmul.f32 %v2585, %v2592
    %v2605 = vmul.f32 %v2583, %v2593
    %v2606 = vmul.f32 %v2589, %v2594
    %2607 = vst [vmem:[#allocation2 + $0x240] sm:$0xff] %v2599
    %2608 = vst [vmem:[#allocation2 + $0x248] sm:$0xff] %v2600
    %2609 = vst [vmem:[#allocation2 + $0x250] sm:$0xff] %v2601
    %2610 = vst [vmem:[#allocation2 + $0x258] sm:$0xff] %v2602
    %2611 = vst [vmem:[#allocation2 + $0x260] sm:$0xff] %v2603
    %2612 = vst [vmem:[#allocation2 + $0x268] sm:$0xff] %v2604
    %2613 = vst [vmem:[#allocation2 + $0x270] sm:$0xff] %v2605
    %2614 = vst [vmem:[#allocation2 + $0x278] sm:$0xff] %v2606
    %2615 = vrot.lane.b32.xlu0 %v555, 113
    %v2616 = vpop.permute.xlu0 %2615
    %2617 = vrot.lane.b32.xlu0 %v556, 113
    %v2618 = vpop.permute.xlu0 %2617
    %2619 = vrot.lane.b32.xlu0 %v557, 113
    %v2620 = vpop.permute.xlu0 %2619
    %2621 = vrot.lane.b32.xlu0 %v558, 113
    %v2622 = vpop.permute.xlu0 %2621
    %v2623 = vsel %vm337, %v2620, %v2622
    %v2624 = vsel %vm337, %v2618, %v2620
    %v2625 = vsel %vm337, %v2616, %v2618
    %v2626 = vsel %vm337, %v2622, %v2616
    %v2627 = vmul.f32 %v2625, %v2591
    %v2628 = vmul.f32 %v2624, %v2592
    %v2629 = vmul.f32 %v2623, %v2593
    %v2630 = vmul.f32 %v2626, %v2594
    %2631 = vst [vmem:[#allocation2 + $0x280] sm:$0xff] %v2627
    %2632 = vst [vmem:[#allocation2 + $0x288] sm:$0xff] %v2628
    %2633 = vst [vmem:[#allocation2 + $0x290] sm:$0xff] %v2629
    %2634 = vst [vmem:[#allocation2 + $0x298] sm:$0xff] %v2630
    %v2635 = vld [vmem:[%s359] ss:$8 sm:$0xf]
    %2636 = vrot.lane.b32.xlu0 %v2169, 112
    %v2637 = vpop.permute.xlu0 %2636
    %2638 = vrot.lane.b32.xlu0 %v2171, 112
    %v2639 = vpop.permute.xlu0 %2638
    %2640 = vrot.lane.b32.xlu0 %v2183, 112
    %v2641 = vpop.permute.xlu0 %2640
    %2642 = vrot.lane.b32.xlu0 %v2185, 112
    %v2643 = vpop.permute.xlu0 %2642
    %2644 = vrot.lane.b32.xlu0 %v2197, 112
    %v2645 = vpop.permute.xlu0 %2644
    %2646 = vrot.lane.b32.xlu0 %v2199, 112
    %v2647 = vpop.permute.xlu0 %2646
    %2648 = vrot.lane.b32.xlu0 %v2211, 112
    %v2649 = vpop.permute.xlu0 %2648
    %2650 = vrot.lane.b32.xlu0 %v2213, 112
    %v2651 = vpop.permute.xlu0 %2650
    %v2652 = vsel %vm369, %v2645, %v2649
    %v2653 = vsel %vm369, %v2647, %v2651
    %v2654 = vsel %vm369, %v2641, %v2645
    %v2655 = vsel %vm369, %v2643, %v2647
    %v2656 = vsel %vm369, %v2637, %v2641
    %v2657 = vsel %vm369, %v2639, %v2643
    %v2658 = vsel %vm369, %v2649, %v2637
    %v2659 = vsel %vm369, %v2651, %v2639
    %v2661 = vperm.slane %v2635, 0
    %v2662 = vperm.slane %v2635, 1
    %v2663 = vperm.slane %v2635, 2
    %v2664 = vperm.slane %v2635, 3
    %v2669 = vmul.f32 %v2656, %v2661
    %v2670 = vmul.f32 %v2654, %v2662
    %v2671 = vmul.f32 %v2652, %v2663
    %v2672 = vmul.f32 %v2658, %v2664
    %v2673 = vmul.f32 %v2657, %v2661
    %v2674 = vmul.f32 %v2655, %v2662
    %v2675 = vmul.f32 %v2653, %v2663
    %v2676 = vmul.f32 %v2659, %v2664
    %2677 = vst [vmem:[#allocation2 + $0x2a0] sm:$0xff] %v2669
    %2678 = vst [vmem:[#allocation2 + $0x2a8] sm:$0xff] %v2670
    %2679 = vst [vmem:[#allocation2 + $0x2b0] sm:$0xff] %v2671
    %2680 = vst [vmem:[#allocation2 + $0x2b8] sm:$0xff] %v2672
    %2681 = vst [vmem:[#allocation2 + $0x2c0] sm:$0xff] %v2673
    %2682 = vst [vmem:[#allocation2 + $0x2c8] sm:$0xff] %v2674
    %2683 = vst [vmem:[#allocation2 + $0x2d0] sm:$0xff] %v2675
    %2684 = vst [vmem:[#allocation2 + $0x2d8] sm:$0xff] %v2676
    %v2685 = vmul.f32 %v581, %v2661
    %v2686 = vmul.f32 %v580, %v2662
    %v2687 = vmul.f32 %v579, %v2663
    %v2688 = vmul.f32 %v582, %v2664
    %2689 = vst [vmem:[#allocation2 + $0x2e0] sm:$0xff] %v2685
    %2690 = vst [vmem:[#allocation2 + $0x2e8] sm:$0xff] %v2686
    %2691 = vst [vmem:[#allocation2 + $0x2f0] sm:$0xff] %v2687
    %2692 = vst [vmem:[#allocation2 + $0x2f8] sm:$0xff] %v2688
    %v2693 = vld [vmem:[%s391] ss:$8 sm:$0xf]
    %2694 = vrot.lane.b32.xlu0 %v2169, 111
    %v2695 = vpop.permute.xlu0 %2694
    %2696 = vrot.lane.b32.xlu0 %v2171, 111
    %v2697 = vpop.permute.xlu0 %2696
    %2698 = vrot.lane.b32.xlu0 %v2183, 111
    %v2699 = vpop.permute.xlu0 %2698
    %2700 = vrot.lane.b32.xlu0 %v2185, 111
    %v2701 = vpop.permute.xlu0 %2700
    %2702 = vrot.lane.b32.xlu0 %v2197, 111
    %v2703 = vpop.permute.xlu0 %2702
    %2704 = vrot.lane.b32.xlu0 %v2199, 111
    %v2705 = vpop.permute.xlu0 %2704
    %2706 = vrot.lane.b32.xlu0 %v2211, 111
    %v2707 = vpop.permute.xlu0 %2706
    %2708 = vrot.lane.b32.xlu0 %v2213, 111
    %v2709 = vpop.permute.xlu0 %2708
    %v2710 = vsel %vm401, %v2703, %v2707
    %v2711 = vsel %vm401, %v2705, %v2709
    %v2712 = vsel %vm401, %v2699, %v2703
    %v2713 = vsel %vm401, %v2701, %v2705
    %v2714 = vsel %vm401, %v2695, %v2699
    %v2715 = vsel %vm401, %v2697, %v2701
    %v2716 = vsel %vm401, %v2707, %v2695
    %v2717 = vsel %vm401, %v2709, %v2697
    %v2719 = vperm.slane %v2693, 0
    %v2720 = vperm.slane %v2693, 1
    %v2721 = vperm.slane %v2693, 2
    %v2722 = vperm.slane %v2693, 3
    %v2727 = vmul.f32 %v2714, %v2719
    %v2728 = vmul.f32 %v2712, %v2720
    %v2729 = vmul.f32 %v2710, %v2721
    %v2730 = vmul.f32 %v2716, %v2722
    %v2731 = vmul.f32 %v2715, %v2719
    %v2732 = vmul.f32 %v2713, %v2720
    %v2733 = vmul.f32 %v2711, %v2721
    %v2734 = vmul.f32 %v2717, %v2722
    %2735 = vst [vmem:[#allocation2 + $0x300] sm:$0xff] %v2727
    %2736 = vst [vmem:[#allocation2 + $0x308] sm:$0xff] %v2728
    %2737 = vst [vmem:[#allocation2 + $0x310] sm:$0xff] %v2729
    %2738 = vst [vmem:[#allocation2 + $0x318] sm:$0xff] %v2730
    %2739 = vst [vmem:[#allocation2 + $0x320] sm:$0xff] %v2731
    %2740 = vst [vmem:[#allocation2 + $0x328] sm:$0xff] %v2732
    %2741 = vst [vmem:[#allocation2 + $0x330] sm:$0xff] %v2733
    %2742 = vst [vmem:[#allocation2 + $0x338] sm:$0xff] %v2734
    %v2743 = vmul.f32 %v593, %v2719
    %v2744 = vmul.f32 %v592, %v2720
    %v2745 = vmul.f32 %v591, %v2721
    %v2746 = vmul.f32 %v594, %v2722
    %2747 = vst [vmem:[#allocation2 + $0x340] sm:$0xff] %v2743
    %2748 = vst [vmem:[#allocation2 + $0x348] sm:$0xff] %v2744
    %2749 = vst [vmem:[#allocation2 + $0x350] sm:$0xff] %v2745
    %2750 = vst [vmem:[#allocation2 + $0x358] sm:$0xff] %v2746
    %v2751 = vld [vmem:[#allocation2] sm:$0xff]
    %v2752 = vld [vmem:[#allocation2 + $0x8] sm:$0xff]
    %v2753 = vld [vmem:[#allocation2 + $0x10] sm:$0xff]
    %v2754 = vld [vmem:[#allocation2 + $0x18] sm:$0xff]
    %v2755 = vld [vmem:[#allocation2 + $0x20] sm:$0xff]
    %v2756 = vld [vmem:[#allocation2 + $0x28] sm:$0xff]
    %v2757 = vld [vmem:[#allocation2 + $0x30] sm:$0xff]
    %v2758 = vld [vmem:[#allocation2 + $0x38] sm:$0xff]
    %v2759 = vld [vmem:[#allocation2 + $0x40] sm:$0xff]
    %v2760 = vld [vmem:[#allocation2 + $0x48] sm:$0xff]
    %v2761 = vld [vmem:[#allocation2 + $0x50] sm:$0xff]
    %v2762 = vld [vmem:[#allocation2 + $0x58] sm:$0xff]
    %v2763 = vld [vmem:[#allocation2 + $0x60] sm:$0xff]
    %v2764 = vld [vmem:[#allocation2 + $0x68] sm:$0xff]
    %v2765 = vld [vmem:[#allocation2 + $0x70] sm:$0xff]
    %v2766 = vld [vmem:[#allocation2 + $0x78] sm:$0xff]
    %v2767 = vld [vmem:[#allocation2 + $0x80] sm:$0xff]
    %v2768 = vld [vmem:[#allocation2 + $0x88] sm:$0xff]
    %v2769 = vld [vmem:[#allocation2 + $0x90] sm:$0xff]
    %v2770 = vld [vmem:[#allocation2 + $0x98] sm:$0xff]
    %v2771 = vld [vmem:[#allocation2 + $0xa0] sm:$0xff]
    %v2772 = vld [vmem:[#allocation2 + $0xa8] sm:$0xff]
    %v2773 = vld [vmem:[#allocation2 + $0xb0] sm:$0xff]
    %v2774 = vld [vmem:[#allocation2 + $0xb8] sm:$0xff]
    %v2775 = vld [vmem:[#allocation2 + $0xc0] sm:$0xff]
    %v2776 = vld [vmem:[#allocation2 + $0xc8] sm:$0xff]
    %v2777 = vld [vmem:[#allocation2 + $0xd0] sm:$0xff]
    %v2778 = vld [vmem:[#allocation2 + $0xd8] sm:$0xff]
    %v2779 = vld [vmem:[#allocation2 + $0xe0] sm:$0xff]
    %v2780 = vld [vmem:[#allocation2 + $0xe8] sm:$0xff]
    %v2781 = vld [vmem:[#allocation2 + $0xf0] sm:$0xff]
    %v2782 = vld [vmem:[#allocation2 + $0xf8] sm:$0xff]
    %v2783 = vld [vmem:[#allocation2 + $0x100] sm:$0xff]
    %v2784 = vld [vmem:[#allocation2 + $0x108] sm:$0xff]
    %v2785 = vld [vmem:[#allocation2 + $0x110] sm:$0xff]
    %v2786 = vld [vmem:[#allocation2 + $0x118] sm:$0xff]
    %v2787 = vld [vmem:[#allocation2 + $0x120] sm:$0xff]
    %v2788 = vld [vmem:[#allocation2 + $0x128] sm:$0xff]
    %v2789 = vld [vmem:[#allocation2 + $0x130] sm:$0xff]
    %v2790 = vld [vmem:[#allocation2 + $0x138] sm:$0xff]
    %v2791 = vld [vmem:[#allocation2 + $0x140] sm:$0xff]
    %v2792 = vld [vmem:[#allocation2 + $0x148] sm:$0xff]
    %v2793 = vld [vmem:[#allocation2 + $0x150] sm:$0xff]
    %v2794 = vld [vmem:[#allocation2 + $0x158] sm:$0xff]
    %v2795 = vld [vmem:[#allocation2 + $0x160] sm:$0xff]
    %v2796 = vld [vmem:[#allocation2 + $0x168] sm:$0xff]
    %v2797 = vld [vmem:[#allocation2 + $0x170] sm:$0xff]
    %v2798 = vld [vmem:[#allocation2 + $0x178] sm:$0xff]
    %v2799 = vld [vmem:[#allocation2 + $0x180] sm:$0xff]
    %v2800 = vld [vmem:[#allocation2 + $0x188] sm:$0xff]
    %v2801 = vld [vmem:[#allocation2 + $0x190] sm:$0xff]
    %v2802 = vld [vmem:[#allocation2 + $0x198] sm:$0xff]
    %v2803 = vld [vmem:[#allocation2 + $0x1a0] sm:$0xff]
    %v2804 = vld [vmem:[#allocation2 + $0x1a8] sm:$0xff]
    %v2805 = vld [vmem:[#allocation2 + $0x1b0] sm:$0xff]
    %v2806 = vld [vmem:[#allocation2 + $0x1b8] sm:$0xff]
    %v2807 = vld [vmem:[#allocation2 + $0x1c0] sm:$0xff]
    %v2808 = vld [vmem:[#allocation2 + $0x1c8] sm:$0xff]
    %v2809 = vld [vmem:[#allocation2 + $0x1d0] sm:$0xff]
    %v2810 = vld [vmem:[#allocation2 + $0x1d8] sm:$0xff]
    %v2811 = vld [vmem:[#allocation2 + $0x1e0] sm:$0xff]
    %v2812 = vld [vmem:[#allocation2 + $0x1e8] sm:$0xff]
    %v2813 = vld [vmem:[#allocation2 + $0x1f0] sm:$0xff]
    %v2814 = vld [vmem:[#allocation2 + $0x1f8] sm:$0xff]
    %v2815 = vld [vmem:[#allocation2 + $0x200] sm:$0xff]
    %v2816 = vld [vmem:[#allocation2 + $0x208] sm:$0xff]
    %v2817 = vld [vmem:[#allocation2 + $0x210] sm:$0xff]
    %v2818 = vld [vmem:[#allocation2 + $0x218] sm:$0xff]
    %v2819 = vld [vmem:[#allocation2 + $0x220] sm:$0xff]
    %v2820 = vld [vmem:[#allocation2 + $0x228] sm:$0xff]
    %v2821 = vld [vmem:[#allocation2 + $0x230] sm:$0xff]
    %v2822 = vld [vmem:[#allocation2 + $0x238] sm:$0xff]
    %v2823 = vld [vmem:[#allocation2 + $0x240] sm:$0xff]
    %v2824 = vld [vmem:[#allocation2 + $0x248] sm:$0xff]
    %v2825 = vld [vmem:[#allocation2 + $0x250] sm:$0xff]
    %v2826 = vld [vmem:[#allocation2 + $0x258] sm:$0xff]
    %v2827 = vld [vmem:[#allocation2 + $0x260] sm:$0xff]
    %v2828 = vld [vmem:[#allocation2 + $0x268] sm:$0xff]
    %v2829 = vld [vmem:[#allocation2 + $0x270] sm:$0xff]
    %v2830 = vld [vmem:[#allocation2 + $0x278] sm:$0xff]
    %v2831 = vld [vmem:[#allocation2 + $0x280] sm:$0xff]
    %v2832 = vld [vmem:[#allocation2 + $0x288] sm:$0xff]
    %v2833 = vld [vmem:[#allocation2 + $0x290] sm:$0xff]
    %v2834 = vld [vmem:[#allocation2 + $0x298] sm:$0xff]
    %v2835 = vld [vmem:[#allocation2 + $0x2a0] sm:$0xff]
    %v2836 = vld [vmem:[#allocation2 + $0x2a8] sm:$0xff]
    %v2837 = vld [vmem:[#allocation2 + $0x2b0] sm:$0xff]
    %v2838 = vld [vmem:[#allocation2 + $0x2b8] sm:$0xff]
    %v2839 = vld [vmem:[#allocation2 + $0x2c0] sm:$0xff]
    %v2840 = vld [vmem:[#allocation2 + $0x2c8] sm:$0xff]
    %v2841 = vld [vmem:[#allocation2 + $0x2d0] sm:$0xff]
    %v2842 = vld [vmem:[#allocation2 + $0x2d8] sm:$0xff]
    %v2843 = vld [vmem:[#allocation2 + $0x2e0] sm:$0xff]
    %v2844 = vld [vmem:[#allocation2 + $0x2e8] sm:$0xff]
    %v2845 = vld [vmem:[#allocation2 + $0x2f0] sm:$0xff]
    %v2846 = vld [vmem:[#allocation2 + $0x2f8] sm:$0xff]
    %v2847 = vld [vmem:[#allocation2 + $0x300] sm:$0xff]
    %v2848 = vld [vmem:[#allocation2 + $0x308] sm:$0xff]
    %v2849 = vld [vmem:[#allocation2 + $0x310] sm:$0xff]
    %v2850 = vld [vmem:[#allocation2 + $0x318] sm:$0xff]
    %v2851 = vld [vmem:[#allocation2 + $0x320] sm:$0xff]
    %v2852 = vld [vmem:[#allocation2 + $0x328] sm:$0xff]
    %v2853 = vld [vmem:[#allocation2 + $0x330] sm:$0xff]
    %v2854 = vld [vmem:[#allocation2 + $0x338] sm:$0xff]
    %v2855 = vld [vmem:[#allocation2 + $0x340] sm:$0xff]
    %v2856 = vld [vmem:[#allocation2 + $0x348] sm:$0xff]
    %v2857 = vld [vmem:[#allocation2 + $0x350] sm:$0xff]
    %v2858 = vld [vmem:[#allocation2 + $0x358] sm:$0xff]
    %v2859 = vpack.c.bf16 %v2755, %v2751
    %v2860 = vpack.c.bf16 %v2756, %v2752
    %v2861 = vpack.c.bf16 %v2757, %v2753
    %v2862 = vpack.c.bf16 %v2758, %v2754
    %v2863 = vpack.c.bf16 %v2763, %v2759
    %v2864 = vpack.c.bf16 %v2764, %v2760
    %v2865 = vpack.c.bf16 %v2765, %v2761
    %v2866 = vpack.c.bf16 %v2766, %v2762
    %v2867 = vpack.c.bf16 %v2771, %v2767
    %v2868 = vpack.c.bf16 %v2772, %v2768
    %v2869 = vpack.c.bf16 %v2773, %v2769
    %v2870 = vpack.c.bf16 %v2774, %v2770
    %v2871 = vpack.c.bf16 %v2779, %v2775
    %v2872 = vpack.c.bf16 %v2780, %v2776
    %v2873 = vpack.c.bf16 %v2781, %v2777
    %v2874 = vpack.c.bf16 %v2782, %v2778
    %v2875 = vpack.c.bf16 %v2787, %v2783
    %v2876 = vpack.c.bf16 %v2788, %v2784
    %v2877 = vpack.c.bf16 %v2789, %v2785
    %v2878 = vpack.c.bf16 %v2790, %v2786
    %v2879 = vpack.c.bf16 %v2795, %v2791
    %v2880 = vpack.c.bf16 %v2796, %v2792
    %v2881 = vpack.c.bf16 %v2797, %v2793
    %v2882 = vpack.c.bf16 %v2798, %v2794
    %v2883 = vpack.c.bf16 %v2803, %v2799
    %v2884 = vpack.c.bf16 %v2804, %v2800
    %v2885 = vpack.c.bf16 %v2805, %v2801
    %v2886 = vpack.c.bf16 %v2806, %v2802
    %v2887 = vpack.c.bf16 %v2811, %v2807
    %v2888 = vpack.c.bf16 %v2812, %v2808
    %v2889 = vpack.c.bf16 %v2813, %v2809
    %v2890 = vpack.c.bf16 %v2814, %v2810
    %v2891 = vpack.c.bf16 %v2819, %v2815
    %v2892 = vpack.c.bf16 %v2820, %v2816
    %v2893 = vpack.c.bf16 %v2821, %v2817
    %v2894 = vpack.c.bf16 %v2822, %v2818
    %v2895 = vpack.c.bf16 %v2827, %v2823
    %v2896 = vpack.c.bf16 %v2828, %v2824
    %v2897 = vpack.c.bf16 %v2829, %v2825
    %v2898 = vpack.c.bf16 %v2830, %v2826
    %v2899 = vpack.c.bf16 %v2835, %v2831
    %v2900 = vpack.c.bf16 %v2836, %v2832
    %v2901 = vpack.c.bf16 %v2837, %v2833
    %v2902 = vpack.c.bf16 %v2838, %v2834
    %v2903 = vpack.c.bf16 %v2843, %v2839
    %v2904 = vpack.c.bf16 %v2844, %v2840
    %v2905 = vpack.c.bf16 %v2845, %v2841
    %v2906 = vpack.c.bf16 %v2846, %v2842
    %v2907 = vpack.c.bf16 %v2851, %v2847
    %v2908 = vpack.c.bf16 %v2852, %v2848
    %v2909 = vpack.c.bf16 %v2853, %v2849
    %v2910 = vpack.c.bf16 %v2854, %v2850
    %v2911 = vpack.c.bf16 %v2855, %v2855
    %v2912 = vpack.c.bf16 %v2856, %v2856
    %v2913 = vpack.c.bf16 %v2857, %v2857
    %v2914 = vpack.c.bf16 %v2858, %v2858
    %v2915 = vld [vmem:[#allocation11] sm:$0xff]
    %v2916 = vld [vmem:[%s17] sm:$0xff]
    %2918 = vset.pattern.permute.xlu0 0
    %2919 = vperm.xlu0 %2918, %v2916
    %v2920 = vpop.permute.xlu0 %2919
    %v2923 = vunpack.c.l.b16 %v2915
    %v2924 = vunpack.c.h.b16 %v2915
    %v2925 = vpack.c.b16 %v2923, %v2923
    %v2926 = vpack.c.b16 %v2924, %v2924
    %vm2928 = vcmask 719872
    %v2930 = vsel %vm2928, %v2926, 0
    %v2933 = vsel %vm490, %v2911, 0
    %v2936 = vsel %vm490, %v2912, 0
    %v2939 = vsel %vm490, %v2913, 0
    %v2942 = vsel %vm490, %v2914, 0
    %2944 = vmatpush.bf16.msra.mxu0 %v2887
    %2945 = vmatpush.bf16.msra.mxu0 %v2883
    %2946 = vmatpush.bf16.msra.mxu0 %v2879
    %2947 = vmatpush.bf16.msra.mxu0 %v2875
    %2948 = vmatpush.bf16.msra.mxu0 %v2871
    %2949 = vmatpush.bf16.msra.mxu0 %v2867
    %2950 = vmatpush.bf16.msra.mxu0 %v2863
    %2951 = vmatpush.bf16.msra.mxu0 %v2859
    %2952 = vmatmul.bf16.gmra.mxu0 %v2925
    %v2953 = vpop.f32.mrf.mxu0
    %v2954 = vadd.f32 %v2920, %v2953
    %v2955 = vpop.f32.mrf.mxu0
    %2956 = vdwg.mxu0
    %2957 = vmatpush.bf16.msra.mxu0 0
    %2958 = vmatpush.bf16.msra.mxu0 0
    %2959 = vmatpush.bf16.msra.mxu0 %v2933
    %2960 = vmatpush.bf16.msra.mxu0 %v2907
    %2961 = vmatpush.bf16.msra.mxu0 %v2903
    %2962 = vmatpush.bf16.msra.mxu0 %v2899
    %2963 = vmatpush.bf16.msra.mxu0 %v2895
    %2964 = vmatpush.bf16.msra.mxu0 %v2891
    %2965 = vmatmul.bf16.gmra.mxu0 %v2930
    %v2966 = vpop.f32.mrf.mxu0
    %v2967 = vadd.f32 %v2954, %v2966
    %v2968 = vpop.f32.mrf.mxu0
    %2969 = vdwg.mxu0
    %2970 = vmatpush.bf16.msra.mxu0 %v2888
    %2971 = vmatpush.bf16.msra.mxu0 %v2884
    %2972 = vmatpush.bf16.msra.mxu0 %v2880
    %2973 = vmatpush.bf16.msra.mxu0 %v2876
    %2974 = vmatpush.bf16.msra.mxu0 %v2872
    %2975 = vmatpush.bf16.msra.mxu0 %v2868
    %2976 = vmatpush.bf16.msra.mxu0 %v2864
    %2977 = vmatpush.bf16.msra.mxu0 %v2860
    %2978 = vmatmul.bf16.gmra.mxu0 %v2925
    %v2979 = vpop.f32.mrf.mxu0
    %v2980 = vadd.f32 %v2920, %v2979
    %v2981 = vpop.f32.mrf.mxu0
    %2982 = vdwg.mxu0
    %2983 = vmatpush.bf16.msra.mxu0 0
    %2984 = vmatpush.bf16.msra.mxu0 0
    %2985 = vmatpush.bf16.msra.mxu0 %v2936
    %2986 = vmatpush.bf16.msra.mxu0 %v2908
    %2987 = vmatpush.bf16.msra.mxu0 %v2904
    %2988 = vmatpush.bf16.msra.mxu0 %v2900
    %2989 = vmatpush.bf16.msra.mxu0 %v2896
    %2990 = vmatpush.bf16.msra.mxu0 %v2892
    %2991 = vmatmul.bf16.gmra.mxu0 %v2930
    %v2992 = vpop.f32.mrf.mxu0
    %v2993 = vadd.f32 %v2980, %v2992
    %v2994 = vpop.f32.mrf.mxu0
    %2995 = vdwg.mxu0
    %2996 = vmatpush.bf16.msra.mxu0 %v2889
    %2997 = vmatpush.bf16.msra.mxu0 %v2885
    %2998 = vmatpush.bf16.msra.mxu0 %v2881
    %2999 = vmatpush.bf16.msra.mxu0 %v2877
    %3000 = vmatpush.bf16.msra.mxu0 %v2873
    %3001 = vmatpush.bf16.msra.mxu0 %v2869
    %3002 = vmatpush.bf16.msra.mxu0 %v2865
    %3003 = vmatpush.bf16.msra.mxu0 %v2861
    %3004 = vmatmul.bf16.gmra.mxu0 %v2925
    %v3005 = vpop.f32.mrf.mxu0
    %v3006 = vadd.f32 %v2920, %v3005
    %v3007 = vpop.f32.mrf.mxu0
    %3008 = vdwg.mxu0
    %3009 = vmatpush.bf16.msra.mxu0 0
    %3010 = vmatpush.bf16.msra.mxu0 0
    %3011 = vmatpush.bf16.msra.mxu0 %v2939
    %3012 = vmatpush.bf16.msra.mxu0 %v2909
    %3013 = vmatpush.bf16.msra.mxu0 %v2905
    %3014 = vmatpush.bf16.msra.mxu0 %v2901
    %3015 = vmatpush.bf16.msra.mxu0 %v2897
    %3016 = vmatpush.bf16.msra.mxu0 %v2893
    %3017 = vmatmul.bf16.gmra.mxu0 %v2930
    %v3018 = vpop.f32.mrf.mxu0
    %v3019 = vadd.f32 %v3006, %v3018
    %v3020 = vpop.f32.mrf.mxu0
    %3021 = vdwg.mxu0
    %3022 = vmatpush.bf16.msra.mxu0 %v2890
    %3023 = vmatpush.bf16.msra.mxu0 %v2886
    %3024 = vmatpush.bf16.msra.mxu0 %v2882
    %3025 = vmatpush.bf16.msra.mxu0 %v2878
    %3026 = vmatpush.bf16.msra.mxu0 %v2874
    %3027 = vmatpush.bf16.msra.mxu0 %v2870
    %3028 = vmatpush.bf16.msra.mxu0 %v2866
    %3029 = vmatpush.bf16.msra.mxu0 %v2862
    %3030 = vmatmul.bf16.gmra.mxu0 %v2925
    %v3031 = vpop.f32.mrf.mxu0
    %v3032 = vadd.f32 %v2920, %v3031
    %v3033 = vpop.f32.mrf.mxu0
    %3034 = vdwg.mxu0
    %3035 = vmatpush.bf16.msra.mxu0 0
    %3036 = vmatpush.bf16.msra.mxu0 0
    %3037 = vmatpush.bf16.msra.mxu0 %v2942
    %3038 = vmatpush.bf16.msra.mxu0 %v2910
    %3039 = vmatpush.bf16.msra.mxu0 %v2906
    %3040 = vmatpush.bf16.msra.mxu0 %v2902
    %3041 = vmatpush.bf16.msra.mxu0 %v2898
    %3042 = vmatpush.bf16.msra.mxu0 %v2894
    %3043 = vmatmul.bf16.gmra.mxu0 %v2930
    %v3044 = vpop.f32.mrf.mxu0
    %v3045 = vadd.f32 %v3032, %v3044
    %v3046 = vpop.f32.mrf.mxu0
    %3047 = vdwg.mxu0
    %v3048 = vmax.f32 %v2967, 0.0
    %v3049 = vmax.f32 %v2993, 0.0
    %v3050 = vmax.f32 %v3019, 0.0
    %v3051 = vmax.f32 %v3045, 0.0
    %v3052 = vld [vmem:[%s18] sm:$0x3]
    %v3053 = vpack.c.bf16 %v3048, %v3048
    %v3054 = vpack.c.bf16 %v3049, %v3049
    %v3055 = vpack.c.bf16 %v3050, %v3050
    %v3056 = vpack.c.bf16 %v3051, %v3051
    %v3057 = vld [vmem:[%s19] sm:$0x7]
    %3059 = vset.pattern.permute.xlu0 0
    %3060 = vperm.xlu0 %3059, %v3057
    %v3061 = vpop.permute.xlu0 %3060
    %vm3063 = vcmask 64512
    %v3065 = vsel %vm3063, %v3052, 0
    %v3068 = vsel %vm490, %v3053, 0
    %v3071 = vsel %vm490, %v3054, 0
    %v3074 = vsel %vm490, %v3055, 0
    %v3077 = vsel %vm490, %v3056, 0
    %3079 = vmatpush.bf16.msra.mxu0 0
    %3080 = vmatpush.bf16.msra.mxu0 0
    %3081 = vmatpush.bf16.msra.mxu0 0
    %3082 = vmatpush.bf16.msra.mxu0 0
    %3083 = vmatpush.bf16.msra.mxu0 0
    %3084 = vmatpush.bf16.msra.mxu0 0
    %3085 = vmatpush.bf16.msra.mxu0 0
    %3086 = vmatpush.bf16.msra.mxu0 %v3068
    %3087 = vmatmul.bf16.gmra.mxu0 %v3065
    %v3088 = vpop.f32.mrf.mxu0
    %v3089 = vadd.f32 %v3061, %v3088
    %v3090 = vpop.f32.mrf.mxu0
    %3091 = vdwg.mxu0
    %3092 = vmatpush.bf16.msra.mxu0 0
    %3093 = vmatpush.bf16.msra.mxu0 0
    %3094 = vmatpush.bf16.msra.mxu0 0
    %3095 = vmatpush.bf16.msra.mxu0 0
    %3096 = vmatpush.bf16.msra.mxu0 0
    %3097 = vmatpush.bf16.msra.mxu0 0
    %3098 = vmatpush.bf16.msra.mxu0 0
    %3099 = vmatpush.bf16.msra.mxu0 %v3071
    %3100 = vmatmul.bf16.gmra.mxu0 %v3065
    %v3101 = vpop.f32.mrf.mxu0
    %v3102 = vadd.f32 %v3061, %v3101
    %v3103 = vpop.f32.mrf.mxu0
    %3104 = vdwg.mxu0
    %3105 = vmatpush.bf16.msra.mxu0 0
    %3106 = vmatpush.bf16.msra.mxu0 0
    %3107 = vmatpush.bf16.msra.mxu0 0
    %3108 = vmatpush.bf16.msra.mxu0 0
    %3109 = vmatpush.bf16.msra.mxu0 0
    %3110 = vmatpush.bf16.msra.mxu0 0
    %3111 = vmatpush.bf16.msra.mxu0 0
    %3112 = vmatpush.bf16.msra.mxu0 %v3074
    %3113 = vmatmul.bf16.gmra.mxu0 %v3065
    %v3114 = vpop.f32.mrf.mxu0
    %v3115 = vadd.f32 %v3061, %v3114
    %v3116 = vpop.f32.mrf.mxu0
    %3117 = vdwg.mxu0
    %3118 = vmatpush.bf16.msra.mxu0 0
    %3119 = vmatpush.bf16.msra.mxu0 0
    %3120 = vmatpush.bf16.msra.mxu0 0
    %3121 = vmatpush.bf16.msra.mxu0 0
    %3122 = vmatpush.bf16.msra.mxu0 0
    %3123 = vmatpush.bf16.msra.mxu0 0
    %3124 = vmatpush.bf16.msra.mxu0 0
    %3125 = vmatpush.bf16.msra.mxu0 %v3077
    %3126 = vmatmul.bf16.gmra.mxu0 %v3065
    %v3127 = vpop.f32.mrf.mxu0
    %v3128 = vadd.f32 %v3061, %v3127
    %v3129 = vpop.f32.mrf.mxu0
    %3130 = vdwg.mxu0
    %v3133 = vrot.slane %v3102, 4
    %v3134 = vsel %vm490, %v3089, %v3133
    %3136 = vst [vmem:[%s20] sm:$0x77] %v3134
    %v3139 = vrot.slane %v3128, 4
    %v3140 = vsel %vm490, %v3115, %v3139
    %s3142 = scalar_lea.vmem %s20, 8
    %3143 = vst [vmem:[%s3142] sm:$0x77] %v3140
    // Predicated region
    $region106: #{tpu_custom_call.1} parent=1 // pred_check
      _
    $region107: #{tpu_custom_call.1} parent=1 // pred_check_branch
      %3145 = sbr.rel (0) target = $region109
    $region108: #{tpu_custom_call.1} parent=1 // pred_region
      _
    $region109: #{tpu_custom_call.1} parent=1 // pred_fallthru
      _
    // Predicated region
    $region110: #{tpu_custom_call.1} parent=1 // pred_check
      _
    $region111: #{tpu_custom_call.1} parent=1 // pred_check_branch
      %3147 = sbr.rel (0) target = $region113
    $region112: #{tpu_custom_call.1} parent=1 // pred_region
      _
    $region113: #{tpu_custom_call.1} parent=1 // pred_fallthru
      _
    %3148 = vsyncpa [#allocation4], 1
    %3149 = vsyncpa [#allocation6], 1
    %3150 = vsyncpa [#allocation9], 1
    %3151 = vsyncpa [#allocation12], 1

</llo_original>
